<compile_context>
chip_gen: v7x
topology: tpu7x:2x2x1
jax: 0.10.0
libtpu: 0.0.40
codegen_flags: <defaults>
</compile_context>

<pallas_src>
import functools

import jax
import jax.numpy as jnp
from jax.experimental import pallas as pl
from jax.experimental.pallas import tpu as pltpu

COMPUTE_DTYPE = jnp.bfloat16   # jnp.float32 restores exact-f32 torch semantics


# ----------------------------------------------------------------------------
# Pallas kernel 1: fused  out = relu?(x @ w + b)   (single VMEM block)
# ----------------------------------------------------------------------------
def _matmul_bias_act_kernel(x_ref, w_ref, b_ref, o_ref, *, relu):
    acc = jnp.dot(x_ref[...].astype(w_ref.dtype), w_ref[...],
                  preferred_element_type=jnp.float32)
    acc = acc + b_ref[...]                       # (1, N) f32, broadcast over rows
    if relu:
        acc = jnp.maximum(acc, 0.0)
    o_ref[...] = acc.astype(o_ref.dtype)


def matmul_bias_act(x, w, b, *, relu, out_dtype):
    M, K = x.shape
    K2, N = w.shape
    assert K == K2, (K, K2)
    return pl.pallas_call(
        functools.partial(_matmul_bias_act_kernel, relu=relu),
        out_shape=jax.ShapeDtypeStruct((M, N), out_dtype),
        in_specs=[pl.BlockSpec(memory_space=pltpu.MemorySpace.VMEM)] * 3,
        out_specs=pl.BlockSpec(memory_space=pltpu.MemorySpace.VMEM),
    )(x, w, b)


# ----------------------------------------------------------------------------
# Pallas kernel 2: fused FC tail  fc4+relu -> fc5+relu -> (split) fc6+relu -> fc7
# ----------------------------------------------------------------------------
def _fc_tail_kernel(h_ref, c_ref, w4_ref, b4_ref, w5_ref, b5_ref,
                    w6h_ref, w6c_ref, b6_ref, w7_ref, b7_ref, o_ref):
    cd = w4_ref.dtype
    a = jnp.dot(h_ref[...].astype(cd), w4_ref[...],
                preferred_element_type=jnp.float32) + b4_ref[...]
    a = jnp.maximum(a, 0.0)                                         # fc4 + relu
    a = jnp.dot(a.astype(cd), w5_ref[...],
                preferred_element_type=jnp.float32) + b5_ref[...]
    a = jnp.maximum(a, 0.0)                                         # fc5 + relu
    # fc6 on concat([a, c], 1) without materializing the concat:
    #   concat([a, c]) @ W6 == a @ W6[:256] + sum_j c[:, j] * W6[256 + j]
    a6 = jnp.dot(a.astype(cd), w6h_ref[...],
                 preferred_element_type=jnp.float32) + b6_ref[...]
    cvals = c_ref[...].astype(jnp.float32)                          # (B, 3)
    for j in range(cvals.shape[1]):                                 # tiny VPU rank-1 adds
        a6 = a6 + cvals[:, j:j + 1] * w6c_ref[j:j + 1, :]
    a6 = jnp.maximum(a6, 0.0)                                       # fc6 + relu
    out = jnp.dot(a6.astype(cd), w7_ref[...],
                  preferred_element_type=jnp.float32) + b7_ref[...]  # fc7
    o_ref[...] = out.astype(o_ref.dtype)


def fc_tail(h, c, p):
    B = h.shape[0]
    n_out = p["w7"].shape[1]
    return pl.pallas_call(
        _fc_tail_kernel,
        out_shape=jax.ShapeDtypeStruct((B, n_out), jnp.float32),
        in_specs=[pl.BlockSpec(memory_space=pltpu.MemorySpace.VMEM)] * 11,
        out_specs=pl.BlockSpec(memory_space=pltpu.MemorySpace.VMEM),
    )(h, c, p["w4"], p["b4"], p["w5"], p["b5"],
      p["w6h"], p["w6c"], p["b6"], p["w7"], p["b7"])


# ----------------------------------------------------------------------------
# Conv2d (valid padding): NHWC im2col (XLA gather, no transposes) + Pallas matmul
# ----------------------------------------------------------------------------
def _im2col_nhwc(x, k, stride):
    """x: (B, H, W, C) NHWC -> (B*Ho*Wo, k*k*C), feature order (kh, kw, c)."""
    B, H, W, C = x.shape
    Ho = (H - k) // stride + 1
    Wo = (W - k) // stride + 1
    taps = []
    for dh in range(k):
        for dw in range(k):
            taps.append(x[:, dh:dh + stride * (Ho - 1) + 1:stride,
                             dw:dw + stride * (Wo - 1) + 1:stride, :])  # (B,Ho,Wo,C)
    col = jnp.stack(taps, axis=3)                   # (B, Ho, Wo, k*k, C) -- no transpose
    return col.reshape(B * Ho * Wo, k * k * C), B, Ho, Wo


def conv2d_relu_nhwc(x, w_mat, b, *, k, stride):
    """x NHWC, w_mat (k*k*Cin, Cout) pre-packed, b (1, Cout) -> NHWC, fused ReLU."""
    col, B, Ho, Wo = _im2col_nhwc(x, k, stride)
    y = matmul_bias_act(col, w_mat, b, relu=True, out_dtype=w_mat.dtype)
    return y.reshape(B, Ho, Wo, w_mat.shape[1])     # already the next layer's NHWC input


# ----------------------------------------------------------------------------
# Parameters: torch-layout init (kaiming-normal weights, zero biases), then a
# ONE-TIME repack into the layouts the kernels want.
# ----------------------------------------------------------------------------
def init_params(key, n_channel, n_out):
    ks = jax.random.split(key, 7)

    def kaiming(k, shape, fan_in):
        return jax.random.normal(k, shape, jnp.float32) * jnp.sqrt(2.0 / fan_in)

    return {
        "conv1_w": kaiming(ks[0], (32, n_channel, 8, 8), n_channel * 64),
        "conv1_b": jnp.zeros((32,), jnp.float32),
        "conv2_w": kaiming(ks[1], (64, 32, 3, 3), 32 * 9),
        "conv2_b": jnp.zeros((64,), jnp.float32),
        "conv3_w": kaiming(ks[2], (64, 64, 3, 3), 64 * 9),
        "conv3_b": jnp.zeros((64,), jnp.float32),
        "fc4_w": kaiming(ks[3], (512, 960), 960),    # torch Linear: (out, in)
        "fc4_b": jnp.zeros((512,), jnp.float32),
        "fc5_w": kaiming(ks[4], (256, 512), 512),
        "fc5_b": jnp.zeros((256,), jnp.float32),
        "fc6_w": kaiming(ks[5], (259, 259), 259),
        "fc6_b": jnp.zeros((259,), jnp.float32),
        "fc7_w": kaiming(ks[6], (n_out, 259), 259),
        "fc7_b": jnp.zeros((n_out,), jnp.float32),
    }


def pack_params(tp, dtype=COMPUTE_DTYPE):
    """One-time repack: conv -> (kh*kw*cin, cout); fc -> (in, out); fc4 columns
    permuted for the NHWC flatten; fc6 split at 256; matmul weights cast to
    `dtype`; biases stay f32 as (1, N)."""
    def conv_w(w):                                   # (Cout,Cin,K,K) -> (K*K*Cin, Cout)
        cout, cin, kk, _ = w.shape
        return w.transpose(2, 3, 1, 0).reshape(kk * kk * cin, cout).astype(dtype)

    def bias(b):
        return b.reshape(1, -1).astype(jnp.float32)

    # torch flatten order is (c, h, w); ours is NHWC (h, w, c) -> permute fc4 cols.
    w4 = (tp["fc4_w"].reshape(512, 64, 3, 5)
          .transpose(2, 3, 1, 0).reshape(960, 512).astype(dtype))
    w6 = tp["fc6_w"].T                               # (259_in, 259_out)
    return {
        "w1": conv_w(tp["conv1_w"]), "b1": bias(tp["conv1_b"]),
        "w2": conv_w(tp["conv2_w"]), "b2": bias(tp["conv2_b"]),
        "w3": conv_w(tp["conv3_w"]), "b3": bias(tp["conv3_b"]),
        "w4": w4,                    "b4": bias(tp["fc4_b"]),
        "w5": tp["fc5_w"].T.astype(dtype), "b5": bias(tp["fc5_b"]),
        "w6h": w6[:256].astype(dtype),               # fc5-activation half of fc6
        "w6c": w6[256:].astype(jnp.float32),         # direction half: tiny, f32 VPU path
        "b6": bias(tp["fc6_b"]),
        "w7": tp["fc7_w"].T.astype(dtype), "b7": bias(tp["fc7_b"]),
    }


# ----------------------------------------------------------------------------
# Full forward pass (mirrors Net.forward(x, c)); x NCHW, c (B, 3)
# ----------------------------------------------------------------------------
def net_forward(p, x, c):
    x = jnp.transpose(x, (0, 2, 3, 1)).astype(p["w1"].dtype)   # NCHW -> NHWC, once
    h = conv2d_relu_nhwc(x, p["w1"], p["b1"], k=8, stride=4)   # (B, 11, 15, 32)
    h = conv2d_relu_nhwc(h, p["w2"], p["b2"], k=3, stride=2)   # (B, 5, 7, 64)
    h = conv2d_relu_nhwc(h, p["w3"], p["b3"], k=3, stride=1)   # (B, 3, 5, 64)
    h = h.reshape(h.shape[0], -1)            # (B, 960), (h,w,c) order (fc4 repacked)
    return fc_tail(h, c, p)                  # fused fc4 -> fc5 -> fc6 -> fc7


if __name__ == "__main__":
    n_channel, n_out = 3, 1
    B, H, W = 2, 48, 64                      # 48x64 -> 960 flat features

    key = jax.random.PRNGKey(0)
    k_params, k_x, k_c = jax.random.split(key, 3)
    torch_params = init_params(k_params, n_channel, n_out)
    params = pack_params(torch_params)       # one-time repack, outside the jitted fwd

    x = jax.random.normal(k_x, (B, n_channel, H, W), jnp.float32)
    c = jax.random.normal(k_c, (B, 3), jnp.float32)   # direction vector (3 features)

    out = jax.jit(net_forward)(params, x, c)
    out = jax.block_until_ready(out)
    assert out.shape == (B, n_out), out.shape
    print("KERNEL_OK")
</pallas_src>

<mosaic_0001>
module attributes {stable_mosaic.version = 11 : i64} {
  func.func @_matmul_bias_act_kernel(%arg0: memref<330x192xbf16, #tpu.memory_space<vmem>>, %arg1: memref<192x32xbf16, #tpu.memory_space<vmem>>, %arg2: memref<1x32xf32, #tpu.memory_space<vmem>>, %arg3: memref<330x32xbf16, #tpu.memory_space<vmem>>) attributes {dimension_semantics = [], scalar_prefetch = 0 : i64, scratch_operands = 0 : i64, tpu.core_type = #tpu.core_type<tc>} {
    %c0 = arith.constant 0 : index
    %c0_0 = arith.constant 0 : index
    %0 = vector.load %arg0[%c0, %c0_0] : memref<330x192xbf16, #tpu.memory_space<vmem>>, vector<330x192xbf16>
    %c0_1 = arith.constant 0 : index
    %c0_2 = arith.constant 0 : index
    %1 = vector.load %arg1[%c0_1, %c0_2] : memref<192x32xbf16, #tpu.memory_space<vmem>>, vector<192x32xbf16>
    %cst = arith.constant dense<0.000000e+00> : vector<330x32xf32>
    %2 = tpu.matmul %0, %1, %cst {dimension_numbers = #tpu.dot_dimension_numbers<[1], [0], [0], [1], [0, 0, 1, 1], [], []>} : vector<330x192xbf16>, vector<192x32xbf16>, vector<330x32xf32> -> vector<330x32xf32>
    %c0_3 = arith.constant 0 : index
    %c0_4 = arith.constant 0 : index
    %3 = vector.load %arg2[%c0_3, %c0_4] : memref<1x32xf32, #tpu.memory_space<vmem>>, vector<1x32xf32>
    %4 = vector.broadcast %3 : vector<1x32xf32> to vector<330x32xf32>
    %5 = arith.addf %2, %4 : vector<330x32xf32>
    %cst_5 = arith.constant 0.000000e+00 : f32
    %6 = vector.broadcast %cst_5 : f32 to vector<330x32xf32>
    %7 = arith.maximumf %5, %6 : vector<330x32xf32>
    %8 = arith.truncf %7 : vector<330x32xf32> to vector<330x32xbf16>
    %c0_6 = arith.constant 0 : index
    %c0_7 = arith.constant 0 : index
    %9 = vector.load %arg3[%c0_6, %c0_7] : memref<330x32xbf16, #tpu.memory_space<vmem>>, vector<330x32xbf16>
    tpu.vector_store %arg3[%c0_6, %c0_7], %8 {strides = array<i32>} : memref<330x32xbf16, #tpu.memory_space<vmem>>, vector<330x32xbf16>,
    return
  }
}

module attributes {stable_mosaic.version = 11 : i64} {
  func.func @_matmul_bias_act_kernel(%arg0: memref<70x288xbf16, #tpu.memory_space<vmem>>, %arg1: memref<288x64xbf16, #tpu.memory_space<vmem>>, %arg2: memref<1x64xf32, #tpu.memory_space<vmem>>, %arg3: memref<70x64xbf16, #tpu.memory_space<vmem>>) attributes {dimension_semantics = [], scalar_prefetch = 0 : i64, scratch_operands = 0 : i64, tpu.core_type = #tpu.core_type<tc>} {
    %c0 = arith.constant 0 : index
    %c0_0 = arith.constant 0 : index
    %0 = vector.load %arg0[%c0, %c0_0] : memref<70x288xbf16, #tpu.memory_space<vmem>>, vector<70x288xbf16>
    %c0_1 = arith.constant 0 : index
    %c0_2 = arith.constant 0 : index
    %1 = vector.load %arg1[%c0_1, %c0_2] : memref<288x64xbf16, #tpu.memory_space<vmem>>, vector<288x64xbf16>
    %cst = arith.constant dense<0.000000e+00> : vector<70x64xf32>
    %2 = tpu.matmul %0, %1, %cst {dimension_numbers = #tpu.dot_dimension_numbers<[1], [0], [0], [1], [0, 0, 1, 1], [], []>} : vector<70x288xbf16>, vector<288x64xbf16>, vector<70x64xf32> -> vector<70x64xf32>
    %c0_3 = arith.constant 0 : index
    %c0_4 = arith.constant 0 : index
    %3 = vector.load %arg2[%c0_3, %c0_4] : memref<1x64xf32, #tpu.memory_space<vmem>>, vector<1x64xf32>
    %4 = vector.broadcast %3 : vector<1x64xf32> to vector<70x64xf32>
    %5 = arith.addf %2, %4 : vector<70x64xf32>
    %cst_5 = arith.constant 0.000000e+00 : f32
    %6 = vector.broadcast %cst_5 : f32 to vector<70x64xf32>
    %7 = arith.maximumf %5, %6 : vector<70x64xf32>
    %8 = arith.truncf %7 : vector<70x64xf32> to vector<70x64xbf16>
    %c0_6 = arith.constant 0 : index
    %c0_7 = arith.constant 0 : index
    %9 = vector.load %arg3[%c0_6, %c0_7] : memref<70x64xbf16, #tpu.memory_space<vmem>>, vector<70x64xbf16>
    tpu.vector_store %arg3[%c0_6, %c0_7], %8 {strides = array<i32>} : memref<70x64xbf16, #tpu.memory_space<vmem>>, vector<70x64xbf16>,
    return
  }
}

module attributes {stable_mosaic.version = 11 : i64} {
  func.func @_matmul_bias_act_kernel(%arg0: memref<30x576xbf16, #tpu.memory_space<vmem>>, %arg1: memref<576x64xbf16, #tpu.memory_space<vmem>>, %arg2: memref<1x64xf32, #tpu.memory_space<vmem>>, %arg3: memref<30x64xbf16, #tpu.memory_space<vmem>>) attributes {dimension_semantics = [], scalar_prefetch = 0 : i64, scratch_operands = 0 : i64, tpu.core_type = #tpu.core_type<tc>} {
    %c0 = arith.constant 0 : index
    %c0_0 = arith.constant 0 : index
    %0 = vector.load %arg0[%c0, %c0_0] : memref<30x576xbf16, #tpu.memory_space<vmem>>, vector<30x576xbf16>
    %c0_1 = arith.constant 0 : index
    %c0_2 = arith.constant 0 : index
    %1 = vector.load %arg1[%c0_1, %c0_2] : memref<576x64xbf16, #tpu.memory_space<vmem>>, vector<576x64xbf16>
    %cst = arith.constant dense<0.000000e+00> : vector<30x64xf32>
    %2 = tpu.matmul %0, %1, %cst {dimension_numbers = #tpu.dot_dimension_numbers<[1], [0], [0], [1], [0, 0, 1, 1], [], []>} : vector<30x576xbf16>, vector<576x64xbf16>, vector<30x64xf32> -> vector<30x64xf32>
    %c0_3 = arith.constant 0 : index
    %c0_4 = arith.constant 0 : index
    %3 = vector.load %arg2[%c0_3, %c0_4] : memref<1x64xf32, #tpu.memory_space<vmem>>, vector<1x64xf32>
    %4 = vector.broadcast %3 : vector<1x64xf32> to vector<30x64xf32>
    %5 = arith.addf %2, %4 : vector<30x64xf32>
    %cst_5 = arith.constant 0.000000e+00 : f32
    %6 = vector.broadcast %cst_5 : f32 to vector<30x64xf32>
    %7 = arith.maximumf %5, %6 : vector<30x64xf32>
    %8 = arith.truncf %7 : vector<30x64xf32> to vector<30x64xbf16>
    %c0_6 = arith.constant 0 : index
    %c0_7 = arith.constant 0 : index
    %9 = vector.load %arg3[%c0_6, %c0_7] : memref<30x64xbf16, #tpu.memory_space<vmem>>, vector<30x64xbf16>
    tpu.vector_store %arg3[%c0_6, %c0_7], %8 {strides = array<i32>} : memref<30x64xbf16, #tpu.memory_space<vmem>>, vector<30x64xbf16>,
    return
  }
}

module attributes {stable_mosaic.version = 11 : i64} {
  func.func @_fc_tail_kernel(%arg0: memref<2x960xbf16, #tpu.memory_space<vmem>>, %arg1: memref<2x3xf32, #tpu.memory_space<vmem>>, %arg2: memref<960x512xbf16, #tpu.memory_space<vmem>>, %arg3: memref<1x512xf32, #tpu.memory_space<vmem>>, %arg4: memref<512x256xbf16, #tpu.memory_space<vmem>>, %arg5: memref<1x256xf32, #tpu.memory_space<vmem>>, %arg6: memref<256x259xbf16, #tpu.memory_space<vmem>>, %arg7: memref<3x259xf32, #tpu.memory_space<vmem>>, %arg8: memref<1x259xf32, #tpu.memory_space<vmem>>, %arg9: memref<259x1xbf16, #tpu.memory_space<vmem>>, %arg10: memref<1x1xf32, #tpu.memory_space<vmem>>, %arg11: memref<2x1xf32, #tpu.memory_space<vmem>>) attributes {dimension_semantics = [], scalar_prefetch = 0 : i64, scratch_operands = 0 : i64, tpu.core_type = #tpu.core_type<tc>} {
    %c0 = arith.constant 0 : index
    %c0_0 = arith.constant 0 : index
    %0 = vector.load %arg0[%c0, %c0_0] : memref<2x960xbf16, #tpu.memory_space<vmem>>, vector<2x960xbf16>
    %c0_1 = arith.constant 0 : index
    %c0_2 = arith.constant 0 : index
    %1 = vector.load %arg2[%c0_1, %c0_2] : memref<960x512xbf16, #tpu.memory_space<vmem>>, vector<960x512xbf16>
    %cst = arith.constant dense<0.000000e+00> : vector<2x512xf32>
    %2 = tpu.matmul %0, %1, %cst {dimension_numbers = #tpu.dot_dimension_numbers<[1], [0], [0], [1], [0, 0, 1, 1], [], []>} : vector<2x960xbf16>, vector<960x512xbf16>, vector<2x512xf32> -> vector<2x512xf32>
    %c0_3 = arith.constant 0 : index
    %c0_4 = arith.constant 0 : index
    %3 = vector.load %arg3[%c0_3, %c0_4] : memref<1x512xf32, #tpu.memory_space<vmem>>, vector<1x512xf32>
    %4 = vector.broadcast %3 : vector<1x512xf32> to vector<2x512xf32>
    %5 = arith.addf %2, %4 : vector<2x512xf32>
    %cst_5 = arith.constant 0.000000e+00 : f32
    %6 = vector.broadcast %cst_5 : f32 to vector<2x512xf32>
    %7 = arith.maximumf %5, %6 : vector<2x512xf32>
    %8 = arith.truncf %7 : vector<2x512xf32> to vector<2x512xbf16>
    %c0_6 = arith.constant 0 : index
    %c0_7 = arith.constant 0 : index
    %9 = vector.load %arg4[%c0_6, %c0_7] : memref<512x256xbf16, #tpu.memory_space<vmem>>, vector<512x256xbf16>
    %cst_8 = arith.constant dense<0.000000e+00> : vector<2x256xf32>
    %10 = tpu.matmul %8, %9, %cst_8 {dimension_numbers = #tpu.dot_dimension_numbers<[1], [0], [0], [1], [0, 0, 1, 1], [], []>} : vector<2x512xbf16>, vector<512x256xbf16>, vector<2x256xf32> -> vector<2x256xf32>
    %c0_9 = arith.constant 0 : index
    %c0_10 = arith.constant 0 : index
    %11 = vector.load %arg5[%c0_9, %c0_10] : memref<1x256xf32, #tpu.memory_space<vmem>>, vector<1x256xf32>
    %12 = vector.broadcast %11 : vector<1x256xf32> to vector<2x256xf32>
    %13 = arith.addf %10, %12 : vector<2x256xf32>
    %cst_11 = arith.constant 0.000000e+00 : f32
    %14 = vector.broadcast %cst_11 : f32 to vector<2x256xf32>
    %15 = arith.maximumf %13, %14 : vector<2x256xf32>
    %16 = arith.truncf %15 : vector<2x256xf32> to vector<2x256xbf16>
    %c0_12 = arith.constant 0 : index
    %c0_13 = arith.constant 0 : index
    %17 = vector.load %arg6[%c0_12, %c0_13] : memref<256x259xbf16, #tpu.memory_space<vmem>>, vector<256x259xbf16>
    %cst_14 = arith.constant dense<0.000000e+00> : vector<2x259xf32>
    %18 = tpu.matmul %16, %17, %cst_14 {dimension_numbers = #tpu.dot_dimension_numbers<[1], [0], [0], [1], [0, 0, 1, 1], [], []>} : vector<2x256xbf16>, vector<256x259xbf16>, vector<2x259xf32> -> vector<2x259xf32>
    %c0_15 = arith.constant 0 : index
    %c0_16 = arith.constant 0 : index
    %19 = vector.load %arg8[%c0_15, %c0_16] : memref<1x259xf32, #tpu.memory_space<vmem>>, vector<1x259xf32>
    %20 = vector.broadcast %19 : vector<1x259xf32> to vector<2x259xf32>
    %21 = arith.addf %18, %20 : vector<2x259xf32>
    %c0_17 = arith.constant 0 : index
    %c0_18 = arith.constant 0 : index
    %22 = vector.load %arg1[%c0_17, %c0_18] : memref<2x3xf32, #tpu.memory_space<vmem>>, vector<2x3xf32>
    %23 = vector.extract_strided_slice %22 {offsets = [0, 0], sizes = [2, 1], strides = [1, 1]} : vector<2x3xf32> to vector<2x1xf32>
    %c0_19 = arith.constant 0 : index
    %c0_20 = arith.constant 0 : index
    %24 = vector.load %arg7[%c0_19, %c0_20] : memref<3x259xf32, #tpu.memory_space<vmem>>, vector<1x259xf32>
    %25 = vector.broadcast %23 : vector<2x1xf32> to vector<2x259xf32>
    %26 = vector.broadcast %24 : vector<1x259xf32> to vector<2x259xf32>
    %27 = arith.mulf %25, %26 : vector<2x259xf32>
    %28 = arith.addf %21, %27 : vector<2x259xf32>
    %29 = vector.extract_strided_slice %22 {offsets = [0, 1], sizes = [2, 1], strides = [1, 1]} : vector<2x3xf32> to vector<2x1xf32>
    %c1 = arith.constant 1 : index
    %c0_21 = arith.constant 0 : index
    %30 = vector.load %arg7[%c1, %c0_21] : memref<3x259xf32, #tpu.memory_space<vmem>>, vector<1x259xf32>
    %31 = vector.broadcast %29 : vector<2x1xf32> to vector<2x259xf32>
    %32 = vector.broadcast %30 : vector<1x259xf32> to vector<2x259xf32>
    %33 = arith.mulf %31, %32 : vector<2x259xf32>
    %34 = arith.addf %28, %33 : vector<2x259xf32>
    %35 = vector.extract_strided_slice %22 {offsets = [0, 2], sizes = [2, 1], strides = [1, 1]} : vector<2x3xf32> to vector<2x1xf32>
    %c2 = arith.constant 2 : index
    %c0_22 = arith.constant 0 : index
    %36 = vector.load %arg7[%c2, %c0_22] : memref<3x259xf32, #tpu.memory_space<vmem>>, vector<1x259xf32>
    %37 = vector.broadcast %35 : vector<2x1xf32> to vector<2x259xf32>
    %38 = vector.broadcast %36 : vector<1x259xf32> to vector<2x259xf32>
    %39 = arith.mulf %37, %38 : vector<2x259xf32>
    %40 = arith.addf %34, %39 : vector<2x259xf32>
    %cst_23 = arith.constant 0.000000e+00 : f32
    %41 = vector.broadcast %cst_23 : f32 to vector<2x259xf32>
    %42 = arith.maximumf %40, %41 : vector<2x259xf32>
    %43 = arith.truncf %42 : vector<2x259xf32> to vector<2x259xbf16>
    %c0_24 = arith.constant 0 : index
    %c0_25 = arith.constant 0 : index
    %44 = vector.load %arg9[%c0_24, %c0_25] : memref<259x1xbf16, #tpu.memory_space<vmem>>, vector<259x1xbf16>
    %cst_26 = arith.constant dense<0.000000e+00> : vector<2x1xf32>
    %45 = tpu.matmul %43, %44, %cst_26 {dimension_numbers = #tpu.dot_dimension_numbers<[1], [0], [0], [1], [0, 0, 1, 1], [], []>} : vector<2x259xbf16>, vector<259x1xbf16>, vector<2x1xf32> -> vector<2x1xf32>
    %c0_27 = arith.constant 0 : index
    %c0_28 = arith.constant 0 : index
    %46 = vector.load %arg10[%c0_27, %c0_28] : memref<1x1xf32, #tpu.memory_space<vmem>>, vector<1x1xf32>
    %47 = vector.broadcast %46 : vector<1x1xf32> to vector<2x1xf32>
    %48 = arith.addf %45, %47 : vector<2x1xf32>
    %c0_29 = arith.constant 0 : index
    %c0_30 = arith.constant 0 : index
    %49 = vector.load %arg11[%c0_29, %c0_30] : memref<2x1xf32, #tpu.memory_space<vmem>>, vector<2x1xf32>
    tpu.vector_store %arg11[%c0_29, %c0_30], %48 {strides = array<i32>} : memref<2x1xf32, #tpu.memory_space<vmem>>, vector<2x1xf32>,
    return
  }
}

</mosaic_0001>

<llo_original>
// kernel: net_forward.4
$region0: #{net_forward.4}
  #allocation0 [shape = 'u32[]', space=smem, size = 0x4, offset = 0x4, fixed_abs, tag = 'smem constant byte address 0x4 - core index']
  #allocation1 [shape = 'u32[144,128]{1,0:T(1,128)}', space=vmem, size = 0x12000, scoped, tag = 'internal scratch']
  %s0 = inlined_call_operand.vmem [shape: bf16[330,192], index: 0, kind: input, shape index: {}]
  %s1 = inlined_call_operand.vmem [shape: bf16[192,32], index: 1, kind: input, shape index: {}]
  %s2 = inlined_call_operand.vmem [shape: f32[1,32], index: 2, kind: input, shape index: {}]
  %s3 = inlined_call_operand.vmem [shape: bf16[330,32], index: 3, kind: output, shape index: {}]
  %s4 = sld [smem:[#allocation0]]
  $region22: #{net_forward.4} parent=0
    _
  %s6 = ssub.s32 1, %s4
  %s7 = scalar_select 0, %s6, %s4
  // Predicated region
  $region2: #{net_forward.4} parent=0 // pred_check
    _
  $region3: #{net_forward.4} parent=0 // pred_check_branch
    %9 = sbr.rel (0) target = $region5
  $region4: #{net_forward.4} parent=0 // pred_region
    _
  $region5: #{net_forward.4} parent=0 // pred_fallthru
    _
  // Predicated region
  $region6: #{net_forward.4} parent=0 // pred_check
    _
  $region7: #{net_forward.4} parent=0 // pred_check_branch
    %11 = sbr.rel (0) target = $region9
  $region8: #{net_forward.4} parent=0 // pred_region
    _
  $region9: #{net_forward.4} parent=0 // pred_fallthru
    _
  // Predicated region
  $region10: #{net_forward.4} parent=0 // pred_check
    _
  $region11: #{net_forward.4} parent=0 // pred_check_branch
    %13 = sbr.rel (0) target = $region13
  $region12: #{net_forward.4} parent=0 // pred_region
    _
  $region13: #{net_forward.4} parent=0 // pred_fallthru
    _
  %v15 = vld [vmem:[%s0] sm:$0xff]
  %v16 = vld [vmem:[%s0 + $0x8] sm:$0xff]
  %v17 = vld [vmem:[%s0 + $0x10] sm:$0xff]
  %v18 = vld [vmem:[%s0 + $0x18] sm:$0xff]
  %v19 = vld [vmem:[%s0 + $0x20] sm:$0xff]
  %v20 = vld [vmem:[%s0 + $0x28] sm:$0xff]
  %v21 = vld [vmem:[%s0 + $0x30] sm:$0xff]
  %v22 = vld [vmem:[%s0 + $0x38] sm:$0xff]
  %v23 = vld [vmem:[%s0 + $0x40] sm:$0xff]
  %v24 = vld [vmem:[%s0 + $0x48] sm:$0xff]
  %v25 = vld [vmem:[%s0 + $0x50] sm:$0xff]
  %v26 = vld [vmem:[%s0 + $0x58] sm:$0xff]
  %v27 = vld [vmem:[%s0 + $0x60] sm:$0xff]
  %v28 = vld [vmem:[%s0 + $0x68] sm:$0xff]
  %v29 = vld [vmem:[%s0 + $0x70] sm:$0xff]
  %v30 = vld [vmem:[%s0 + $0x78] sm:$0xff]
  %v31 = vld [vmem:[%s0 + $0x80] sm:$0xff]
  %v32 = vld [vmem:[%s0 + $0x88] sm:$0xff]
  %v33 = vld [vmem:[%s0 + $0x90] sm:$0xff]
  %v34 = vld [vmem:[%s0 + $0x98] sm:$0xff]
  %v35 = vld [vmem:[%s0 + $0xa0] sm:$0xff]
  %v36 = vld [vmem:[%s0 + $0xa8] sm:$0xff]
  %v37 = vld [vmem:[%s0 + $0xb0] sm:$0xff]
  %v38 = vld [vmem:[%s0 + $0xb8] sm:$0xff]
  %v39 = vld [vmem:[%s0 + $0xc0] sm:$0xff]
  %v40 = vld [vmem:[%s0 + $0xc8] sm:$0xff]
  %v41 = vld [vmem:[%s0 + $0xd0] sm:$0xff]
  %v42 = vld [vmem:[%s0 + $0xd8] sm:$0xff]
  %v43 = vld [vmem:[%s0 + $0xe0] sm:$0xff]
  %v44 = vld [vmem:[%s0 + $0xe8] sm:$0xff]
  %v45 = vld [vmem:[%s0 + $0xf0] sm:$0xff]
  %v46 = vld [vmem:[%s0 + $0xf8] sm:$0xff]
  %v47 = vld [vmem:[%s0 + $0x100] sm:$0xff]
  %v48 = vld [vmem:[%s0 + $0x108] sm:$0xff]
  %v49 = vld [vmem:[%s0 + $0x110] sm:$0xff]
  %v50 = vld [vmem:[%s0 + $0x118] sm:$0xff]
  %v51 = vld [vmem:[%s0 + $0x120] sm:$0xff]
  %v52 = vld [vmem:[%s0 + $0x128] sm:$0xff]
  %v53 = vld [vmem:[%s0 + $0x130] sm:$0xff]
  %v54 = vld [vmem:[%s0 + $0x138] sm:$0xff]
  %v55 = vld [vmem:[%s0 + $0x140] sm:$0xff]
  %v56 = vld [vmem:[%s0 + $0x148] sm:$0x11]
  %v57 = vld [vmem:[%s1] sm:$0xf]
  %v58 = vld [vmem:[%s1 + $0x4] sm:$0xf]
  %v59 = vld [vmem:[%s1 + $0x8] sm:$0xf]
  %v60 = vld [vmem:[%s1 + $0xc] sm:$0xf]
  %v61 = vld [vmem:[%s1 + $0x10] sm:$0xf]
  %v62 = vld [vmem:[%s1 + $0x14] sm:$0xf]
  %v63 = vld [vmem:[%s1 + $0x18] sm:$0xf]
  %v64 = vld [vmem:[%s1 + $0x1c] sm:$0xf]
  %v65 = vld [vmem:[%s1 + $0x20] sm:$0xf]
  %v66 = vld [vmem:[%s1 + $0x24] sm:$0xf]
  %v67 = vld [vmem:[%s1 + $0x28] sm:$0xf]
  %v68 = vld [vmem:[%s1 + $0x2c] sm:$0xf]
  %v69 = vld [vmem:[%s1 + $0x30] sm:$0xf]
  %v70 = vld [vmem:[%s1 + $0x34] sm:$0xf]
  %v71 = vld [vmem:[%s1 + $0x38] sm:$0xf]
  %v72 = vld [vmem:[%s1 + $0x3c] sm:$0xf]
  %v73 = vld [vmem:[%s1 + $0x40] sm:$0xf]
  %v74 = vld [vmem:[%s1 + $0x44] sm:$0xf]
  %v75 = vld [vmem:[%s1 + $0x48] sm:$0xf]
  %v76 = vld [vmem:[%s1 + $0x4c] sm:$0xf]
  %v77 = vld [vmem:[%s1 + $0x50] sm:$0xf]
  %v78 = vld [vmem:[%s1 + $0x54] sm:$0xf]
  %v79 = vld [vmem:[%s1 + $0x58] sm:$0xf]
  %v80 = vld [vmem:[%s1 + $0x5c] sm:$0xf]
  %v81 = vld [vmem:[%s2] sm:$0x1]
  %v83 = vlaneseq
  %v84 = vshrl.u32 %v83, 7
  %v85 = vsub.s32 0, %v84
  %v86 = vrot.slane %v81, %v85
  %v130 = vunpack.c.l.b16 %v15
  %v131 = vunpack.c.h.b16 %v15
  %v132 = vunpack.c.l.b16 %v16
  %v133 = vunpack.c.h.b16 %v16
  %v134 = vunpack.c.l.b16 %v17
  %v135 = vunpack.c.h.b16 %v17
  %v136 = vunpack.c.l.b16 %v18
  %v137 = vunpack.c.h.b16 %v18
  %v138 = vunpack.c.l.b16 %v19
  %v139 = vunpack.c.h.b16 %v19
  %v140 = vunpack.c.l.b16 %v20
  %v141 = vunpack.c.h.b16 %v20
  %v142 = vunpack.c.l.b16 %v21
  %v143 = vunpack.c.h.b16 %v21
  %v144 = vunpack.c.l.b16 %v22
  %v145 = vunpack.c.h.b16 %v22
  %v146 = vunpack.c.l.b16 %v23
  %v147 = vunpack.c.h.b16 %v23
  %v148 = vunpack.c.l.b16 %v24
  %v149 = vunpack.c.h.b16 %v24
  %v150 = vunpack.c.l.b16 %v25
  %v151 = vunpack.c.h.b16 %v25
  %v152 = vunpack.c.l.b16 %v26
  %v153 = vunpack.c.h.b16 %v26
  %v154 = vunpack.c.l.b16 %v27
  %v155 = vunpack.c.h.b16 %v27
  %v156 = vunpack.c.l.b16 %v28
  %v157 = vunpack.c.h.b16 %v28
  %v158 = vunpack.c.l.b16 %v29
  %v159 = vunpack.c.h.b16 %v29
  %v160 = vunpack.c.l.b16 %v30
  %v161 = vunpack.c.h.b16 %v30
  %v162 = vunpack.c.l.b16 %v31
  %v163 = vunpack.c.h.b16 %v31
  %v164 = vunpack.c.l.b16 %v32
  %v165 = vunpack.c.h.b16 %v32
  %v166 = vunpack.c.l.b16 %v33
  %v167 = vunpack.c.h.b16 %v33
  %v168 = vunpack.c.l.b16 %v34
  %v169 = vunpack.c.h.b16 %v34
  %v170 = vunpack.c.l.b16 %v35
  %v171 = vunpack.c.h.b16 %v35
  %v172 = vunpack.c.l.b16 %v36
  %v173 = vunpack.c.h.b16 %v36
  %v174 = vunpack.c.l.b16 %v37
  %v175 = vunpack.c.h.b16 %v37
  %v176 = vunpack.c.l.b16 %v38
  %v177 = vunpack.c.h.b16 %v38
  %v178 = vunpack.c.l.b16 %v39
  %v179 = vunpack.c.h.b16 %v39
  %v180 = vunpack.c.l.b16 %v40
  %v181 = vunpack.c.h.b16 %v40
  %v182 = vunpack.c.l.b16 %v41
  %v183 = vunpack.c.h.b16 %v41
  %v184 = vunpack.c.l.b16 %v42
  %v185 = vunpack.c.h.b16 %v42
  %v186 = vunpack.c.l.b16 %v43
  %v187 = vunpack.c.h.b16 %v43
  %v188 = vunpack.c.l.b16 %v44
  %v189 = vunpack.c.h.b16 %v44
  %v190 = vunpack.c.l.b16 %v45
  %v191 = vunpack.c.h.b16 %v45
  %v192 = vunpack.c.l.b16 %v46
  %v193 = vunpack.c.h.b16 %v46
  %v194 = vunpack.c.l.b16 %v47
  %v195 = vunpack.c.h.b16 %v47
  %v196 = vunpack.c.l.b16 %v48
  %v197 = vunpack.c.h.b16 %v48
  %v198 = vunpack.c.l.b16 %v49
  %v199 = vunpack.c.h.b16 %v49
  %v200 = vunpack.c.l.b16 %v50
  %v201 = vunpack.c.h.b16 %v50
  %v202 = vunpack.c.l.b16 %v51
  %v203 = vunpack.c.h.b16 %v51
  %v204 = vunpack.c.l.b16 %v52
  %v205 = vunpack.c.h.b16 %v52
  %v206 = vunpack.c.l.b16 %v53
  %v207 = vunpack.c.h.b16 %v53
  %v208 = vunpack.c.l.b16 %v54
  %v209 = vunpack.c.h.b16 %v54
  %v210 = vunpack.c.l.b16 %v55
  %v211 = vunpack.c.h.b16 %v55
  %v212 = vunpack.c.l.b16 %v56
  %v213 = vunpack.c.h.b16 %v56
  %v214 = vpack.c.b16 %v132, %v130
  %v215 = vpack.c.b16 %v133, %v131
  %v216 = vpack.c.b16 %v136, %v134
  %v217 = vpack.c.b16 %v137, %v135
  %v218 = vpack.c.b16 %v140, %v138
  %v219 = vpack.c.b16 %v141, %v139
  %v220 = vpack.c.b16 %v144, %v142
  %v221 = vpack.c.b16 %v145, %v143
  %v222 = vpack.c.b16 %v148, %v146
  %v223 = vpack.c.b16 %v149, %v147
  %v224 = vpack.c.b16 %v152, %v150
  %v225 = vpack.c.b16 %v153, %v151
  %v226 = vpack.c.b16 %v156, %v154
  %v227 = vpack.c.b16 %v157, %v155
  %v228 = vpack.c.b16 %v160, %v158
  %v229 = vpack.c.b16 %v161, %v159
  %v230 = vpack.c.b16 %v164, %v162
  %v231 = vpack.c.b16 %v165, %v163
  %v232 = vpack.c.b16 %v168, %v166
  %v233 = vpack.c.b16 %v169, %v167
  %v234 = vpack.c.b16 %v172, %v170
  %v235 = vpack.c.b16 %v173, %v171
  %v236 = vpack.c.b16 %v176, %v174
  %v237 = vpack.c.b16 %v177, %v175
  %v238 = vpack.c.b16 %v180, %v178
  %v239 = vpack.c.b16 %v181, %v179
  %v240 = vpack.c.b16 %v184, %v182
  %v241 = vpack.c.b16 %v185, %v183
  %v242 = vpack.c.b16 %v188, %v186
  %v243 = vpack.c.b16 %v189, %v187
  %v244 = vpack.c.b16 %v192, %v190
  %v245 = vpack.c.b16 %v193, %v191
  %v246 = vpack.c.b16 %v196, %v194
  %v247 = vpack.c.b16 %v197, %v195
  %v248 = vpack.c.b16 %v200, %v198
  %v249 = vpack.c.b16 %v201, %v199
  %v250 = vpack.c.b16 %v204, %v202
  %v251 = vpack.c.b16 %v205, %v203
  %v252 = vpack.c.b16 %v208, %v206
  %v253 = vpack.c.b16 %v209, %v207
  %v254 = vpack.c.b16 %v212, %v210
  %v255 = vpack.c.b16 %v213, %v211
  %v301 = vunpack.c.l.b16 %v57
  %v302 = vunpack.c.l.b16 %v58
  %v303 = vunpack.c.l.b16 %v59
  %v304 = vunpack.c.l.b16 %v60
  %v305 = vunpack.c.l.b16 %v61
  %v306 = vunpack.c.l.b16 %v62
  %v307 = vunpack.c.l.b16 %v63
  %v308 = vunpack.c.l.b16 %v64
  %v309 = vunpack.c.l.b16 %v65
  %v310 = vunpack.c.l.b16 %v66
  %v311 = vunpack.c.l.b16 %v67
  %v312 = vunpack.c.l.b16 %v68
  %v313 = vunpack.c.l.b16 %v69
  %v314 = vunpack.c.l.b16 %v70
  %v315 = vunpack.c.l.b16 %v71
  %v316 = vunpack.c.l.b16 %v72
  %v317 = vunpack.c.l.b16 %v73
  %v318 = vunpack.c.l.b16 %v74
  %v319 = vunpack.c.l.b16 %v75
  %v320 = vunpack.c.l.b16 %v76
  %v321 = vunpack.c.l.b16 %v77
  %v322 = vunpack.c.l.b16 %v78
  %v323 = vunpack.c.l.b16 %v79
  %v324 = vunpack.c.l.b16 %v80
  %v325 = vpack.c.b16 %v302, %v301
  %v326 = vpack.c.b16 %v304, %v303
  %v327 = vpack.c.b16 %v306, %v305
  %v328 = vpack.c.b16 %v308, %v307
  %v329 = vpack.c.b16 %v310, %v309
  %v330 = vpack.c.b16 %v312, %v311
  %v331 = vpack.c.b16 %v314, %v313
  %v332 = vpack.c.b16 %v316, %v315
  %v333 = vpack.c.b16 %v318, %v317
  %v334 = vpack.c.b16 %v320, %v319
  %v335 = vpack.c.b16 %v322, %v321
  %v336 = vpack.c.b16 %v324, %v323
  %vm349 = vcmask 523264
  %v351 = vsel %vm349, %v215, 0
  %v354 = vsel %vm349, %v217, 0
  %v357 = vsel %vm349, %v219, 0
  %v360 = vsel %vm349, %v221, 0
  %v363 = vsel %vm349, %v223, 0
  %v366 = vsel %vm349, %v225, 0
  %v369 = vsel %vm349, %v227, 0
  %v372 = vsel %vm349, %v229, 0
  %v375 = vsel %vm349, %v231, 0
  %v378 = vsel %vm349, %v233, 0
  %v381 = vsel %vm349, %v235, 0
  %v384 = vsel %vm349, %v237, 0
  %v387 = vsel %vm349, %v239, 0
  %v390 = vsel %vm349, %v241, 0
  %v393 = vsel %vm349, %v243, 0
  %v396 = vsel %vm349, %v245, 0
  %v399 = vsel %vm349, %v247, 0
  %v402 = vsel %vm349, %v249, 0
  %v405 = vsel %vm349, %v251, 0
  %v408 = vsel %vm349, %v253, 0
  %v411 = vsel %vm349, %v255, 0
  %413 = vmatprep.subr.bf16.mxu0 0
  %414 = vmatpush1.bf16.msra.mxu0 %v325
  %415 = vmatprep.subr.bf16.mxu0 0
  %416 = vmatpush1.bf16.msra.mxu0 %v326
  %417 = vmatprep.subr.bf16.mxu0 0
  %418 = vmatpush1.bf16.msra.mxu0 %v327
  %419 = vmatprep.subr.bf16.mxu0 0
  %420 = vmatpush1.bf16.msra.mxu0 %v328
  %421 = vmatprep.subr.bf16.mxu0 0
  %422 = vmatpush1.bf16.msra.mxu0 %v329
  %423 = vmatprep.subr.bf16.mxu0 0
  %424 = vmatpush1.bf16.msra.mxu0 %v330
  %425 = vmatprep.subr.bf16.mxu0 0
  %426 = vmatpush1.bf16.msra.mxu0 %v331
  %427 = vmatprep.subr.bf16.mxu0 0
  %428 = vmatpush1.bf16.msra.mxu0 %v332
  %429 = vmatprep.subr.bf16.mxu0 0
  %430 = vmatpush1.bf16.msra.mxu0 %v333
  %431 = vmatprep.subr.bf16.mxu0 0
  %432 = vmatpush1.bf16.msra.mxu0 %v334
  %433 = vmatprep.subr.bf16.mxu0 0
  %434 = vmatpush1.bf16.msra.mxu0 %v335
  %435 = vmatprep.subr.bf16.mxu0 0
  %436 = vmatpush1.bf16.msra.mxu0 %v336
  %437 = vmatprep.subr.bf16.mxu0 0
  %438 = vmatpush1.bf16.msra.mxu0 0
  %439 = vmatprep.subr.bf16.mxu0 0
  %440 = vmatpush1.bf16.msra.mxu0 0
  %441 = vmatprep.subr.bf16.mxu0 0
  %442 = vmatpush1.bf16.msra.mxu0 0
  %443 = vmatprep.subr.bf16.mxu0 0
  %444 = vmatpush1.bf16.msra.mxu0 0
  %445 = vmatprep.mubr.bf16.mxu0 %v351
  %446 = vmatmul.mubr.bf16.gmra.mrb[0].mxu0 %v214
  %v447 = vpop.f32.mrb[0].mxu0
  %v448 = vadd.f32 %v86, %v447
  %v449 = vpop.f32.mrb[0].mxu0
  %v450 = vpop.f32.mrb[0].mxu0
  %v451 = vadd.f32 %v86, %v450
  %v452 = vpop.f32.mrb[0].mxu0
  %453 = vmatprep.mubr.bf16.mxu0 %v354
  %454 = vmatmul.mubr.bf16.gmra.mrb[0].mxu0 %v216
  %v455 = vpop.f32.mrb[0].mxu0
  %v456 = vadd.f32 %v86, %v455
  %v457 = vpop.f32.mrb[0].mxu0
  %v458 = vpop.f32.mrb[0].mxu0
  %v459 = vadd.f32 %v86, %v458
  %v460 = vpop.f32.mrb[0].mxu0
  %461 = vmatprep.mubr.bf16.mxu0 %v357
  %462 = vmatmul.mubr.bf16.gmra.mrb[0].mxu0 %v218
  %v463 = vpop.f32.mrb[0].mxu0
  %v464 = vadd.f32 %v86, %v463
  %v465 = vpop.f32.mrb[0].mxu0
  %v466 = vpop.f32.mrb[0].mxu0
  %v467 = vadd.f32 %v86, %v466
  %v468 = vpop.f32.mrb[0].mxu0
  %469 = vmatprep.mubr.bf16.mxu0 %v360
  %470 = vmatmul.mubr.bf16.gmra.mrb[0].mxu0 %v220
  %v471 = vpop.f32.mrb[0].mxu0
  %v472 = vadd.f32 %v86, %v471
  %v473 = vpop.f32.mrb[0].mxu0
  %v474 = vpop.f32.mrb[0].mxu0
  %v475 = vadd.f32 %v86, %v474
  %v476 = vpop.f32.mrb[0].mxu0
  %477 = vmatprep.mubr.bf16.mxu0 %v363
  %478 = vmatmul.mubr.bf16.gmra.mrb[0].mxu0 %v222
  %v479 = vpop.f32.mrb[0].mxu0
  %v480 = vadd.f32 %v86, %v479
  %v481 = vpop.f32.mrb[0].mxu0
  %v482 = vpop.f32.mrb[0].mxu0
  %v483 = vadd.f32 %v86, %v482
  %v484 = vpop.f32.mrb[0].mxu0
  %485 = vmatprep.mubr.bf16.mxu0 %v366
  %486 = vmatmul.mubr.bf16.gmra.mrb[0].mxu0 %v224
  %v487 = vpop.f32.mrb[0].mxu0
  %v488 = vadd.f32 %v86, %v487
  %v489 = vpop.f32.mrb[0].mxu0
  %v490 = vpop.f32.mrb[0].mxu0
  %v491 = vadd.f32 %v86, %v490
  %v492 = vpop.f32.mrb[0].mxu0
  %493 = vmatprep.mubr.bf16.mxu0 %v369
  %494 = vmatmul.mubr.bf16.gmra.mrb[0].mxu0 %v226
  %v495 = vpop.f32.mrb[0].mxu0
  %v496 = vadd.f32 %v86, %v495
  %v497 = vpop.f32.mrb[0].mxu0
  %v498 = vpop.f32.mrb[0].mxu0
  %v499 = vadd.f32 %v86, %v498
  %v500 = vpop.f32.mrb[0].mxu0
  %501 = vmatprep.mubr.bf16.mxu0 %v372
  %502 = vmatmul.mubr.bf16.gmra.mrb[0].mxu0 %v228
  %v503 = vpop.f32.mrb[0].mxu0
  %v504 = vadd.f32 %v86, %v503
  %v505 = vpop.f32.mrb[0].mxu0
  %v506 = vpop.f32.mrb[0].mxu0
  %v507 = vadd.f32 %v86, %v506
  %v508 = vpop.f32.mrb[0].mxu0
  %509 = vmatprep.mubr.bf16.mxu0 %v375
  %510 = vmatmul.mubr.bf16.gmra.mrb[0].mxu0 %v230
  %v511 = vpop.f32.mrb[0].mxu0
  %v512 = vadd.f32 %v86, %v511
  %v513 = vpop.f32.mrb[0].mxu0
  %v514 = vpop.f32.mrb[0].mxu0
  %v515 = vadd.f32 %v86, %v514
  %v516 = vpop.f32.mrb[0].mxu0
  %517 = vmatprep.mubr.bf16.mxu0 %v378
  %518 = vmatmul.mubr.bf16.gmra.mrb[0].mxu0 %v232
  %v519 = vpop.f32.mrb[0].mxu0
  %v520 = vadd.f32 %v86, %v519
  %v521 = vpop.f32.mrb[0].mxu0
  %v522 = vpop.f32.mrb[0].mxu0
  %v523 = vadd.f32 %v86, %v522
  %v524 = vpop.f32.mrb[0].mxu0
  %525 = vmatprep.mubr.bf16.mxu0 %v381
  %526 = vmatmul.mubr.bf16.gmra.mrb[0].mxu0 %v234
  %v527 = vpop.f32.mrb[0].mxu0
  %v528 = vadd.f32 %v86, %v527
  %v529 = vpop.f32.mrb[0].mxu0
  %v530 = vpop.f32.mrb[0].mxu0
  %v531 = vadd.f32 %v86, %v530
  %v532 = vpop.f32.mrb[0].mxu0
  %533 = vmatprep.mubr.bf16.mxu0 %v384
  %534 = vmatmul.mubr.bf16.gmra.mrb[0].mxu0 %v236
  %v535 = vpop.f32.mrb[0].mxu0
  %v536 = vadd.f32 %v86, %v535
  %v537 = vpop.f32.mrb[0].mxu0
  %v538 = vpop.f32.mrb[0].mxu0
  %v539 = vadd.f32 %v86, %v538
  %v540 = vpop.f32.mrb[0].mxu0
  %541 = vmatprep.mubr.bf16.mxu0 %v387
  %542 = vmatmul.mubr.bf16.gmra.mrb[0].mxu0 %v238
  %v543 = vpop.f32.mrb[0].mxu0
  %v544 = vadd.f32 %v86, %v543
  %v545 = vpop.f32.mrb[0].mxu0
  %v546 = vpop.f32.mrb[0].mxu0
  %v547 = vadd.f32 %v86, %v546
  %v548 = vpop.f32.mrb[0].mxu0
  %549 = vmatprep.mubr.bf16.mxu0 %v390
  %550 = vmatmul.mubr.bf16.gmra.mrb[0].mxu0 %v240
  %v551 = vpop.f32.mrb[0].mxu0
  %v552 = vadd.f32 %v86, %v551
  %v553 = vpop.f32.mrb[0].mxu0
  %v554 = vpop.f32.mrb[0].mxu0
  %v555 = vadd.f32 %v86, %v554
  %v556 = vpop.f32.mrb[0].mxu0
  %557 = vmatprep.mubr.bf16.mxu0 %v393
  %558 = vmatmul.mubr.bf16.gmra.mrb[0].mxu0 %v242
  %v559 = vpop.f32.mrb[0].mxu0
  %v560 = vadd.f32 %v86, %v559
  %v561 = vpop.f32.mrb[0].mxu0
  %v562 = vpop.f32.mrb[0].mxu0
  %v563 = vadd.f32 %v86, %v562
  %v564 = vpop.f32.mrb[0].mxu0
  %565 = vmatprep.mubr.bf16.mxu0 %v396
  %566 = vmatmul.mubr.bf16.gmra.mrb[0].mxu0 %v244
  %v567 = vpop.f32.mrb[0].mxu0
  %v568 = vadd.f32 %v86, %v567
  %v569 = vpop.f32.mrb[0].mxu0
  %v570 = vpop.f32.mrb[0].mxu0
  %v571 = vadd.f32 %v86, %v570
  %v572 = vpop.f32.mrb[0].mxu0
  %573 = vmatprep.mubr.bf16.mxu0 %v399
  %574 = vmatmul.mubr.bf16.gmra.mrb[0].mxu0 %v246
  %v575 = vpop.f32.mrb[0].mxu0
  %v576 = vadd.f32 %v86, %v575
  %v577 = vpop.f32.mrb[0].mxu0
  %v578 = vpop.f32.mrb[0].mxu0
  %v579 = vadd.f32 %v86, %v578
  %v580 = vpop.f32.mrb[0].mxu0
  %581 = vmatprep.mubr.bf16.mxu0 %v402
  %582 = vmatmul.mubr.bf16.gmra.mrb[0].mxu0 %v248
  %v583 = vpop.f32.mrb[0].mxu0
  %v584 = vadd.f32 %v86, %v583
  %v585 = vpop.f32.mrb[0].mxu0
  %v586 = vpop.f32.mrb[0].mxu0
  %v587 = vadd.f32 %v86, %v586
  %v588 = vpop.f32.mrb[0].mxu0
  %589 = vmatprep.mubr.bf16.mxu0 %v405
  %590 = vmatmul.mubr.bf16.gmra.mrb[0].mxu0 %v250
  %v591 = vpop.f32.mrb[0].mxu0
  %v592 = vadd.f32 %v86, %v591
  %v593 = vpop.f32.mrb[0].mxu0
  %v594 = vpop.f32.mrb[0].mxu0
  %v595 = vadd.f32 %v86, %v594
  %v596 = vpop.f32.mrb[0].mxu0
  %597 = vmatprep.mubr.bf16.mxu0 %v408
  %598 = vmatmul.mubr.bf16.gmra.mrb[0].mxu0 %v252
  %v599 = vpop.f32.mrb[0].mxu0
  %v600 = vadd.f32 %v86, %v599
  %v601 = vpop.f32.mrb[0].mxu0
  %v602 = vpop.f32.mrb[0].mxu0
  %v603 = vadd.f32 %v86, %v602
  %v604 = vpop.f32.mrb[0].mxu0
  %605 = vmatprep.mubr.bf16.mxu0 %v411
  %606 = vmatmul.mubr.bf16.gmra.mrb[0].mxu0 %v254
  %v607 = vpop.f32.mrb[0].mxu0
  %v608 = vadd.f32 %v86, %v607
  %v609 = vpop.f32.mrb[0].mxu0
  %v610 = vpop.f32.mrb[0].mxu0
  %v611 = vadd.f32 %v86, %v610
  %v612 = vpop.f32.mrb[0].mxu0
  %613 = vdwg.mxu0
  %v614 = vmax.f32 %v448, 0.0
  %v615 = vmax.f32 %v451, 0.0
  %v616 = vmax.f32 %v456, 0.0
  %v617 = vmax.f32 %v459, 0.0
  %v618 = vmax.f32 %v464, 0.0
  %v619 = vmax.f32 %v467, 0.0
  %v620 = vmax.f32 %v472, 0.0
  %v621 = vmax.f32 %v475, 0.0
  %v622 = vmax.f32 %v480, 0.0
  %v623 = vmax.f32 %v483, 0.0
  %v624 = vmax.f32 %v488, 0.0
  %v625 = vmax.f32 %v491, 0.0
  %v626 = vmax.f32 %v496, 0.0
  %v627 = vmax.f32 %v499, 0.0
  %v628 = vmax.f32 %v504, 0.0
  %v629 = vmax.f32 %v507, 0.0
  %v630 = vmax.f32 %v512, 0.0
  %v631 = vmax.f32 %v515, 0.0
  %v632 = vmax.f32 %v520, 0.0
  %v633 = vmax.f32 %v523, 0.0
  %v634 = vmax.f32 %v528, 0.0
  %v635 = vmax.f32 %v531, 0.0
  %v636 = vmax.f32 %v536, 0.0
  %v637 = vmax.f32 %v539, 0.0
  %v638 = vmax.f32 %v544, 0.0
  %v639 = vmax.f32 %v547, 0.0
  %v640 = vmax.f32 %v552, 0.0
  %v641 = vmax.f32 %v555, 0.0
  %v642 = vmax.f32 %v560, 0.0
  %v643 = vmax.f32 %v563, 0.0
  %v644 = vmax.f32 %v568, 0.0
  %v645 = vmax.f32 %v571, 0.0
  %v646 = vmax.f32 %v576, 0.0
  %v647 = vmax.f32 %v579, 0.0
  %v648 = vmax.f32 %v584, 0.0
  %v649 = vmax.f32 %v587, 0.0
  %v650 = vmax.f32 %v592, 0.0
  %v651 = vmax.f32 %v595, 0.0
  %v652 = vmax.f32 %v600, 0.0
  %v653 = vmax.f32 %v603, 0.0
  %v654 = vmax.f32 %v608, 0.0
  %v655 = vmax.f32 %v611, 0.0
  %v656 = vpack.c.bf16 %v615, %v614
  %v657 = vpack.c.bf16 %v617, %v616
  %v658 = vpack.c.bf16 %v619, %v618
  %v659 = vpack.c.bf16 %v621, %v620
  %v660 = vpack.c.bf16 %v623, %v622
  %v661 = vpack.c.bf16 %v625, %v624
  %v662 = vpack.c.bf16 %v627, %v626
  %v663 = vpack.c.bf16 %v629, %v628
  %v664 = vpack.c.bf16 %v631, %v630
  %v665 = vpack.c.bf16 %v633, %v632
  %v666 = vpack.c.bf16 %v635, %v634
  %v667 = vpack.c.bf16 %v637, %v636
  %v668 = vpack.c.bf16 %v639, %v638
  %v669 = vpack.c.bf16 %v641, %v640
  %v670 = vpack.c.bf16 %v643, %v642
  %v671 = vpack.c.bf16 %v645, %v644
  %v672 = vpack.c.bf16 %v647, %v646
  %v673 = vpack.c.bf16 %v649, %v648
  %v674 = vpack.c.bf16 %v651, %v650
  %v675 = vpack.c.bf16 %v653, %v652
  %v676 = vpack.c.bf16 %v655, %v654
  %v698 = vunpack.c.l.b16 %v656
  %v699 = vunpack.c.h.b16 %v656
  %v700 = vunpack.c.l.b16 %v657
  %v701 = vunpack.c.h.b16 %v657
  %v702 = vunpack.c.l.b16 %v658
  %v703 = vunpack.c.h.b16 %v658
  %v704 = vunpack.c.l.b16 %v659
  %v705 = vunpack.c.h.b16 %v659
  %v706 = vunpack.c.l.b16 %v660
  %v707 = vunpack.c.h.b16 %v660
  %v708 = vunpack.c.l.b16 %v661
  %v709 = vunpack.c.h.b16 %v661
  %v710 = vunpack.c.l.b16 %v662
  %v711 = vunpack.c.h.b16 %v662
  %v712 = vunpack.c.l.b16 %v663
  %v713 = vunpack.c.h.b16 %v663
  %v714 = vunpack.c.l.b16 %v664
  %v715 = vunpack.c.h.b16 %v664
  %v716 = vunpack.c.l.b16 %v665
  %v717 = vunpack.c.h.b16 %v665
  %v718 = vunpack.c.l.b16 %v666
  %v719 = vunpack.c.h.b16 %v666
  %v720 = vunpack.c.l.b16 %v667
  %v721 = vunpack.c.h.b16 %v667
  %v722 = vunpack.c.l.b16 %v668
  %v723 = vunpack.c.h.b16 %v668
  %v724 = vunpack.c.l.b16 %v669
  %v725 = vunpack.c.h.b16 %v669
  %v726 = vunpack.c.l.b16 %v670
  %v727 = vunpack.c.h.b16 %v670
  %v728 = vunpack.c.l.b16 %v671
  %v729 = vunpack.c.h.b16 %v671
  %v730 = vunpack.c.l.b16 %v672
  %v731 = vunpack.c.h.b16 %v672
  %v732 = vunpack.c.l.b16 %v673
  %v733 = vunpack.c.h.b16 %v673
  %v734 = vunpack.c.l.b16 %v674
  %v735 = vunpack.c.h.b16 %v674
  %v736 = vunpack.c.l.b16 %v675
  %v737 = vunpack.c.h.b16 %v675
  %v738 = vunpack.c.l.b16 %v676
  %v739 = vunpack.c.h.b16 %v676
  %v740 = vpack.c.b16 %v698, %v698
  %v741 = vpack.c.b16 %v699, %v699
  %v742 = vpack.c.b16 %v700, %v700
  %v743 = vpack.c.b16 %v701, %v701
  %v744 = vpack.c.b16 %v702, %v702
  %v745 = vpack.c.b16 %v703, %v703
  %v746 = vpack.c.b16 %v704, %v704
  %v747 = vpack.c.b16 %v705, %v705
  %v748 = vpack.c.b16 %v706, %v706
  %v749 = vpack.c.b16 %v707, %v707
  %v750 = vpack.c.b16 %v708, %v708
  %v751 = vpack.c.b16 %v709, %v709
  %v752 = vpack.c.b16 %v710, %v710
  %v753 = vpack.c.b16 %v711, %v711
  %v754 = vpack.c.b16 %v712, %v712
  %v755 = vpack.c.b16 %v713, %v713
  %v756 = vpack.c.b16 %v714, %v714
  %v757 = vpack.c.b16 %v715, %v715
  %v758 = vpack.c.b16 %v716, %v716
  %v759 = vpack.c.b16 %v717, %v717
  %v760 = vpack.c.b16 %v718, %v718
  %v761 = vpack.c.b16 %v719, %v719
  %v762 = vpack.c.b16 %v720, %v720
  %v763 = vpack.c.b16 %v721, %v721
  %v764 = vpack.c.b16 %v722, %v722
  %v765 = vpack.c.b16 %v723, %v723
  %v766 = vpack.c.b16 %v724, %v724
  %v767 = vpack.c.b16 %v725, %v725
  %v768 = vpack.c.b16 %v726, %v726
  %v769 = vpack.c.b16 %v727, %v727
  %v770 = vpack.c.b16 %v728, %v728
  %v771 = vpack.c.b16 %v729, %v729
  %v772 = vpack.c.b16 %v730, %v730
  %v773 = vpack.c.b16 %v731, %v731
  %v774 = vpack.c.b16 %v732, %v732
  %v775 = vpack.c.b16 %v733, %v733
  %v776 = vpack.c.b16 %v734, %v734
  %v777 = vpack.c.b16 %v735, %v735
  %v778 = vpack.c.b16 %v736, %v736
  %v779 = vpack.c.b16 %v737, %v737
  %v780 = vpack.c.b16 %v738, %v738
  %v781 = vpack.c.b16 %v739, %v739
  %vm824 = vcmask 257024
  %825 = vst.msk [vmem:[%s3] sm:$0xf] %vm824, %v740
  %826 = vst.msk [vmem:[%s3 + $0x4] sm:$0xf] %vm824, %v741
  %827 = vst.msk [vmem:[%s3 + $0x8] sm:$0xf] %vm824, %v742
  %828 = vst.msk [vmem:[%s3 + $0xc] sm:$0xf] %vm824, %v743
  %829 = vst.msk [vmem:[%s3 + $0x10] sm:$0xf] %vm824, %v744
  %830 = vst.msk [vmem:[%s3 + $0x14] sm:$0xf] %vm824, %v745
  %831 = vst.msk [vmem:[%s3 + $0x18] sm:$0xf] %vm824, %v746
  %832 = vst.msk [vmem:[%s3 + $0x1c] sm:$0xf] %vm824, %v747
  %833 = vst.msk [vmem:[%s3 + $0x20] sm:$0xf] %vm824, %v748
  %834 = vst.msk [vmem:[%s3 + $0x24] sm:$0xf] %vm824, %v749
  %835 = vst.msk [vmem:[%s3 + $0x28] sm:$0xf] %vm824, %v750
  %836 = vst.msk [vmem:[%s3 + $0x2c] sm:$0xf] %vm824, %v751
  %837 = vst.msk [vmem:[%s3 + $0x30] sm:$0xf] %vm824, %v752
  %838 = vst.msk [vmem:[%s3 + $0x34] sm:$0xf] %vm824, %v753
  %839 = vst.msk [vmem:[%s3 + $0x38] sm:$0xf] %vm824, %v754
  %840 = vst.msk [vmem:[%s3 + $0x3c] sm:$0xf] %vm824, %v755
  %841 = vst.msk [vmem:[%s3 + $0x40] sm:$0xf] %vm824, %v756
  %842 = vst.msk [vmem:[%s3 + $0x44] sm:$0xf] %vm824, %v757
  %843 = vst.msk [vmem:[%s3 + $0x48] sm:$0xf] %vm824, %v758
  %844 = vst.msk [vmem:[%s3 + $0x4c] sm:$0xf] %vm824, %v759
  %845 = vst.msk [vmem:[%s3 + $0x50] sm:$0xf] %vm824, %v760
  %846 = vst.msk [vmem:[%s3 + $0x54] sm:$0xf] %vm824, %v761
  %847 = vst.msk [vmem:[%s3 + $0x58] sm:$0xf] %vm824, %v762
  %848 = vst.msk [vmem:[%s3 + $0x5c] sm:$0xf] %vm824, %v763
  %849 = vst.msk [vmem:[%s3 + $0x60] sm:$0xf] %vm824, %v764
  %850 = vst.msk [vmem:[%s3 + $0x64] sm:$0xf] %vm824, %v765
  %851 = vst.msk [vmem:[%s3 + $0x68] sm:$0xf] %vm824, %v766
  %852 = vst.msk [vmem:[%s3 + $0x6c] sm:$0xf] %vm824, %v767
  %853 = vst.msk [vmem:[%s3 + $0x70] sm:$0xf] %vm824, %v768
  %854 = vst.msk [vmem:[%s3 + $0x74] sm:$0xf] %vm824, %v769
  %855 = vst.msk [vmem:[%s3 + $0x78] sm:$0xf] %vm824, %v770
  %856 = vst.msk [vmem:[%s3 + $0x7c] sm:$0xf] %vm824, %v771
  %857 = vst.msk [vmem:[%s3 + $0x80] sm:$0xf] %vm824, %v772
  %858 = vst.msk [vmem:[%s3 + $0x84] sm:$0xf] %vm824, %v773
  %859 = vst.msk [vmem:[%s3 + $0x88] sm:$0xf] %vm824, %v774
  %860 = vst.msk [vmem:[%s3 + $0x8c] sm:$0xf] %vm824, %v775
  %861 = vst.msk [vmem:[%s3 + $0x90] sm:$0xf] %vm824, %v776
  %862 = vst.msk [vmem:[%s3 + $0x94] sm:$0xf] %vm824, %v777
  %863 = vst.msk [vmem:[%s3 + $0x98] sm:$0xf] %vm824, %v778
  %864 = vst.msk [vmem:[%s3 + $0x9c] sm:$0xf] %vm824, %v779
  %865 = vst.msk [vmem:[%s3 + $0xa0] sm:$0xf] %vm824, %v780
  %vm866 = vcmask 253952
  %867 = vst.msk [vmem:[%s3 + $0xa4] sm:$0x1] %vm866, %v781
  // Predicated region
  $region14: #{net_forward.4} parent=0 // pred_check
    _
  $region15: #{net_forward.4} parent=0 // pred_check_branch
    %869 = sbr.rel (0) target = $region17
  $region16: #{net_forward.4} parent=0 // pred_region
    _
  $region17: #{net_forward.4} parent=0 // pred_fallthru
    _
  // Predicated region
  $region18: #{net_forward.4} parent=0 // pred_check
    _
  $region19: #{net_forward.4} parent=0 // pred_check_branch
    %871 = sbr.rel (0) target = $region21
  $region20: #{net_forward.4} parent=0 // pred_region
    _
  $region21: #{net_forward.4} parent=0 // pred_fallthru
    _

// kernel: net_forward.5
$region0: #{net_forward.5}
  #allocation0 [shape = 'u32[]', space=smem, size = 0x4, offset = 0x4, fixed_abs, tag = 'smem constant byte address 0x4 - core index']
  #allocation1 [shape = 'u32[144,128]{1,0:T(1,128)}', space=vmem, size = 0x12000, scoped, tag = 'internal scratch']
  %s0 = inlined_call_operand.vmem [shape: bf16[70,288], index: 0, kind: input, shape index: {}]
  %s1 = inlined_call_operand.vmem [shape: bf16[288,64], index: 1, kind: input, shape index: {}]
  %s2 = inlined_call_operand.vmem [shape: f32[1,64], index: 2, kind: input, shape index: {}]
  %s3 = inlined_call_operand.vmem [shape: bf16[70,64], index: 3, kind: output, shape index: {}]
  %s4 = sld [smem:[#allocation0]]
  $region22: #{net_forward.5} parent=0
    _
  %s6 = ssub.s32 1, %s4
  %s7 = scalar_select 0, %s6, %s4
  // Predicated region
  $region2: #{net_forward.5} parent=0 // pred_check
    _
  $region3: #{net_forward.5} parent=0 // pred_check_branch
    %9 = sbr.rel (0) target = $region5
  $region4: #{net_forward.5} parent=0 // pred_region
    _
  $region5: #{net_forward.5} parent=0 // pred_fallthru
    _
  // Predicated region
  $region6: #{net_forward.5} parent=0 // pred_check
    _
  $region7: #{net_forward.5} parent=0 // pred_check_branch
    %11 = sbr.rel (0) target = $region9
  $region8: #{net_forward.5} parent=0 // pred_region
    _
  $region9: #{net_forward.5} parent=0 // pred_fallthru
    _
  // Predicated region
  $region10: #{net_forward.5} parent=0 // pred_check
    _
  $region11: #{net_forward.5} parent=0 // pred_check_branch
    %13 = sbr.rel (0) target = $region13
  $region12: #{net_forward.5} parent=0 // pred_region
    _
  $region13: #{net_forward.5} parent=0 // pred_fallthru
    _
  %v15 = vld [vmem:[%s0] sm:$0xff]
  %v16 = vld [vmem:[%s0 + $0x8] sm:$0xf]
  %v17 = vld [vmem:[%s0 + $0xc] sm:$0xff]
  %v18 = vld [vmem:[%s0 + $0x14] sm:$0xf]
  %v19 = vld [vmem:[%s0 + $0x18] sm:$0xff]
  %v20 = vld [vmem:[%s0 + $0x20] sm:$0xf]
  %v21 = vld [vmem:[%s0 + $0x24] sm:$0xff]
  %v22 = vld [vmem:[%s0 + $0x2c] sm:$0xf]
  %v23 = vld [vmem:[%s0 + $0x30] sm:$0xff]
  %v24 = vld [vmem:[%s0 + $0x38] sm:$0xf]
  %v25 = vld [vmem:[%s0 + $0x3c] sm:$0xff]
  %v26 = vld [vmem:[%s0 + $0x44] sm:$0xf]
  %v27 = vld [vmem:[%s0 + $0x48] sm:$0xff]
  %v28 = vld [vmem:[%s0 + $0x50] sm:$0xf]
  %v29 = vld [vmem:[%s0 + $0x54] sm:$0xff]
  %v30 = vld [vmem:[%s0 + $0x5c] sm:$0xf]
  %v31 = vld [vmem:[%s0 + $0x60] sm:$0x77]
  %v32 = vld [vmem:[%s0 + $0x68] sm:$0x7]
  %v33 = vld [vmem:[%s1] sm:$0xf]
  %v34 = vld [vmem:[%s1 + $0x4] sm:$0xf]
  %v35 = vld [vmem:[%s1 + $0x8] sm:$0xf]
  %v36 = vld [vmem:[%s1 + $0xc] sm:$0xf]
  %v37 = vld [vmem:[%s1 + $0x10] sm:$0xf]
  %v38 = vld [vmem:[%s1 + $0x14] sm:$0xf]
  %v39 = vld [vmem:[%s1 + $0x18] sm:$0xf]
  %v40 = vld [vmem:[%s1 + $0x1c] sm:$0xf]
  %v41 = vld [vmem:[%s1 + $0x20] sm:$0xf]
  %v42 = vld [vmem:[%s1 + $0x24] sm:$0xf]
  %v43 = vld [vmem:[%s1 + $0x28] sm:$0xf]
  %v44 = vld [vmem:[%s1 + $0x2c] sm:$0xf]
  %v45 = vld [vmem:[%s1 + $0x30] sm:$0xf]
  %v46 = vld [vmem:[%s1 + $0x34] sm:$0xf]
  %v47 = vld [vmem:[%s1 + $0x38] sm:$0xf]
  %v48 = vld [vmem:[%s1 + $0x3c] sm:$0xf]
  %v49 = vld [vmem:[%s1 + $0x40] sm:$0xf]
  %v50 = vld [vmem:[%s1 + $0x44] sm:$0xf]
  %v51 = vld [vmem:[%s1 + $0x48] sm:$0xf]
  %v52 = vld [vmem:[%s1 + $0x4c] sm:$0xf]
  %v53 = vld [vmem:[%s1 + $0x50] sm:$0xf]
  %v54 = vld [vmem:[%s1 + $0x54] sm:$0xf]
  %v55 = vld [vmem:[%s1 + $0x58] sm:$0xf]
  %v56 = vld [vmem:[%s1 + $0x5c] sm:$0xf]
  %v57 = vld [vmem:[%s1 + $0x60] sm:$0xf]
  %v58 = vld [vmem:[%s1 + $0x64] sm:$0xf]
  %v59 = vld [vmem:[%s1 + $0x68] sm:$0xf]
  %v60 = vld [vmem:[%s1 + $0x6c] sm:$0xf]
  %v61 = vld [vmem:[%s1 + $0x70] sm:$0xf]
  %v62 = vld [vmem:[%s1 + $0x74] sm:$0xf]
  %v63 = vld [vmem:[%s1 + $0x78] sm:$0xf]
  %v64 = vld [vmem:[%s1 + $0x7c] sm:$0xf]
  %v65 = vld [vmem:[%s1 + $0x80] sm:$0xf]
  %v66 = vld [vmem:[%s1 + $0x84] sm:$0xf]
  %v67 = vld [vmem:[%s1 + $0x88] sm:$0xf]
  %v68 = vld [vmem:[%s1 + $0x8c] sm:$0xf]
  %v69 = vld [vmem:[%s2] sm:$0x1]
  %v71 = vlaneseq
  %v72 = vshrl.u32 %v71, 7
  %v73 = vsub.s32 0, %v72
  %v74 = vrot.slane %v69, %v73
  %v94 = vunpack.c.l.b16 %v15
  %v95 = vunpack.c.h.b16 %v15
  %v96 = vunpack.c.l.b16 %v16
  %v97 = vunpack.c.l.b16 %v17
  %v98 = vunpack.c.h.b16 %v17
  %v99 = vunpack.c.l.b16 %v18
  %v100 = vunpack.c.l.b16 %v19
  %v101 = vunpack.c.h.b16 %v19
  %v102 = vunpack.c.l.b16 %v20
  %v103 = vunpack.c.l.b16 %v21
  %v104 = vunpack.c.h.b16 %v21
  %v105 = vunpack.c.l.b16 %v22
  %v106 = vunpack.c.l.b16 %v23
  %v107 = vunpack.c.h.b16 %v23
  %v108 = vunpack.c.l.b16 %v24
  %v109 = vunpack.c.l.b16 %v25
  %v110 = vunpack.c.h.b16 %v25
  %v111 = vunpack.c.l.b16 %v26
  %v112 = vunpack.c.l.b16 %v27
  %v113 = vunpack.c.h.b16 %v27
  %v114 = vunpack.c.l.b16 %v28
  %v115 = vunpack.c.l.b16 %v29
  %v116 = vunpack.c.h.b16 %v29
  %v117 = vunpack.c.l.b16 %v30
  %v118 = vunpack.c.l.b16 %v31
  %v119 = vunpack.c.h.b16 %v31
  %v120 = vunpack.c.l.b16 %v32
  %v121 = vpack.c.b16 %v97, %v94
  %v122 = vpack.c.b16 %v98, %v95
  %v123 = vpack.c.b16 %v99, %v96
  %v124 = vpack.c.b16 %v103, %v100
  %v125 = vpack.c.b16 %v104, %v101
  %v126 = vpack.c.b16 %v105, %v102
  %v127 = vpack.c.b16 %v109, %v106
  %v128 = vpack.c.b16 %v110, %v107
  %v129 = vpack.c.b16 %v111, %v108
  %v130 = vpack.c.b16 %v115, %v112
  %v131 = vpack.c.b16 %v116, %v113
  %v132 = vpack.c.b16 %v117, %v114
  %v133 = vpack.c.b16 %v118, %v118
  %v134 = vpack.c.b16 %v119, %v119
  %v135 = vpack.c.b16 %v120, %v120
  %v182 = vunpack.c.l.b16 %v33
  %v183 = vunpack.c.l.b16 %v34
  %v184 = vunpack.c.l.b16 %v35
  %v185 = vunpack.c.l.b16 %v36
  %v186 = vunpack.c.l.b16 %v37
  %v187 = vunpack.c.l.b16 %v38
  %v188 = vunpack.c.l.b16 %v39
  %v189 = vunpack.c.l.b16 %v40
  %v190 = vunpack.c.l.b16 %v41
  %v191 = vunpack.c.l.b16 %v42
  %v192 = vunpack.c.l.b16 %v43
  %v193 = vunpack.c.l.b16 %v44
  %v194 = vunpack.c.l.b16 %v45
  %v195 = vunpack.c.l.b16 %v46
  %v196 = vunpack.c.l.b16 %v47
  %v197 = vunpack.c.l.b16 %v48
  %v198 = vunpack.c.l.b16 %v49
  %v199 = vunpack.c.l.b16 %v50
  %v200 = vunpack.c.l.b16 %v51
  %v201 = vunpack.c.l.b16 %v52
  %v202 = vunpack.c.l.b16 %v53
  %v203 = vunpack.c.l.b16 %v54
  %v204 = vunpack.c.l.b16 %v55
  %v205 = vunpack.c.l.b16 %v56
  %v206 = vunpack.c.l.b16 %v57
  %v207 = vunpack.c.l.b16 %v58
  %v208 = vunpack.c.l.b16 %v59
  %v209 = vunpack.c.l.b16 %v60
  %v210 = vunpack.c.l.b16 %v61
  %v211 = vunpack.c.l.b16 %v62
  %v212 = vunpack.c.l.b16 %v63
  %v213 = vunpack.c.l.b16 %v64
  %v214 = vunpack.c.l.b16 %v65
  %v215 = vunpack.c.l.b16 %v66
  %v216 = vunpack.c.l.b16 %v67
  %v217 = vunpack.c.l.b16 %v68
  %v218 = vpack.c.b16 %v183, %v182
  %v219 = vpack.c.b16 %v185, %v184
  %v220 = vpack.c.b16 %v187, %v186
  %v221 = vpack.c.b16 %v189, %v188
  %v222 = vpack.c.b16 %v191, %v190
  %v223 = vpack.c.b16 %v193, %v192
  %v224 = vpack.c.b16 %v195, %v194
  %v225 = vpack.c.b16 %v197, %v196
  %v226 = vpack.c.b16 %v199, %v198
  %v227 = vpack.c.b16 %v201, %v200
  %v228 = vpack.c.b16 %v203, %v202
  %v229 = vpack.c.b16 %v205, %v204
  %v230 = vpack.c.b16 %v207, %v206
  %v231 = vpack.c.b16 %v209, %v208
  %v232 = vpack.c.b16 %v211, %v210
  %v233 = vpack.c.b16 %v213, %v212
  %v234 = vpack.c.b16 %v215, %v214
  %v235 = vpack.c.b16 %v217, %v216
  %vm254 = vcmask 261120
  %v256 = vsel %vm254, %v123, 0
  %v259 = vsel %vm254, %v126, 0
  %v262 = vsel %vm254, %v129, 0
  %v265 = vsel %vm254, %v132, 0
  %v268 = vsel %vm254, %v135, 0
  %270 = vmatprep.subr.bf16.mxu0 0
  %271 = vmatpush1.bf16.msra.mxu0 %v218
  %272 = vmatprep.subr.bf16.mxu0 0
  %273 = vmatpush1.bf16.msra.mxu0 %v219
  %274 = vmatprep.subr.bf16.mxu0 0
  %275 = vmatpush1.bf16.msra.mxu0 %v220
  %276 = vmatprep.subr.bf16.mxu0 0
  %277 = vmatpush1.bf16.msra.mxu0 %v221
  %278 = vmatprep.subr.bf16.mxu0 0
  %279 = vmatpush1.bf16.msra.mxu0 %v222
  %280 = vmatprep.subr.bf16.mxu0 0
  %281 = vmatpush1.bf16.msra.mxu0 %v223
  %282 = vmatprep.subr.bf16.mxu0 0
  %283 = vmatpush1.bf16.msra.mxu0 %v224
  %284 = vmatprep.subr.bf16.mxu0 0
  %285 = vmatpush1.bf16.msra.mxu0 %v225
  %286 = vmatprep.subr.bf16.mxu0 0
  %287 = vmatpush1.bf16.msra.mxu0 %v226
  %288 = vmatprep.subr.bf16.mxu0 0
  %289 = vmatpush1.bf16.msra.mxu0 %v227
  %290 = vmatprep.subr.bf16.mxu0 0
  %291 = vmatpush1.bf16.msra.mxu0 %v228
  %292 = vmatprep.subr.bf16.mxu0 0
  %293 = vmatpush1.bf16.msra.mxu0 %v229
  %294 = vmatprep.subr.bf16.mxu0 0
  %295 = vmatpush1.bf16.msra.mxu0 %v230
  %296 = vmatprep.subr.bf16.mxu0 0
  %297 = vmatpush1.bf16.msra.mxu0 %v231
  %298 = vmatprep.subr.bf16.mxu0 0
  %299 = vmatpush1.bf16.msra.mxu0 %v232
  %300 = vmatprep.subr.bf16.mxu0 0
  %301 = vmatpush1.bf16.msra.mxu0 %v233
  %302 = vmatprep.mubr.bf16.mxu0 %v122
  %303 = vmatmul.mubr.bf16.gmra.mrb[0].mxu0 %v121
  %v304 = vpop.f32.mrb[0].mxu0
  %v305 = vadd.f32 %v74, %v304
  %v306 = vpop.f32.mrb[0].mxu0
  %v307 = vpop.f32.mrb[0].mxu0
  %v308 = vadd.f32 %v74, %v307
  %v309 = vpop.f32.mrb[0].mxu0
  %310 = vmatprep.mubr.bf16.mxu0 %v125
  %311 = vmatmul.mubr.bf16.gmra.mrb[0].mxu0 %v124
  %v312 = vpop.f32.mrb[0].mxu0
  %v313 = vadd.f32 %v74, %v312
  %v314 = vpop.f32.mrb[0].mxu0
  %v315 = vpop.f32.mrb[0].mxu0
  %v316 = vadd.f32 %v74, %v315
  %v317 = vpop.f32.mrb[0].mxu0
  %318 = vmatprep.mubr.bf16.mxu0 %v128
  %319 = vmatmul.mubr.bf16.gmra.mrb[0].mxu0 %v127
  %v320 = vpop.f32.mrb[0].mxu0
  %v321 = vadd.f32 %v74, %v320
  %v322 = vpop.f32.mrb[0].mxu0
  %v323 = vpop.f32.mrb[0].mxu0
  %v324 = vadd.f32 %v74, %v323
  %v325 = vpop.f32.mrb[0].mxu0
  %326 = vmatprep.mubr.bf16.mxu0 %v131
  %327 = vmatmul.mubr.bf16.gmra.mrb[0].mxu0 %v130
  %v328 = vpop.f32.mrb[0].mxu0
  %v329 = vadd.f32 %v74, %v328
  %v330 = vpop.f32.mrb[0].mxu0
  %v331 = vpop.f32.mrb[0].mxu0
  %v332 = vadd.f32 %v74, %v331
  %v333 = vpop.f32.mrb[0].mxu0
  %334 = vmatprep.mubr.bf16.mxu0 %v134
  %335 = vmatmul.mubr.bf16.gmra.mrb[0].mxu0 %v133
  %v336 = vpop.f32.mrb[0].mxu0
  %v337 = vadd.f32 %v74, %v336
  %v338 = vpop.f32.mrb[0].mxu0
  %v339 = vpop.f32.mrb[0].mxu0
  %v340 = vpop.f32.mrb[0].mxu0
  %341 = vdwg.mxu0
  %342 = vmatprep.subr.bf16.mxu0 0
  %343 = vmatpush1.bf16.msra.mxu0 %v234
  %344 = vmatprep.subr.bf16.mxu0 0
  %345 = vmatpush1.bf16.msra.mxu0 %v235
  %346 = vmatprep.subr.bf16.mxu0 0
  %347 = vmatpush1.bf16.msra.mxu0 0
  %348 = vmatprep.subr.bf16.mxu0 0
  %349 = vmatpush1.bf16.msra.mxu0 0
  %350 = vmatprep.subr.bf16.mxu0 0
  %351 = vmatpush1.bf16.msra.mxu0 0
  %352 = vmatprep.subr.bf16.mxu0 0
  %353 = vmatpush1.bf16.msra.mxu0 0
  %354 = vmatprep.subr.bf16.mxu0 0
  %355 = vmatpush1.bf16.msra.mxu0 0
  %356 = vmatprep.subr.bf16.mxu0 0
  %357 = vmatpush1.bf16.msra.mxu0 0
  %358 = vmatprep.subr.bf16.mxu0 0
  %359 = vmatpush1.bf16.msra.mxu0 0
  %360 = vmatprep.subr.bf16.mxu0 0
  %361 = vmatpush1.bf16.msra.mxu0 0
  %362 = vmatprep.subr.bf16.mxu0 0
  %363 = vmatpush1.bf16.msra.mxu0 0
  %364 = vmatprep.subr.bf16.mxu0 0
  %365 = vmatpush1.bf16.msra.mxu0 0
  %366 = vmatprep.subr.bf16.mxu0 0
  %367 = vmatpush1.bf16.msra.mxu0 0
  %368 = vmatprep.subr.bf16.mxu0 0
  %369 = vmatpush1.bf16.msra.mxu0 0
  %370 = vmatprep.subr.bf16.mxu0 0
  %371 = vmatpush1.bf16.msra.mxu0 0
  %372 = vmatprep.subr.bf16.mxu0 0
  %373 = vmatpush1.bf16.msra.mxu0 0
  %374 = vmatprep.mubr.bf16.mxu0 0
  %375 = vmatmul.mubr.bf16.gmra.mrb[0].mxu0 %v256
  %v376 = vpop.f32.mrb[0].mxu0
  %v377 = vadd.f32 %v305, %v376
  %v378 = vpop.f32.mrb[0].mxu0
  %v379 = vpop.f32.mrb[0].mxu0
  %v380 = vadd.f32 %v308, %v379
  %v381 = vpop.f32.mrb[0].mxu0
  %382 = vmatprep.mubr.bf16.mxu0 0
  %383 = vmatmul.mubr.bf16.gmra.mrb[0].mxu0 %v259
  %v384 = vpop.f32.mrb[0].mxu0
  %v385 = vadd.f32 %v313, %v384
  %v386 = vpop.f32.mrb[0].mxu0
  %v387 = vpop.f32.mrb[0].mxu0
  %v388 = vadd.f32 %v316, %v387
  %v389 = vpop.f32.mrb[0].mxu0
  %390 = vmatprep.mubr.bf16.mxu0 0
  %391 = vmatmul.mubr.bf16.gmra.mrb[0].mxu0 %v262
  %v392 = vpop.f32.mrb[0].mxu0
  %v393 = vadd.f32 %v321, %v392
  %v394 = vpop.f32.mrb[0].mxu0
  %v395 = vpop.f32.mrb[0].mxu0
  %v396 = vadd.f32 %v324, %v395
  %v397 = vpop.f32.mrb[0].mxu0
  %398 = vmatprep.mubr.bf16.mxu0 0
  %399 = vmatmul.mubr.bf16.gmra.mrb[0].mxu0 %v265
  %v400 = vpop.f32.mrb[0].mxu0
  %v401 = vadd.f32 %v329, %v400
  %v402 = vpop.f32.mrb[0].mxu0
  %v403 = vpop.f32.mrb[0].mxu0
  %v404 = vadd.f32 %v332, %v403
  %v405 = vpop.f32.mrb[0].mxu0
  %406 = vmatprep.mubr.bf16.mxu0 0
  %407 = vmatmul.mubr.bf16.gmra.mrb[0].mxu0 %v268
  %v408 = vpop.f32.mrb[0].mxu0
  %v409 = vadd.f32 %v337, %v408
  %v410 = vpop.f32.mrb[0].mxu0
  %v411 = vpop.f32.mrb[0].mxu0
  %v412 = vpop.f32.mrb[0].mxu0
  %413 = vdwg.mxu0
  %v414 = vmax.f32 %v377, 0.0
  %v415 = vmax.f32 %v380, 0.0
  %v416 = vmax.f32 %v385, 0.0
  %v417 = vmax.f32 %v388, 0.0
  %v418 = vmax.f32 %v393, 0.0
  %v419 = vmax.f32 %v396, 0.0
  %v420 = vmax.f32 %v401, 0.0
  %v421 = vmax.f32 %v404, 0.0
  %v422 = vmax.f32 %v409, 0.0
  %v423 = vpack.c.bf16 %v415, %v414
  %v424 = vpack.c.bf16 %v417, %v416
  %v425 = vpack.c.bf16 %v419, %v418
  %v426 = vpack.c.bf16 %v421, %v420
  %v427 = vpack.c.bf16 %v422, %v422
  %v433 = vunpack.c.l.b16 %v423
  %v434 = vunpack.c.h.b16 %v423
  %v435 = vunpack.c.l.b16 %v424
  %v436 = vunpack.c.h.b16 %v424
  %v437 = vunpack.c.l.b16 %v425
  %v438 = vunpack.c.h.b16 %v425
  %v439 = vunpack.c.l.b16 %v426
  %v440 = vunpack.c.h.b16 %v426
  %v441 = vunpack.c.l.b16 %v427
  %v442 = vpack.c.b16 %v433, %v433
  %v443 = vpack.c.b16 %v434, %v434
  %v444 = vpack.c.b16 %v435, %v435
  %v445 = vpack.c.b16 %v436, %v436
  %v446 = vpack.c.b16 %v437, %v437
  %v447 = vpack.c.b16 %v438, %v438
  %v448 = vpack.c.b16 %v439, %v439
  %v449 = vpack.c.b16 %v440, %v440
  %v450 = vpack.c.b16 %v441, %v441
  %vm460 = vcmask 519168
  %461 = vst.msk [vmem:[%s3] sm:$0xf] %vm460, %v442
  %462 = vst.msk [vmem:[%s3 + $0x4] sm:$0xf] %vm460, %v443
  %463 = vst.msk [vmem:[%s3 + $0x8] sm:$0xf] %vm460, %v444
  %464 = vst.msk [vmem:[%s3 + $0xc] sm:$0xf] %vm460, %v445
  %465 = vst.msk [vmem:[%s3 + $0x10] sm:$0xf] %vm460, %v446
  %466 = vst.msk [vmem:[%s3 + $0x14] sm:$0xf] %vm460, %v447
  %467 = vst.msk [vmem:[%s3 + $0x18] sm:$0xf] %vm460, %v448
  %468 = vst.msk [vmem:[%s3 + $0x1c] sm:$0xf] %vm460, %v449
  %vm469 = vcmask 518144
  %470 = vst.msk [vmem:[%s3 + $0x20] sm:$0x7] %vm469, %v450
  // Predicated region
  $region14: #{net_forward.5} parent=0 // pred_check
    _
  $region15: #{net_forward.5} parent=0 // pred_check_branch
    %472 = sbr.rel (0) target = $region17
  $region16: #{net_forward.5} parent=0 // pred_region
    _
  $region17: #{net_forward.5} parent=0 // pred_fallthru
    _
  // Predicated region
  $region18: #{net_forward.5} parent=0 // pred_check
    _
  $region19: #{net_forward.5} parent=0 // pred_check_branch
    %474 = sbr.rel (0) target = $region21
  $region20: #{net_forward.5} parent=0 // pred_region
    _
  $region21: #{net_forward.5} parent=0 // pred_fallthru
    _

// kernel: net_forward.6
$region0: #{net_forward.6}
  #allocation0 [shape = 'u32[]', space=smem, size = 0x4, offset = 0x4, fixed_abs, tag = 'smem constant byte address 0x4 - core index']
  #allocation1 [shape = 'u32[144,128]{1,0:T(1,128)}', space=vmem, size = 0x12000, scoped, tag = 'internal scratch']
  %s0 = inlined_call_operand.vmem [shape: bf16[30,576], index: 0, kind: input, shape index: {}]
  %s1 = inlined_call_operand.vmem [shape: bf16[576,64], index: 1, kind: input, shape index: {}]
  %s2 = inlined_call_operand.vmem [shape: f32[1,64], index: 2, kind: input, shape index: {}]
  %s3 = inlined_call_operand.vmem [shape: bf16[30,64], index: 3, kind: output, shape index: {}]
  %s4 = sld [smem:[#allocation0]]
  $region22: #{net_forward.6} parent=0
    _
  %s6 = ssub.s32 1, %s4
  %s7 = scalar_select 0, %s6, %s4
  // Predicated region
  $region2: #{net_forward.6} parent=0 // pred_check
    _
  $region3: #{net_forward.6} parent=0 // pred_check_branch
    %9 = sbr.rel (0) target = $region5
  $region4: #{net_forward.6} parent=0 // pred_region
    _
  $region5: #{net_forward.6} parent=0 // pred_fallthru
    _
  // Predicated region
  $region6: #{net_forward.6} parent=0 // pred_check
    _
  $region7: #{net_forward.6} parent=0 // pred_check_branch
    %11 = sbr.rel (0) target = $region9
  $region8: #{net_forward.6} parent=0 // pred_region
    _
  $region9: #{net_forward.6} parent=0 // pred_fallthru
    _
  // Predicated region
  $region10: #{net_forward.6} parent=0 // pred_check
    _
  $region11: #{net_forward.6} parent=0 // pred_check_branch
    %13 = sbr.rel (0) target = $region13
  $region12: #{net_forward.6} parent=0 // pred_region
    _
  $region13: #{net_forward.6} parent=0 // pred_fallthru
    _
  %v15 = vld [vmem:[%s0] sm:$0xff]
  %v16 = vld [vmem:[%s0 + $0x8] sm:$0xff]
  %v17 = vld [vmem:[%s0 + $0x10] sm:$0xf]
  %v18 = vld [vmem:[%s0 + $0x14] sm:$0xff]
  %v19 = vld [vmem:[%s0 + $0x1c] sm:$0xff]
  %v20 = vld [vmem:[%s0 + $0x24] sm:$0xf]
  %v21 = vld [vmem:[%s0 + $0x28] sm:$0xff]
  %v22 = vld [vmem:[%s0 + $0x30] sm:$0xff]
  %v23 = vld [vmem:[%s0 + $0x38] sm:$0xf]
  %v24 = vld [vmem:[%s0 + $0x3c] sm:$0x77]
  %v25 = vld [vmem:[%s0 + $0x44] sm:$0x77]
  %v26 = vld [vmem:[%s0 + $0x4c] sm:$0x7]
  %v27 = vld [vmem:[%s1] sm:$0xf]
  %v28 = vld [vmem:[%s1 + $0x4] sm:$0xf]
  %v29 = vld [vmem:[%s1 + $0x8] sm:$0xf]
  %v30 = vld [vmem:[%s1 + $0xc] sm:$0xf]
  %v31 = vld [vmem:[%s1 + $0x10] sm:$0xf]
  %v32 = vld [vmem:[%s1 + $0x14] sm:$0xf]
  %v33 = vld [vmem:[%s1 + $0x18] sm:$0xf]
  %v34 = vld [vmem:[%s1 + $0x1c] sm:$0xf]
  %v35 = vld [vmem:[%s1 + $0x20] sm:$0xf]
  %v36 = vld [vmem:[%s1 + $0x24] sm:$0xf]
  %v37 = vld [vmem:[%s1 + $0x28] sm:$0xf]
  %v38 = vld [vmem:[%s1 + $0x2c] sm:$0xf]
  %v39 = vld [vmem:[%s1 + $0x30] sm:$0xf]
  %v40 = vld [vmem:[%s1 + $0x34] sm:$0xf]
  %v41 = vld [vmem:[%s1 + $0x38] sm:$0xf]
  %v42 = vld [vmem:[%s1 + $0x3c] sm:$0xf]
  %v43 = vld [vmem:[%s1 + $0x40] sm:$0xf]
  %v44 = vld [vmem:[%s1 + $0x44] sm:$0xf]
  %v45 = vld [vmem:[%s1 + $0x48] sm:$0xf]
  %v46 = vld [vmem:[%s1 + $0x4c] sm:$0xf]
  %v47 = vld [vmem:[%s1 + $0x50] sm:$0xf]
  %v48 = vld [vmem:[%s1 + $0x54] sm:$0xf]
  %v49 = vld [vmem:[%s1 + $0x58] sm:$0xf]
  %v50 = vld [vmem:[%s1 + $0x5c] sm:$0xf]
  %v51 = vld [vmem:[%s1 + $0x60] sm:$0xf]
  %v52 = vld [vmem:[%s1 + $0x64] sm:$0xf]
  %v53 = vld [vmem:[%s1 + $0x68] sm:$0xf]
  %v54 = vld [vmem:[%s1 + $0x6c] sm:$0xf]
  %v55 = vld [vmem:[%s1 + $0x70] sm:$0xf]
  %v56 = vld [vmem:[%s1 + $0x74] sm:$0xf]
  %v57 = vld [vmem:[%s1 + $0x78] sm:$0xf]
  %v58 = vld [vmem:[%s1 + $0x7c] sm:$0xf]
  %v59 = vld [vmem:[%s1 + $0x80] sm:$0xf]
  %v60 = vld [vmem:[%s1 + $0x84] sm:$0xf]
  %v61 = vld [vmem:[%s1 + $0x88] sm:$0xf]
  %v62 = vld [vmem:[%s1 + $0x8c] sm:$0xf]
  %v63 = vld [vmem:[%s1 + $0x90] sm:$0xf]
  %v64 = vld [vmem:[%s1 + $0x94] sm:$0xf]
  %v65 = vld [vmem:[%s1 + $0x98] sm:$0xf]
  %v66 = vld [vmem:[%s1 + $0x9c] sm:$0xf]
  %v67 = vld [vmem:[%s1 + $0xa0] sm:$0xf]
  %v68 = vld [vmem:[%s1 + $0xa4] sm:$0xf]
  %v69 = vld [vmem:[%s1 + $0xa8] sm:$0xf]
  %v70 = vld [vmem:[%s1 + $0xac] sm:$0xf]
  %v71 = vld [vmem:[%s1 + $0xb0] sm:$0xf]
  %v72 = vld [vmem:[%s1 + $0xb4] sm:$0xf]
  %v73 = vld [vmem:[%s1 + $0xb8] sm:$0xf]
  %v74 = vld [vmem:[%s1 + $0xbc] sm:$0xf]
  %v75 = vld [vmem:[%s1 + $0xc0] sm:$0xf]
  %v76 = vld [vmem:[%s1 + $0xc4] sm:$0xf]
  %v77 = vld [vmem:[%s1 + $0xc8] sm:$0xf]
  %v78 = vld [vmem:[%s1 + $0xcc] sm:$0xf]
  %v79 = vld [vmem:[%s1 + $0xd0] sm:$0xf]
  %v80 = vld [vmem:[%s1 + $0xd4] sm:$0xf]
  %v81 = vld [vmem:[%s1 + $0xd8] sm:$0xf]
  %v82 = vld [vmem:[%s1 + $0xdc] sm:$0xf]
  %v83 = vld [vmem:[%s1 + $0xe0] sm:$0xf]
  %v84 = vld [vmem:[%s1 + $0xe4] sm:$0xf]
  %v85 = vld [vmem:[%s1 + $0xe8] sm:$0xf]
  %v86 = vld [vmem:[%s1 + $0xec] sm:$0xf]
  %v87 = vld [vmem:[%s1 + $0xf0] sm:$0xf]
  %v88 = vld [vmem:[%s1 + $0xf4] sm:$0xf]
  %v89 = vld [vmem:[%s1 + $0xf8] sm:$0xf]
  %v90 = vld [vmem:[%s1 + $0xfc] sm:$0xf]
  %v91 = vld [vmem:[%s1 + $0x100] sm:$0xf]
  %v92 = vld [vmem:[%s1 + $0x104] sm:$0xf]
  %v93 = vld [vmem:[%s1 + $0x108] sm:$0xf]
  %v94 = vld [vmem:[%s1 + $0x10c] sm:$0xf]
  %v95 = vld [vmem:[%s1 + $0x110] sm:$0xf]
  %v96 = vld [vmem:[%s1 + $0x114] sm:$0xf]
  %v97 = vld [vmem:[%s1 + $0x118] sm:$0xf]
  %v98 = vld [vmem:[%s1 + $0x11c] sm:$0xf]
  %v99 = vld [vmem:[%s2] sm:$0x1]
  %v101 = vlaneseq
  %v102 = vshrl.u32 %v101, 7
  %v103 = vsub.s32 0, %v102
  %v104 = vrot.slane %v99, %v103
  %v118 = vunpack.c.l.b16 %v15
  %v119 = vunpack.c.h.b16 %v15
  %v120 = vunpack.c.l.b16 %v16
  %v121 = vunpack.c.h.b16 %v16
  %v122 = vunpack.c.l.b16 %v17
  %v123 = vunpack.c.l.b16 %v18
  %v124 = vunpack.c.h.b16 %v18
  %v125 = vunpack.c.l.b16 %v19
  %v126 = vunpack.c.h.b16 %v19
  %v127 = vunpack.c.l.b16 %v20
  %v128 = vunpack.c.l.b16 %v21
  %v129 = vunpack.c.h.b16 %v21
  %v130 = vunpack.c.l.b16 %v22
  %v131 = vunpack.c.h.b16 %v22
  %v132 = vunpack.c.l.b16 %v23
  %v133 = vunpack.c.l.b16 %v24
  %v134 = vunpack.c.h.b16 %v24
  %v135 = vunpack.c.l.b16 %v25
  %v136 = vunpack.c.h.b16 %v25
  %v137 = vunpack.c.l.b16 %v26
  %v138 = vpack.c.b16 %v123, %v118
  %v139 = vpack.c.b16 %v124, %v119
  %v140 = vpack.c.b16 %v125, %v120
  %v141 = vpack.c.b16 %v126, %v121
  %v142 = vpack.c.b16 %v127, %v122
  %v143 = vpack.c.b16 %v133, %v128
  %v144 = vpack.c.b16 %v134, %v129
  %v145 = vpack.c.b16 %v135, %v130
  %v146 = vpack.c.b16 %v136, %v131
  %v147 = vpack.c.b16 %v137, %v132
  %v228 = vunpack.c.l.b16 %v27
  %v229 = vunpack.c.l.b16 %v28
  %v230 = vunpack.c.l.b16 %v29
  %v231 = vunpack.c.l.b16 %v30
  %v232 = vunpack.c.l.b16 %v31
  %v233 = vunpack.c.l.b16 %v32
  %v234 = vunpack.c.l.b16 %v33
  %v235 = vunpack.c.l.b16 %v34
  %v236 = vunpack.c.l.b16 %v35
  %v237 = vunpack.c.l.b16 %v36
  %v238 = vunpack.c.l.b16 %v37
  %v239 = vunpack.c.l.b16 %v38
  %v240 = vunpack.c.l.b16 %v39
  %v241 = vunpack.c.l.b16 %v40
  %v242 = vunpack.c.l.b16 %v41
  %v243 = vunpack.c.l.b16 %v42
  %v244 = vunpack.c.l.b16 %v43
  %v245 = vunpack.c.l.b16 %v44
  %v246 = vunpack.c.l.b16 %v45
  %v247 = vunpack.c.l.b16 %v46
  %v248 = vunpack.c.l.b16 %v47
  %v249 = vunpack.c.l.b16 %v48
  %v250 = vunpack.c.l.b16 %v49
  %v251 = vunpack.c.l.b16 %v50
  %v252 = vunpack.c.l.b16 %v51
  %v253 = vunpack.c.l.b16 %v52
  %v254 = vunpack.c.l.b16 %v53
  %v255 = vunpack.c.l.b16 %v54
  %v256 = vunpack.c.l.b16 %v55
  %v257 = vunpack.c.l.b16 %v56
  %v258 = vunpack.c.l.b16 %v57
  %v259 = vunpack.c.l.b16 %v58
  %v260 = vunpack.c.l.b16 %v59
  %v261 = vunpack.c.l.b16 %v60
  %v262 = vunpack.c.l.b16 %v61
  %v263 = vunpack.c.l.b16 %v62
  %v264 = vunpack.c.l.b16 %v63
  %v265 = vunpack.c.l.b16 %v64
  %v266 = vunpack.c.l.b16 %v65
  %v267 = vunpack.c.l.b16 %v66
  %v268 = vunpack.c.l.b16 %v67
  %v269 = vunpack.c.l.b16 %v68
  %v270 = vunpack.c.l.b16 %v69
  %v271 = vunpack.c.l.b16 %v70
  %v272 = vunpack.c.l.b16 %v71
  %v273 = vunpack.c.l.b16 %v72
  %v274 = vunpack.c.l.b16 %v73
  %v275 = vunpack.c.l.b16 %v74
  %v276 = vunpack.c.l.b16 %v75
  %v277 = vunpack.c.l.b16 %v76
  %v278 = vunpack.c.l.b16 %v77
  %v279 = vunpack.c.l.b16 %v78
  %v280 = vunpack.c.l.b16 %v79
  %v281 = vunpack.c.l.b16 %v80
  %v282 = vunpack.c.l.b16 %v81
  %v283 = vunpack.c.l.b16 %v82
  %v284 = vunpack.c.l.b16 %v83
  %v285 = vunpack.c.l.b16 %v84
  %v286 = vunpack.c.l.b16 %v85
  %v287 = vunpack.c.l.b16 %v86
  %v288 = vunpack.c.l.b16 %v87
  %v289 = vunpack.c.l.b16 %v88
  %v290 = vunpack.c.l.b16 %v89
  %v291 = vunpack.c.l.b16 %v90
  %v292 = vunpack.c.l.b16 %v91
  %v293 = vunpack.c.l.b16 %v92
  %v294 = vunpack.c.l.b16 %v93
  %v295 = vunpack.c.l.b16 %v94
  %v296 = vunpack.c.l.b16 %v95
  %v297 = vunpack.c.l.b16 %v96
  %v298 = vunpack.c.l.b16 %v97
  %v299 = vunpack.c.l.b16 %v98
  %v300 = vpack.c.b16 %v229, %v228
  %v301 = vpack.c.b16 %v231, %v230
  %v302 = vpack.c.b16 %v233, %v232
  %v303 = vpack.c.b16 %v235, %v234
  %v304 = vpack.c.b16 %v237, %v236
  %v305 = vpack.c.b16 %v239, %v238
  %v306 = vpack.c.b16 %v241, %v240
  %v307 = vpack.c.b16 %v243, %v242
  %v308 = vpack.c.b16 %v245, %v244
  %v309 = vpack.c.b16 %v247, %v246
  %v310 = vpack.c.b16 %v249, %v248
  %v311 = vpack.c.b16 %v251, %v250
  %v312 = vpack.c.b16 %v253, %v252
  %v313 = vpack.c.b16 %v255, %v254
  %v314 = vpack.c.b16 %v257, %v256
  %v315 = vpack.c.b16 %v259, %v258
  %v316 = vpack.c.b16 %v261, %v260
  %v317 = vpack.c.b16 %v263, %v262
  %v318 = vpack.c.b16 %v265, %v264
  %v319 = vpack.c.b16 %v267, %v266
  %v320 = vpack.c.b16 %v269, %v268
  %v321 = vpack.c.b16 %v271, %v270
  %v322 = vpack.c.b16 %v273, %v272
  %v323 = vpack.c.b16 %v275, %v274
  %v324 = vpack.c.b16 %v277, %v276
  %v325 = vpack.c.b16 %v279, %v278
  %v326 = vpack.c.b16 %v281, %v280
  %v327 = vpack.c.b16 %v283, %v282
  %v328 = vpack.c.b16 %v285, %v284
  %v329 = vpack.c.b16 %v287, %v286
  %v330 = vpack.c.b16 %v289, %v288
  %v331 = vpack.c.b16 %v291, %v290
  %v332 = vpack.c.b16 %v293, %v292
  %v333 = vpack.c.b16 %v295, %v294
  %v334 = vpack.c.b16 %v297, %v296
  %v335 = vpack.c.b16 %v299, %v298
  %vm372 = vcmask 523264
  %v374 = vsel %vm372, %v142, 0
  %v377 = vsel %vm372, %v147, 0
  %379 = vmatprep.subr.bf16.mxu0 0
  %380 = vmatpush1.bf16.msra.mxu0 %v300
  %381 = vmatprep.subr.bf16.mxu0 0
  %382 = vmatpush1.bf16.msra.mxu0 %v301
  %383 = vmatprep.subr.bf16.mxu0 0
  %384 = vmatpush1.bf16.msra.mxu0 %v302
  %385 = vmatprep.subr.bf16.mxu0 0
  %386 = vmatpush1.bf16.msra.mxu0 %v303
  %387 = vmatprep.subr.bf16.mxu0 0
  %388 = vmatpush1.bf16.msra.mxu0 %v304
  %389 = vmatprep.subr.bf16.mxu0 0
  %390 = vmatpush1.bf16.msra.mxu0 %v305
  %391 = vmatprep.subr.bf16.mxu0 0
  %392 = vmatpush1.bf16.msra.mxu0 %v306
  %393 = vmatprep.subr.bf16.mxu0 0
  %394 = vmatpush1.bf16.msra.mxu0 %v307
  %395 = vmatprep.subr.bf16.mxu0 0
  %396 = vmatpush1.bf16.msra.mxu0 %v308
  %397 = vmatprep.subr.bf16.mxu0 0
  %398 = vmatpush1.bf16.msra.mxu0 %v309
  %399 = vmatprep.subr.bf16.mxu0 0
  %400 = vmatpush1.bf16.msra.mxu0 %v310
  %401 = vmatprep.subr.bf16.mxu0 0
  %402 = vmatpush1.bf16.msra.mxu0 %v311
  %403 = vmatprep.subr.bf16.mxu0 0
  %404 = vmatpush1.bf16.msra.mxu0 %v312
  %405 = vmatprep.subr.bf16.mxu0 0
  %406 = vmatpush1.bf16.msra.mxu0 %v313
  %407 = vmatprep.subr.bf16.mxu0 0
  %408 = vmatpush1.bf16.msra.mxu0 %v314
  %409 = vmatprep.subr.bf16.mxu0 0
  %410 = vmatpush1.bf16.msra.mxu0 %v315
  %411 = vmatprep.mubr.bf16.mxu0 %v139
  %412 = vmatmul.mubr.bf16.gmra.mrb[0].mxu0 %v138
  %v413 = vpop.f32.mrb[0].mxu0
  %v414 = vadd.f32 %v104, %v413
  %v415 = vpop.f32.mrb[0].mxu0
  %v416 = vpop.f32.mrb[0].mxu0
  %v417 = vadd.f32 %v104, %v416
  %v418 = vpop.f32.mrb[0].mxu0
  %419 = vmatprep.mubr.bf16.mxu0 %v144
  %420 = vmatmul.mubr.bf16.gmra.mrb[0].mxu0 %v143
  %v421 = vpop.f32.mrb[0].mxu0
  %v422 = vadd.f32 %v104, %v421
  %v423 = vpop.f32.mrb[0].mxu0
  %v424 = vpop.f32.mrb[0].mxu0
  %v425 = vadd.f32 %v104, %v424
  %v426 = vpop.f32.mrb[0].mxu0
  %427 = vdwg.mxu0
  %428 = vmatprep.subr.bf16.mxu0 0
  %429 = vmatpush1.bf16.msra.mxu0 %v316
  %430 = vmatprep.subr.bf16.mxu0 0
  %431 = vmatpush1.bf16.msra.mxu0 %v317
  %432 = vmatprep.subr.bf16.mxu0 0
  %433 = vmatpush1.bf16.msra.mxu0 %v318
  %434 = vmatprep.subr.bf16.mxu0 0
  %435 = vmatpush1.bf16.msra.mxu0 %v319
  %436 = vmatprep.subr.bf16.mxu0 0
  %437 = vmatpush1.bf16.msra.mxu0 %v320
  %438 = vmatprep.subr.bf16.mxu0 0
  %439 = vmatpush1.bf16.msra.mxu0 %v321
  %440 = vmatprep.subr.bf16.mxu0 0
  %441 = vmatpush1.bf16.msra.mxu0 %v322
  %442 = vmatprep.subr.bf16.mxu0 0
  %443 = vmatpush1.bf16.msra.mxu0 %v323
  %444 = vmatprep.subr.bf16.mxu0 0
  %445 = vmatpush1.bf16.msra.mxu0 %v324
  %446 = vmatprep.subr.bf16.mxu0 0
  %447 = vmatpush1.bf16.msra.mxu0 %v325
  %448 = vmatprep.subr.bf16.mxu0 0
  %449 = vmatpush1.bf16.msra.mxu0 %v326
  %450 = vmatprep.subr.bf16.mxu0 0
  %451 = vmatpush1.bf16.msra.mxu0 %v327
  %452 = vmatprep.subr.bf16.mxu0 0
  %453 = vmatpush1.bf16.msra.mxu0 %v328
  %454 = vmatprep.subr.bf16.mxu0 0
  %455 = vmatpush1.bf16.msra.mxu0 %v329
  %456 = vmatprep.subr.bf16.mxu0 0
  %457 = vmatpush1.bf16.msra.mxu0 %v330
  %458 = vmatprep.subr.bf16.mxu0 0
  %459 = vmatpush1.bf16.msra.mxu0 %v331
  %460 = vmatprep.mubr.bf16.mxu0 %v141
  %461 = vmatmul.mubr.bf16.gmra.mrb[0].mxu0 %v140
  %v462 = vpop.f32.mrb[0].mxu0
  %v463 = vadd.f32 %v414, %v462
  %v464 = vpop.f32.mrb[0].mxu0
  %v465 = vpop.f32.mrb[0].mxu0
  %v466 = vadd.f32 %v417, %v465
  %v467 = vpop.f32.mrb[0].mxu0
  %468 = vmatprep.mubr.bf16.mxu0 %v146
  %469 = vmatmul.mubr.bf16.gmra.mrb[0].mxu0 %v145
  %v470 = vpop.f32.mrb[0].mxu0
  %v471 = vadd.f32 %v422, %v470
  %v472 = vpop.f32.mrb[0].mxu0
  %v473 = vpop.f32.mrb[0].mxu0
  %v474 = vadd.f32 %v425, %v473
  %v475 = vpop.f32.mrb[0].mxu0
  %476 = vdwg.mxu0
  %477 = vmatprep.subr.bf16.mxu0 0
  %478 = vmatpush1.bf16.msra.mxu0 %v332
  %479 = vmatprep.subr.bf16.mxu0 0
  %480 = vmatpush1.bf16.msra.mxu0 %v333
  %481 = vmatprep.subr.bf16.mxu0 0
  %482 = vmatpush1.bf16.msra.mxu0 %v334
  %483 = vmatprep.subr.bf16.mxu0 0
  %484 = vmatpush1.bf16.msra.mxu0 %v335
  %485 = vmatprep.subr.bf16.mxu0 0
  %486 = vmatpush1.bf16.msra.mxu0 0
  %487 = vmatprep.subr.bf16.mxu0 0
  %488 = vmatpush1.bf16.msra.mxu0 0
  %489 = vmatprep.subr.bf16.mxu0 0
  %490 = vmatpush1.bf16.msra.mxu0 0
  %491 = vmatprep.subr.bf16.mxu0 0
  %492 = vmatpush1.bf16.msra.mxu0 0
  %493 = vmatprep.subr.bf16.mxu0 0
  %494 = vmatpush1.bf16.msra.mxu0 0
  %495 = vmatprep.subr.bf16.mxu0 0
  %496 = vmatpush1.bf16.msra.mxu0 0
  %497 = vmatprep.subr.bf16.mxu0 0
  %498 = vmatpush1.bf16.msra.mxu0 0
  %499 = vmatprep.subr.bf16.mxu0 0
  %500 = vmatpush1.bf16.msra.mxu0 0
  %501 = vmatprep.subr.bf16.mxu0 0
  %502 = vmatpush1.bf16.msra.mxu0 0
  %503 = vmatprep.subr.bf16.mxu0 0
  %504 = vmatpush1.bf16.msra.mxu0 0
  %505 = vmatprep.subr.bf16.mxu0 0
  %506 = vmatpush1.bf16.msra.mxu0 0
  %507 = vmatprep.subr.bf16.mxu0 0
  %508 = vmatpush1.bf16.msra.mxu0 0
  %509 = vmatprep.mubr.bf16.mxu0 0
  %510 = vmatmul.mubr.bf16.gmra.mrb[0].mxu0 %v374
  %v511 = vpop.f32.mrb[0].mxu0
  %v512 = vadd.f32 %v463, %v511
  %v513 = vpop.f32.mrb[0].mxu0
  %v514 = vpop.f32.mrb[0].mxu0
  %v515 = vadd.f32 %v466, %v514
  %v516 = vpop.f32.mrb[0].mxu0
  %517 = vmatprep.mubr.bf16.mxu0 0
  %518 = vmatmul.mubr.bf16.gmra.mrb[0].mxu0 %v377
  %v519 = vpop.f32.mrb[0].mxu0
  %v520 = vadd.f32 %v471, %v519
  %v521 = vpop.f32.mrb[0].mxu0
  %v522 = vpop.f32.mrb[0].mxu0
  %v523 = vadd.f32 %v474, %v522
  %v524 = vpop.f32.mrb[0].mxu0
  %525 = vdwg.mxu0
  %v526 = vmax.f32 %v512, 0.0
  %v527 = vmax.f32 %v515, 0.0
  %v528 = vmax.f32 %v520, 0.0
  %v529 = vmax.f32 %v523, 0.0
  %v530 = vpack.c.bf16 %v527, %v526
  %v531 = vpack.c.bf16 %v529, %v528
  %v534 = vunpack.c.l.b16 %v530
  %v535 = vunpack.c.h.b16 %v530
  %v536 = vunpack.c.l.b16 %v531
  %v537 = vunpack.c.h.b16 %v531
  %v538 = vpack.c.b16 %v534, %v534
  %v539 = vpack.c.b16 %v535, %v535
  %v540 = vpack.c.b16 %v536, %v536
  %v541 = vpack.c.b16 %v537, %v537
  %vm546 = vcmask 519168
  %547 = vst.msk [vmem:[%s3] sm:$0xf] %vm546, %v538
  %548 = vst.msk [vmem:[%s3 + $0x4] sm:$0xf] %vm546, %v539
  %549 = vst.msk [vmem:[%s3 + $0x8] sm:$0xf] %vm546, %v540
  %vm550 = vcmask 518144
  %551 = vst.msk [vmem:[%s3 + $0xc] sm:$0x7] %vm550, %v541
  // Predicated region
  $region14: #{net_forward.6} parent=0 // pred_check
    _
  $region15: #{net_forward.6} parent=0 // pred_check_branch
    %553 = sbr.rel (0) target = $region17
  $region16: #{net_forward.6} parent=0 // pred_region
    _
  $region17: #{net_forward.6} parent=0 // pred_fallthru
    _
  // Predicated region
  $region18: #{net_forward.6} parent=0 // pred_check
    _
  $region19: #{net_forward.6} parent=0 // pred_check_branch
    %555 = sbr.rel (0) target = $region21
  $region20: #{net_forward.6} parent=0 // pred_region
    _
  $region21: #{net_forward.6} parent=0 // pred_fallthru
    _

// kernel: net_forward.7
$region0: #{net_forward.7}
  #allocation0 [shape = 'u32[]', space=smem, size = 0x4, offset = 0x4, fixed_abs, tag = 'smem constant byte address 0x4 - core index']
  #allocation1 [shape = 'u32[144,128]{1,0:T(1,128)}', space=vmem, size = 0x12000, scoped, tag = 'internal scratch']
  #allocation2 [shape = 'f32[1,1]{1,0:T(1,128)S(1)}', space=vmem, size = 0x200, scoped, tag = 'scoped memory for net_forward.7']
  %s0 = inlined_call_operand.vmem [shape: bf16[2,960], index: 0, kind: input, shape index: {}]
  %s1 = inlined_call_operand.vmem [shape: f32[2,3], index: 1, kind: input, shape index: {}]
  %s2 = inlined_call_operand.vmem [shape: bf16[960,512], index: 2, kind: input, shape index: {}]
  %s3 = inlined_call_operand.vmem [shape: f32[1,512], index: 3, kind: input, shape index: {}]
  %s4 = inlined_call_operand.vmem [shape: bf16[512,256], index: 4, kind: input, shape index: {}]
  %s5 = inlined_call_operand.vmem [shape: f32[1,256], index: 5, kind: input, shape index: {}]
  %s6 = inlined_call_operand.vmem [shape: bf16[256,259], index: 6, kind: input, shape index: {}]
  %s7 = inlined_call_operand.vmem [shape: f32[3,259], index: 7, kind: input, shape index: {}]
  %s8 = inlined_call_operand.vmem [shape: f32[1,259], index: 8, kind: input, shape index: {}]
  %s9 = inlined_call_operand.vmem [shape: bf16[259,1], index: 9, kind: input, shape index: {}]
  %s10 = inlined_call_operand.<no memory space> [shape: f32[1,1], index: 10, kind: input, shape index: {}]
  %s11 = inlined_call_operand.vmem [shape: f32[2,1], index: 11, kind: output, shape index: {}]
  %s12 = sld [smem:[#allocation0]]
  $region54: #{net_forward.7} parent=0
    _
  %s14 = ssub.s32 1, %s12
  %s15 = scalar_select 0, %s14, %s12
  %v16 = vstv %s10
  %17 = vst [vmem:[#allocation2] sm:$0x1] %v16
  // Predicated region
  $region2: #{net_forward.7} parent=0 // pred_check
    _
  $region3: #{net_forward.7} parent=0 // pred_check_branch
    %19 = sbr.rel (0) target = $region5
  $region4: #{net_forward.7} parent=0 // pred_region
    _
  $region5: #{net_forward.7} parent=0 // pred_fallthru
    _
  // Predicated region
  $region6: #{net_forward.7} parent=0 // pred_check
    _
  $region7: #{net_forward.7} parent=0 // pred_check_branch
    %21 = sbr.rel (0) target = $region9
  $region8: #{net_forward.7} parent=0 // pred_region
    _
  $region9: #{net_forward.7} parent=0 // pred_fallthru
    _
  // Predicated region
  $region10: #{net_forward.7} parent=0 // pred_check
    _
  $region11: #{net_forward.7} parent=0 // pred_check_branch
    %23 = sbr.rel (0) target = $region13
  $region12: #{net_forward.7} parent=0 // pred_region
    _
  $region13: #{net_forward.7} parent=0 // pred_fallthru
    _
  // Predicated region
  $region14: #{net_forward.7} parent=0 // pred_check
    _
  $region15: #{net_forward.7} parent=0 // pred_check_branch
    %25 = sbr.rel (0) target = $region17
  $region16: #{net_forward.7} parent=0 // pred_region
    _
  $region17: #{net_forward.7} parent=0 // pred_fallthru
    _
  // Predicated region
  $region18: #{net_forward.7} parent=0 // pred_check
    _
  $region19: #{net_forward.7} parent=0 // pred_check_branch
    %27 = sbr.rel (0) target = $region21
  $region20: #{net_forward.7} parent=0 // pred_region
    _
  $region21: #{net_forward.7} parent=0 // pred_fallthru
    _
  // Predicated region
  $region22: #{net_forward.7} parent=0 // pred_check
    _
  $region23: #{net_forward.7} parent=0 // pred_check_branch
    %29 = sbr.rel (0) target = $region25
  $region24: #{net_forward.7} parent=0 // pred_region
    _
  $region25: #{net_forward.7} parent=0 // pred_fallthru
    _
  // Predicated region
  $region26: #{net_forward.7} parent=0 // pred_check
    _
  $region27: #{net_forward.7} parent=0 // pred_check_branch
    %31 = sbr.rel (0) target = $region29
  $region28: #{net_forward.7} parent=0 // pred_region
    _
  $region29: #{net_forward.7} parent=0 // pred_fallthru
    _
  // Predicated region
  $region30: #{net_forward.7} parent=0 // pred_check
    _
  $region31: #{net_forward.7} parent=0 // pred_check_branch
    %33 = sbr.rel (0) target = $region33
  $region32: #{net_forward.7} parent=0 // pred_region
    _
  $region33: #{net_forward.7} parent=0 // pred_fallthru
    _
  // Predicated region
  $region34: #{net_forward.7} parent=0 // pred_check
    _
  $region35: #{net_forward.7} parent=0 // pred_check_branch
    %35 = sbr.rel (0) target = $region37
  $region36: #{net_forward.7} parent=0 // pred_region
    _
  $region37: #{net_forward.7} parent=0 // pred_fallthru
    _
  // Predicated region
  $region38: #{net_forward.7} parent=0 // pred_check
    _
  $region39: #{net_forward.7} parent=0 // pred_check_branch
    %37 = sbr.rel (0) target = $region41
  $region40: #{net_forward.7} parent=0 // pred_region
    _
  $region41: #{net_forward.7} parent=0 // pred_fallthru
    _
  // Predicated region
  $region42: #{net_forward.7} parent=0 // pred_check
    _
  $region43: #{net_forward.7} parent=0 // pred_check_branch
    %39 = sbr.rel (0) target = $region45
  $region44: #{net_forward.7} parent=0 // pred_region
    _
  $region45: #{net_forward.7} parent=0 // pred_fallthru
    _
  %v41 = vld [vmem:[%s0] sm:$0xff]
  %v42 = vld [vmem:[%s2] sm:$0xff]
  %v43 = vld [vmem:[%s2 + $0x8] sm:$0xff]
  %v44 = vld [vmem:[%s2 + $0x10] sm:$0xff]
  %v45 = vld [vmem:[%s2 + $0x18] sm:$0xff]
  %v46 = vld [vmem:[%s2 + $0x20] sm:$0xff]
  %v47 = vld [vmem:[%s2 + $0x28] sm:$0xff]
  %v48 = vld [vmem:[%s2 + $0x30] sm:$0xff]
  %v49 = vld [vmem:[%s2 + $0x38] sm:$0xff]
  %v50 = vld [vmem:[%s2 + $0x40] sm:$0xff]
  %v51 = vld [vmem:[%s2 + $0x48] sm:$0xff]
  %v52 = vld [vmem:[%s2 + $0x50] sm:$0xff]
  %v53 = vld [vmem:[%s2 + $0x58] sm:$0xff]
  %v54 = vld [vmem:[%s2 + $0x60] sm:$0xff]
  %v55 = vld [vmem:[%s2 + $0x68] sm:$0xff]
  %v56 = vld [vmem:[%s2 + $0x70] sm:$0xff]
  %v57 = vld [vmem:[%s2 + $0x78] sm:$0xff]
  %v58 = vld [vmem:[%s2 + $0x80] sm:$0xff]
  %v59 = vld [vmem:[%s2 + $0x88] sm:$0xff]
  %v60 = vld [vmem:[%s2 + $0x90] sm:$0xff]
  %v61 = vld [vmem:[%s2 + $0x98] sm:$0xff]
  %v62 = vld [vmem:[%s2 + $0xa0] sm:$0xff]
  %v63 = vld [vmem:[%s2 + $0xa8] sm:$0xff]
  %v64 = vld [vmem:[%s2 + $0xb0] sm:$0xff]
  %v65 = vld [vmem:[%s2 + $0xb8] sm:$0xff]
  %v66 = vld [vmem:[%s2 + $0xc0] sm:$0xff]
  %v67 = vld [vmem:[%s2 + $0xc8] sm:$0xff]
  %v68 = vld [vmem:[%s2 + $0xd0] sm:$0xff]
  %v69 = vld [vmem:[%s2 + $0xd8] sm:$0xff]
  %v70 = vld [vmem:[%s2 + $0xe0] sm:$0xff]
  %v71 = vld [vmem:[%s2 + $0xe8] sm:$0xff]
  %v72 = vld [vmem:[%s2 + $0xf0] sm:$0xff]
  %v73 = vld [vmem:[%s2 + $0xf8] sm:$0xff]
  %v74 = vld [vmem:[%s2 + $0x100] sm:$0xff]
  %v75 = vld [vmem:[%s2 + $0x108] sm:$0xff]
  %v76 = vld [vmem:[%s2 + $0x110] sm:$0xff]
  %v77 = vld [vmem:[%s2 + $0x118] sm:$0xff]
  %v78 = vld [vmem:[%s2 + $0x120] sm:$0xff]
  %v79 = vld [vmem:[%s2 + $0x128] sm:$0xff]
  %v80 = vld [vmem:[%s2 + $0x130] sm:$0xff]
  %v81 = vld [vmem:[%s2 + $0x138] sm:$0xff]
  %v82 = vld [vmem:[%s2 + $0x140] sm:$0xff]
  %v83 = vld [vmem:[%s2 + $0x148] sm:$0xff]
  %v84 = vld [vmem:[%s2 + $0x150] sm:$0xff]
  %v85 = vld [vmem:[%s2 + $0x158] sm:$0xff]
  %v86 = vld [vmem:[%s2 + $0x160] sm:$0xff]
  %v87 = vld [vmem:[%s2 + $0x168] sm:$0xff]
  %v88 = vld [vmem:[%s2 + $0x170] sm:$0xff]
  %v89 = vld [vmem:[%s2 + $0x178] sm:$0xff]
  %v90 = vld [vmem:[%s2 + $0x180] sm:$0xff]
  %v91 = vld [vmem:[%s2 + $0x188] sm:$0xff]
  %v92 = vld [vmem:[%s2 + $0x190] sm:$0xff]
  %v93 = vld [vmem:[%s2 + $0x198] sm:$0xff]
  %v94 = vld [vmem:[%s2 + $0x1a0] sm:$0xff]
  %v95 = vld [vmem:[%s2 + $0x1a8] sm:$0xff]
  %v96 = vld [vmem:[%s2 + $0x1b0] sm:$0xff]
  %v97 = vld [vmem:[%s2 + $0x1b8] sm:$0xff]
  %v98 = vld [vmem:[%s2 + $0x1c0] sm:$0xff]
  %v99 = vld [vmem:[%s2 + $0x1c8] sm:$0xff]
  %v100 = vld [vmem:[%s2 + $0x1d0] sm:$0xff]
  %v101 = vld [vmem:[%s2 + $0x1d8] sm:$0xff]
  %v102 = vld [vmem:[%s2 + $0x1e0] sm:$0xff]
  %v103 = vld [vmem:[%s2 + $0x1e8] sm:$0xff]
  %v104 = vld [vmem:[%s2 + $0x1f0] sm:$0xff]
  %v105 = vld [vmem:[%s2 + $0x1f8] sm:$0xff]
  %v106 = vld [vmem:[%s2 + $0x200] sm:$0xff]
  %v107 = vld [vmem:[%s2 + $0x208] sm:$0xff]
  %v108 = vld [vmem:[%s2 + $0x210] sm:$0xff]
  %v109 = vld [vmem:[%s2 + $0x218] sm:$0xff]
  %v110 = vld [vmem:[%s2 + $0x220] sm:$0xff]
  %v111 = vld [vmem:[%s2 + $0x228] sm:$0xff]
  %v112 = vld [vmem:[%s2 + $0x230] sm:$0xff]
  %v113 = vld [vmem:[%s2 + $0x238] sm:$0xff]
  %v114 = vld [vmem:[%s2 + $0x240] sm:$0xff]
  %v115 = vld [vmem:[%s2 + $0x248] sm:$0xff]
  %v116 = vld [vmem:[%s2 + $0x250] sm:$0xff]
  %v117 = vld [vmem:[%s2 + $0x258] sm:$0xff]
  %v118 = vld [vmem:[%s2 + $0x260] sm:$0xff]
  %v119 = vld [vmem:[%s2 + $0x268] sm:$0xff]
  %v120 = vld [vmem:[%s2 + $0x270] sm:$0xff]
  %v121 = vld [vmem:[%s2 + $0x278] sm:$0xff]
  %v122 = vld [vmem:[%s2 + $0x280] sm:$0xff]
  %v123 = vld [vmem:[%s2 + $0x288] sm:$0xff]
  %v124 = vld [vmem:[%s2 + $0x290] sm:$0xff]
  %v125 = vld [vmem:[%s2 + $0x298] sm:$0xff]
  %v126 = vld [vmem:[%s2 + $0x2a0] sm:$0xff]
  %v127 = vld [vmem:[%s2 + $0x2a8] sm:$0xff]
  %v128 = vld [vmem:[%s2 + $0x2b0] sm:$0xff]
  %v129 = vld [vmem:[%s2 + $0x2b8] sm:$0xff]
  %v130 = vld [vmem:[%s2 + $0x2c0] sm:$0xff]
  %v131 = vld [vmem:[%s2 + $0x2c8] sm:$0xff]
  %v132 = vld [vmem:[%s2 + $0x2d0] sm:$0xff]
  %v133 = vld [vmem:[%s2 + $0x2d8] sm:$0xff]
  %v134 = vld [vmem:[%s2 + $0x2e0] sm:$0xff]
  %v135 = vld [vmem:[%s2 + $0x2e8] sm:$0xff]
  %v136 = vld [vmem:[%s2 + $0x2f0] sm:$0xff]
  %v137 = vld [vmem:[%s2 + $0x2f8] sm:$0xff]
  %v138 = vld [vmem:[%s2 + $0x300] sm:$0xff]
  %v139 = vld [vmem:[%s2 + $0x308] sm:$0xff]
  %v140 = vld [vmem:[%s2 + $0x310] sm:$0xff]
  %v141 = vld [vmem:[%s2 + $0x318] sm:$0xff]
  %v142 = vld [vmem:[%s2 + $0x320] sm:$0xff]
  %v143 = vld [vmem:[%s2 + $0x328] sm:$0xff]
  %v144 = vld [vmem:[%s2 + $0x330] sm:$0xff]
  %v145 = vld [vmem:[%s2 + $0x338] sm:$0xff]
  %v146 = vld [vmem:[%s2 + $0x340] sm:$0xff]
  %v147 = vld [vmem:[%s2 + $0x348] sm:$0xff]
  %v148 = vld [vmem:[%s2 + $0x350] sm:$0xff]
  %v149 = vld [vmem:[%s2 + $0x358] sm:$0xff]
  %v150 = vld [vmem:[%s2 + $0x360] sm:$0xff]
  %v151 = vld [vmem:[%s2 + $0x368] sm:$0xff]
  %v152 = vld [vmem:[%s2 + $0x370] sm:$0xff]
  %v153 = vld [vmem:[%s2 + $0x378] sm:$0xff]
  %v154 = vld [vmem:[%s2 + $0x380] sm:$0xff]
  %v155 = vld [vmem:[%s2 + $0x388] sm:$0xff]
  %v156 = vld [vmem:[%s2 + $0x390] sm:$0xff]
  %v157 = vld [vmem:[%s2 + $0x398] sm:$0xff]
  %v158 = vld [vmem:[%s2 + $0x3a0] sm:$0xff]
  %v159 = vld [vmem:[%s2 + $0x3a8] sm:$0xff]
  %v160 = vld [vmem:[%s2 + $0x3b0] sm:$0xff]
  %v161 = vld [vmem:[%s2 + $0x3b8] sm:$0xff]
  %v162 = vld [vmem:[%s2 + $0x3c0] sm:$0xff]
  %v163 = vld [vmem:[%s2 + $0x3c8] sm:$0xff]
  %v164 = vld [vmem:[%s2 + $0x3d0] sm:$0xff]
  %v165 = vld [vmem:[%s2 + $0x3d8] sm:$0xff]
  %v166 = vld [vmem:[%s2 + $0x3e0] sm:$0xff]
  %v167 = vld [vmem:[%s2 + $0x3e8] sm:$0xff]
  %v168 = vld [vmem:[%s2 + $0x3f0] sm:$0xff]
  %v169 = vld [vmem:[%s2 + $0x3f8] sm:$0xff]
  %v170 = vld [vmem:[%s2 + $0x400] sm:$0xff]
  %v171 = vld [vmem:[%s2 + $0x408] sm:$0xff]
  %v172 = vld [vmem:[%s2 + $0x410] sm:$0xff]
  %v173 = vld [vmem:[%s2 + $0x418] sm:$0xff]
  %v174 = vld [vmem:[%s2 + $0x420] sm:$0xff]
  %v175 = vld [vmem:[%s2 + $0x428] sm:$0xff]
  %v176 = vld [vmem:[%s2 + $0x430] sm:$0xff]
  %v177 = vld [vmem:[%s2 + $0x438] sm:$0xff]
  %v178 = vld [vmem:[%s2 + $0x440] sm:$0xff]
  %v179 = vld [vmem:[%s2 + $0x448] sm:$0xff]
  %v180 = vld [vmem:[%s2 + $0x450] sm:$0xff]
  %v181 = vld [vmem:[%s2 + $0x458] sm:$0xff]
  %v182 = vld [vmem:[%s2 + $0x460] sm:$0xff]
  %v183 = vld [vmem:[%s2 + $0x468] sm:$0xff]
  %v184 = vld [vmem:[%s2 + $0x470] sm:$0xff]
  %v185 = vld [vmem:[%s2 + $0x478] sm:$0xff]
  %v186 = vld [vmem:[%s2 + $0x480] sm:$0xff]
  %v187 = vld [vmem:[%s2 + $0x488] sm:$0xff]
  %v188 = vld [vmem:[%s2 + $0x490] sm:$0xff]
  %v189 = vld [vmem:[%s2 + $0x498] sm:$0xff]
  %v190 = vld [vmem:[%s2 + $0x4a0] sm:$0xff]
  %v191 = vld [vmem:[%s2 + $0x4a8] sm:$0xff]
  %v192 = vld [vmem:[%s2 + $0x4b0] sm:$0xff]
  %v193 = vld [vmem:[%s2 + $0x4b8] sm:$0xff]
  %v194 = vld [vmem:[%s2 + $0x4c0] sm:$0xff]
  %v195 = vld [vmem:[%s2 + $0x4c8] sm:$0xff]
  %v196 = vld [vmem:[%s2 + $0x4d0] sm:$0xff]
  %v197 = vld [vmem:[%s2 + $0x4d8] sm:$0xff]
  %v198 = vld [vmem:[%s2 + $0x4e0] sm:$0xff]
  %v199 = vld [vmem:[%s2 + $0x4e8] sm:$0xff]
  %v200 = vld [vmem:[%s2 + $0x4f0] sm:$0xff]
  %v201 = vld [vmem:[%s2 + $0x4f8] sm:$0xff]
  %v202 = vld [vmem:[%s2 + $0x500] sm:$0xff]
  %v203 = vld [vmem:[%s2 + $0x508] sm:$0xff]
  %v204 = vld [vmem:[%s2 + $0x510] sm:$0xff]
  %v205 = vld [vmem:[%s2 + $0x518] sm:$0xff]
  %v206 = vld [vmem:[%s2 + $0x520] sm:$0xff]
  %v207 = vld [vmem:[%s2 + $0x528] sm:$0xff]
  %v208 = vld [vmem:[%s2 + $0x530] sm:$0xff]
  %v209 = vld [vmem:[%s2 + $0x538] sm:$0xff]
  %v210 = vld [vmem:[%s2 + $0x540] sm:$0xff]
  %v211 = vld [vmem:[%s2 + $0x548] sm:$0xff]
  %v212 = vld [vmem:[%s2 + $0x550] sm:$0xff]
  %v213 = vld [vmem:[%s2 + $0x558] sm:$0xff]
  %v214 = vld [vmem:[%s2 + $0x560] sm:$0xff]
  %v215 = vld [vmem:[%s2 + $0x568] sm:$0xff]
  %v216 = vld [vmem:[%s2 + $0x570] sm:$0xff]
  %v217 = vld [vmem:[%s2 + $0x578] sm:$0xff]
  %v218 = vld [vmem:[%s2 + $0x580] sm:$0xff]
  %v219 = vld [vmem:[%s2 + $0x588] sm:$0xff]
  %v220 = vld [vmem:[%s2 + $0x590] sm:$0xff]
  %v221 = vld [vmem:[%s2 + $0x598] sm:$0xff]
  %v222 = vld [vmem:[%s2 + $0x5a0] sm:$0xff]
  %v223 = vld [vmem:[%s2 + $0x5a8] sm:$0xff]
  %v224 = vld [vmem:[%s2 + $0x5b0] sm:$0xff]
  %v225 = vld [vmem:[%s2 + $0x5b8] sm:$0xff]
  %v226 = vld [vmem:[%s2 + $0x5c0] sm:$0xff]
  %v227 = vld [vmem:[%s2 + $0x5c8] sm:$0xff]
  %v228 = vld [vmem:[%s2 + $0x5d0] sm:$0xff]
  %v229 = vld [vmem:[%s2 + $0x5d8] sm:$0xff]
  %v230 = vld [vmem:[%s2 + $0x5e0] sm:$0xff]
  %v231 = vld [vmem:[%s2 + $0x5e8] sm:$0xff]
  %v232 = vld [vmem:[%s2 + $0x5f0] sm:$0xff]
  %v233 = vld [vmem:[%s2 + $0x5f8] sm:$0xff]
  %v234 = vld [vmem:[%s2 + $0x600] sm:$0xff]
  %v235 = vld [vmem:[%s2 + $0x608] sm:$0xff]
  %v236 = vld [vmem:[%s2 + $0x610] sm:$0xff]
  %v237 = vld [vmem:[%s2 + $0x618] sm:$0xff]
  %v238 = vld [vmem:[%s2 + $0x620] sm:$0xff]
  %v239 = vld [vmem:[%s2 + $0x628] sm:$0xff]
  %v240 = vld [vmem:[%s2 + $0x630] sm:$0xff]
  %v241 = vld [vmem:[%s2 + $0x638] sm:$0xff]
  %v242 = vld [vmem:[%s2 + $0x640] sm:$0xff]
  %v243 = vld [vmem:[%s2 + $0x648] sm:$0xff]
  %v244 = vld [vmem:[%s2 + $0x650] sm:$0xff]
  %v245 = vld [vmem:[%s2 + $0x658] sm:$0xff]
  %v246 = vld [vmem:[%s2 + $0x660] sm:$0xff]
  %v247 = vld [vmem:[%s2 + $0x668] sm:$0xff]
  %v248 = vld [vmem:[%s2 + $0x670] sm:$0xff]
  %v249 = vld [vmem:[%s2 + $0x678] sm:$0xff]
  %v250 = vld [vmem:[%s2 + $0x680] sm:$0xff]
  %v251 = vld [vmem:[%s2 + $0x688] sm:$0xff]
  %v252 = vld [vmem:[%s2 + $0x690] sm:$0xff]
  %v253 = vld [vmem:[%s2 + $0x698] sm:$0xff]
  %v254 = vld [vmem:[%s2 + $0x6a0] sm:$0xff]
  %v255 = vld [vmem:[%s2 + $0x6a8] sm:$0xff]
  %v256 = vld [vmem:[%s2 + $0x6b0] sm:$0xff]
  %v257 = vld [vmem:[%s2 + $0x6b8] sm:$0xff]
  %v258 = vld [vmem:[%s2 + $0x6c0] sm:$0xff]
  %v259 = vld [vmem:[%s2 + $0x6c8] sm:$0xff]
  %v260 = vld [vmem:[%s2 + $0x6d0] sm:$0xff]
  %v261 = vld [vmem:[%s2 + $0x6d8] sm:$0xff]
  %v262 = vld [vmem:[%s2 + $0x6e0] sm:$0xff]
  %v263 = vld [vmem:[%s2 + $0x6e8] sm:$0xff]
  %v264 = vld [vmem:[%s2 + $0x6f0] sm:$0xff]
  %v265 = vld [vmem:[%s2 + $0x6f8] sm:$0xff]
  %v266 = vld [vmem:[%s2 + $0x700] sm:$0xff]
  %v267 = vld [vmem:[%s2 + $0x708] sm:$0xff]
  %v268 = vld [vmem:[%s2 + $0x710] sm:$0xff]
  %v269 = vld [vmem:[%s2 + $0x718] sm:$0xff]
  %v270 = vld [vmem:[%s2 + $0x720] sm:$0xff]
  %v271 = vld [vmem:[%s2 + $0x728] sm:$0xff]
  %v272 = vld [vmem:[%s2 + $0x730] sm:$0xff]
  %v273 = vld [vmem:[%s2 + $0x738] sm:$0xff]
  %v274 = vld [vmem:[%s2 + $0x740] sm:$0xff]
  %v275 = vld [vmem:[%s2 + $0x748] sm:$0xff]
  %v276 = vld [vmem:[%s2 + $0x750] sm:$0xff]
  %v277 = vld [vmem:[%s2 + $0x758] sm:$0xff]
  %v278 = vld [vmem:[%s2 + $0x760] sm:$0xff]
  %v279 = vld [vmem:[%s2 + $0x768] sm:$0xff]
  %v280 = vld [vmem:[%s2 + $0x770] sm:$0xff]
  %v281 = vld [vmem:[%s2 + $0x778] sm:$0xff]
  %v282 = vld [vmem:[%s3] sm:$0xf]
  %v284 = vlaneseq
  %v285 = vshrl.u32 %v284, 7
  %v286 = vsub.s32 0, %v285
  %v287 = vrot.slane %v282, %v286
  %v288 = vlaneseq
  %v289 = vshrl.u32 %v288, 7
  %v290 = vsub.s32 1, %v289
  %v291 = vrot.slane %v282, %v290
  %v292 = vlaneseq
  %v293 = vshrl.u32 %v292, 7
  %v294 = vsub.s32 2, %v293
  %v295 = vrot.slane %v282, %v294
  %v296 = vlaneseq
  %v297 = vshrl.u32 %v296, 7
  %v298 = vsub.s32 3, %v297
  %v299 = vrot.slane %v282, %v298
  %v305 = vcombine.high %v41, %v41
  %v307 = vunpack.c.l.s4 1966171168
  %v308 = vunpack.c.0.s8 %v307
  %v309 = vlaneseq
  %v310 = vshrl.u32 %v309, 7
  %v311 = vsub.s32 %v308, %v310
  %v312 = vrot.slane %v41, %v311
  %v314 = vunpack.c.l.s4 1966171168
  %v315 = vunpack.c.0.s8 %v314
  %v316 = vlaneseq
  %v317 = vshrl.u32 %v316, 7
  %v318 = vsub.s32 %v315, %v317
  %v319 = vrot.slane %v305, %v318
  %v320 = vcombine.high %v312, %v312
  %v321 = vcombine.high %v319, %v319
  %v323 = vunpack.c.l.s4 1966171168
  %v324 = vunpack.c.0.s8 %v323
  %v325 = vlaneseq
  %v326 = vshrl.u32 %v325, 7
  %v327 = vsub.s32 %v324, %v326
  %v328 = vrot.slane %v312, %v327
  %v330 = vunpack.c.l.s4 1966171168
  %v331 = vunpack.c.0.s8 %v330
  %v332 = vlaneseq
  %v333 = vshrl.u32 %v332, 7
  %v334 = vsub.s32 %v331, %v333
  %v335 = vrot.slane %v319, %v334
  %v337 = vunpack.c.l.s4 1966171168
  %v338 = vunpack.c.0.s8 %v337
  %v339 = vlaneseq
  %v340 = vshrl.u32 %v339, 7
  %v341 = vsub.s32 %v338, %v340
  %v342 = vrot.slane %v320, %v341
  %v344 = vunpack.c.l.s4 1966171168
  %v345 = vunpack.c.0.s8 %v344
  %v346 = vlaneseq
  %v347 = vshrl.u32 %v346, 7
  %v348 = vsub.s32 %v345, %v347
  %v349 = vrot.slane %v321, %v348
  %v350 = vcombine.high %v328, %v328
  %v351 = vcombine.high %v335, %v335
  %v352 = vcombine.high %v342, %v342
  %v353 = vcombine.high %v349, %v349
  %v601 = vunpack.c.l.b16 %v42
  %v602 = vunpack.c.h.b16 %v42
  %v603 = vunpack.c.l.b16 %v43
  %v604 = vunpack.c.h.b16 %v43
  %v605 = vunpack.c.l.b16 %v44
  %v606 = vunpack.c.h.b16 %v44
  %v607 = vunpack.c.l.b16 %v45
  %v608 = vunpack.c.h.b16 %v45
  %v609 = vunpack.c.l.b16 %v46
  %v610 = vunpack.c.h.b16 %v46
  %v611 = vunpack.c.l.b16 %v47
  %v612 = vunpack.c.h.b16 %v47
  %v613 = vunpack.c.l.b16 %v48
  %v614 = vunpack.c.h.b16 %v48
  %v615 = vunpack.c.l.b16 %v49
  %v616 = vunpack.c.h.b16 %v49
  %v617 = vunpack.c.l.b16 %v50
  %v618 = vunpack.c.h.b16 %v50
  %v619 = vunpack.c.l.b16 %v51
  %v620 = vunpack.c.h.b16 %v51
  %v621 = vunpack.c.l.b16 %v52
  %v622 = vunpack.c.h.b16 %v52
  %v623 = vunpack.c.l.b16 %v53
  %v624 = vunpack.c.h.b16 %v53
  %v625 = vunpack.c.l.b16 %v54
  %v626 = vunpack.c.h.b16 %v54
  %v627 = vunpack.c.l.b16 %v55
  %v628 = vunpack.c.h.b16 %v55
  %v629 = vunpack.c.l.b16 %v56
  %v630 = vunpack.c.h.b16 %v56
  %v631 = vunpack.c.l.b16 %v57
  %v632 = vunpack.c.h.b16 %v57
  %v633 = vunpack.c.l.b16 %v58
  %v634 = vunpack.c.h.b16 %v58
  %v635 = vunpack.c.l.b16 %v59
  %v636 = vunpack.c.h.b16 %v59
  %v637 = vunpack.c.l.b16 %v60
  %v638 = vunpack.c.h.b16 %v60
  %v639 = vunpack.c.l.b16 %v61
  %v640 = vunpack.c.h.b16 %v61
  %v641 = vunpack.c.l.b16 %v62
  %v642 = vunpack.c.h.b16 %v62
  %v643 = vunpack.c.l.b16 %v63
  %v644 = vunpack.c.h.b16 %v63
  %v645 = vunpack.c.l.b16 %v64
  %v646 = vunpack.c.h.b16 %v64
  %v647 = vunpack.c.l.b16 %v65
  %v648 = vunpack.c.h.b16 %v65
  %v649 = vunpack.c.l.b16 %v66
  %v650 = vunpack.c.h.b16 %v66
  %v651 = vunpack.c.l.b16 %v67
  %v652 = vunpack.c.h.b16 %v67
  %v653 = vunpack.c.l.b16 %v68
  %v654 = vunpack.c.h.b16 %v68
  %v655 = vunpack.c.l.b16 %v69
  %v656 = vunpack.c.h.b16 %v69
  %v657 = vunpack.c.l.b16 %v70
  %v658 = vunpack.c.h.b16 %v70
  %v659 = vunpack.c.l.b16 %v71
  %v660 = vunpack.c.h.b16 %v71
  %v661 = vunpack.c.l.b16 %v72
  %v662 = vunpack.c.h.b16 %v72
  %v663 = vunpack.c.l.b16 %v73
  %v664 = vunpack.c.h.b16 %v73
  %v665 = vunpack.c.l.b16 %v74
  %v666 = vunpack.c.h.b16 %v74
  %v667 = vunpack.c.l.b16 %v75
  %v668 = vunpack.c.h.b16 %v75
  %v669 = vunpack.c.l.b16 %v76
  %v670 = vunpack.c.h.b16 %v76
  %v671 = vunpack.c.l.b16 %v77
  %v672 = vunpack.c.h.b16 %v77
  %v673 = vunpack.c.l.b16 %v78
  %v674 = vunpack.c.h.b16 %v78
  %v675 = vunpack.c.l.b16 %v79
  %v676 = vunpack.c.h.b16 %v79
  %v677 = vunpack.c.l.b16 %v80
  %v678 = vunpack.c.h.b16 %v80
  %v679 = vunpack.c.l.b16 %v81
  %v680 = vunpack.c.h.b16 %v81
  %v681 = vunpack.c.l.b16 %v82
  %v682 = vunpack.c.h.b16 %v82
  %v683 = vunpack.c.l.b16 %v83
  %v684 = vunpack.c.h.b16 %v83
  %v685 = vunpack.c.l.b16 %v84
  %v686 = vunpack.c.h.b16 %v84
  %v687 = vunpack.c.l.b16 %v85
  %v688 = vunpack.c.h.b16 %v85
  %v689 = vunpack.c.l.b16 %v86
  %v690 = vunpack.c.h.b16 %v86
  %v691 = vunpack.c.l.b16 %v87
  %v692 = vunpack.c.h.b16 %v87
  %v693 = vunpack.c.l.b16 %v88
  %v694 = vunpack.c.h.b16 %v88
  %v695 = vunpack.c.l.b16 %v89
  %v696 = vunpack.c.h.b16 %v89
  %v697 = vunpack.c.l.b16 %v90
  %v698 = vunpack.c.h.b16 %v90
  %v699 = vunpack.c.l.b16 %v91
  %v700 = vunpack.c.h.b16 %v91
  %v701 = vunpack.c.l.b16 %v92
  %v702 = vunpack.c.h.b16 %v92
  %v703 = vunpack.c.l.b16 %v93
  %v704 = vunpack.c.h.b16 %v93
  %v705 = vunpack.c.l.b16 %v94
  %v706 = vunpack.c.h.b16 %v94
  %v707 = vunpack.c.l.b16 %v95
  %v708 = vunpack.c.h.b16 %v95
  %v709 = vunpack.c.l.b16 %v96
  %v710 = vunpack.c.h.b16 %v96
  %v711 = vunpack.c.l.b16 %v97
  %v712 = vunpack.c.h.b16 %v97
  %v713 = vunpack.c.l.b16 %v98
  %v714 = vunpack.c.h.b16 %v98
  %v715 = vunpack.c.l.b16 %v99
  %v716 = vunpack.c.h.b16 %v99
  %v717 = vunpack.c.l.b16 %v100
  %v718 = vunpack.c.h.b16 %v100
  %v719 = vunpack.c.l.b16 %v101
  %v720 = vunpack.c.h.b16 %v101
  %v721 = vunpack.c.l.b16 %v102
  %v722 = vunpack.c.h.b16 %v102
  %v723 = vunpack.c.l.b16 %v103
  %v724 = vunpack.c.h.b16 %v103
  %v725 = vunpack.c.l.b16 %v104
  %v726 = vunpack.c.h.b16 %v104
  %v727 = vunpack.c.l.b16 %v105
  %v728 = vunpack.c.h.b16 %v105
  %v729 = vunpack.c.l.b16 %v106
  %v730 = vunpack.c.h.b16 %v106
  %v731 = vunpack.c.l.b16 %v107
  %v732 = vunpack.c.h.b16 %v107
  %v733 = vunpack.c.l.b16 %v108
  %v734 = vunpack.c.h.b16 %v108
  %v735 = vunpack.c.l.b16 %v109
  %v736 = vunpack.c.h.b16 %v109
  %v737 = vunpack.c.l.b16 %v110
  %v738 = vunpack.c.h.b16 %v110
  %v739 = vunpack.c.l.b16 %v111
  %v740 = vunpack.c.h.b16 %v111
  %v741 = vunpack.c.l.b16 %v112
  %v742 = vunpack.c.h.b16 %v112
  %v743 = vunpack.c.l.b16 %v113
  %v744 = vunpack.c.h.b16 %v113
  %v745 = vunpack.c.l.b16 %v114
  %v746 = vunpack.c.h.b16 %v114
  %v747 = vunpack.c.l.b16 %v115
  %v748 = vunpack.c.h.b16 %v115
  %v749 = vunpack.c.l.b16 %v116
  %v750 = vunpack.c.h.b16 %v116
  %v751 = vunpack.c.l.b16 %v117
  %v752 = vunpack.c.h.b16 %v117
  %v753 = vunpack.c.l.b16 %v118
  %v754 = vunpack.c.h.b16 %v118
  %v755 = vunpack.c.l.b16 %v119
  %v756 = vunpack.c.h.b16 %v119
  %v757 = vunpack.c.l.b16 %v120
  %v758 = vunpack.c.h.b16 %v120
  %v759 = vunpack.c.l.b16 %v121
  %v760 = vunpack.c.h.b16 %v121
  %v761 = vunpack.c.l.b16 %v122
  %v762 = vunpack.c.h.b16 %v122
  %v763 = vunpack.c.l.b16 %v123
  %v764 = vunpack.c.h.b16 %v123
  %v765 = vunpack.c.l.b16 %v124
  %v766 = vunpack.c.h.b16 %v124
  %v767 = vunpack.c.l.b16 %v125
  %v768 = vunpack.c.h.b16 %v125
  %v769 = vunpack.c.l.b16 %v126
  %v770 = vunpack.c.h.b16 %v126
  %v771 = vunpack.c.l.b16 %v127
  %v772 = vunpack.c.h.b16 %v127
  %v773 = vunpack.c.l.b16 %v128
  %v774 = vunpack.c.h.b16 %v128
  %v775 = vunpack.c.l.b16 %v129
  %v776 = vunpack.c.h.b16 %v129
  %v777 = vunpack.c.l.b16 %v130
  %v778 = vunpack.c.h.b16 %v130
  %v779 = vunpack.c.l.b16 %v131
  %v780 = vunpack.c.h.b16 %v131
  %v781 = vunpack.c.l.b16 %v132
  %v782 = vunpack.c.h.b16 %v132
  %v783 = vunpack.c.l.b16 %v133
  %v784 = vunpack.c.h.b16 %v133
  %v785 = vunpack.c.l.b16 %v134
  %v786 = vunpack.c.h.b16 %v134
  %v787 = vunpack.c.l.b16 %v135
  %v788 = vunpack.c.h.b16 %v135
  %v789 = vunpack.c.l.b16 %v136
  %v790 = vunpack.c.h.b16 %v136
  %v791 = vunpack.c.l.b16 %v137
  %v792 = vunpack.c.h.b16 %v137
  %v793 = vunpack.c.l.b16 %v138
  %v794 = vunpack.c.h.b16 %v138
  %v795 = vunpack.c.l.b16 %v139
  %v796 = vunpack.c.h.b16 %v139
  %v797 = vunpack.c.l.b16 %v140
  %v798 = vunpack.c.h.b16 %v140
  %v799 = vunpack.c.l.b16 %v141
  %v800 = vunpack.c.h.b16 %v141
  %v801 = vunpack.c.l.b16 %v142
  %v802 = vunpack.c.h.b16 %v142
  %v803 = vunpack.c.l.b16 %v143
  %v804 = vunpack.c.h.b16 %v143
  %v805 = vunpack.c.l.b16 %v144
  %v806 = vunpack.c.h.b16 %v144
  %v807 = vunpack.c.l.b16 %v145
  %v808 = vunpack.c.h.b16 %v145
  %v809 = vunpack.c.l.b16 %v146
  %v810 = vunpack.c.h.b16 %v146
  %v811 = vunpack.c.l.b16 %v147
  %v812 = vunpack.c.h.b16 %v147
  %v813 = vunpack.c.l.b16 %v148
  %v814 = vunpack.c.h.b16 %v148
  %v815 = vunpack.c.l.b16 %v149
  %v816 = vunpack.c.h.b16 %v149
  %v817 = vunpack.c.l.b16 %v150
  %v818 = vunpack.c.h.b16 %v150
  %v819 = vunpack.c.l.b16 %v151
  %v820 = vunpack.c.h.b16 %v151
  %v821 = vunpack.c.l.b16 %v152
  %v822 = vunpack.c.h.b16 %v152
  %v823 = vunpack.c.l.b16 %v153
  %v824 = vunpack.c.h.b16 %v153
  %v825 = vunpack.c.l.b16 %v154
  %v826 = vunpack.c.h.b16 %v154
  %v827 = vunpack.c.l.b16 %v155
  %v828 = vunpack.c.h.b16 %v155
  %v829 = vunpack.c.l.b16 %v156
  %v830 = vunpack.c.h.b16 %v156
  %v831 = vunpack.c.l.b16 %v157
  %v832 = vunpack.c.h.b16 %v157
  %v833 = vunpack.c.l.b16 %v158
  %v834 = vunpack.c.h.b16 %v158
  %v835 = vunpack.c.l.b16 %v159
  %v836 = vunpack.c.h.b16 %v159
  %v837 = vunpack.c.l.b16 %v160
  %v838 = vunpack.c.h.b16 %v160
  %v839 = vunpack.c.l.b16 %v161
  %v840 = vunpack.c.h.b16 %v161
  %v841 = vunpack.c.l.b16 %v162
  %v842 = vunpack.c.h.b16 %v162
  %v843 = vunpack.c.l.b16 %v163
  %v844 = vunpack.c.h.b16 %v163
  %v845 = vunpack.c.l.b16 %v164
  %v846 = vunpack.c.h.b16 %v164
  %v847 = vunpack.c.l.b16 %v165
  %v848 = vunpack.c.h.b16 %v165
  %v849 = vunpack.c.l.b16 %v166
  %v850 = vunpack.c.h.b16 %v166
  %v851 = vunpack.c.l.b16 %v167
  %v852 = vunpack.c.h.b16 %v167
  %v853 = vunpack.c.l.b16 %v168
  %v854 = vunpack.c.h.b16 %v168
  %v855 = vunpack.c.l.b16 %v169
  %v856 = vunpack.c.h.b16 %v169
  %v857 = vunpack.c.l.b16 %v170
  %v858 = vunpack.c.h.b16 %v170
  %v859 = vunpack.c.l.b16 %v171
  %v860 = vunpack.c.h.b16 %v171
  %v861 = vunpack.c.l.b16 %v172
  %v862 = vunpack.c.h.b16 %v172
  %v863 = vunpack.c.l.b16 %v173
  %v864 = vunpack.c.h.b16 %v173
  %v865 = vunpack.c.l.b16 %v174
  %v866 = vunpack.c.h.b16 %v174
  %v867 = vunpack.c.l.b16 %v175
  %v868 = vunpack.c.h.b16 %v175
  %v869 = vunpack.c.l.b16 %v176
  %v870 = vunpack.c.h.b16 %v176
  %v871 = vunpack.c.l.b16 %v177
  %v872 = vunpack.c.h.b16 %v177
  %v873 = vunpack.c.l.b16 %v178
  %v874 = vunpack.c.h.b16 %v178
  %v875 = vunpack.c.l.b16 %v179
  %v876 = vunpack.c.h.b16 %v179
  %v877 = vunpack.c.l.b16 %v180
  %v878 = vunpack.c.h.b16 %v180
  %v879 = vunpack.c.l.b16 %v181
  %v880 = vunpack.c.h.b16 %v181
  %v881 = vunpack.c.l.b16 %v182
  %v882 = vunpack.c.h.b16 %v182
  %v883 = vunpack.c.l.b16 %v183
  %v884 = vunpack.c.h.b16 %v183
  %v885 = vunpack.c.l.b16 %v184
  %v886 = vunpack.c.h.b16 %v184
  %v887 = vunpack.c.l.b16 %v185
  %v888 = vunpack.c.h.b16 %v185
  %v889 = vunpack.c.l.b16 %v186
  %v890 = vunpack.c.h.b16 %v186
  %v891 = vunpack.c.l.b16 %v187
  %v892 = vunpack.c.h.b16 %v187
  %v893 = vunpack.c.l.b16 %v188
  %v894 = vunpack.c.h.b16 %v188
  %v895 = vunpack.c.l.b16 %v189
  %v896 = vunpack.c.h.b16 %v189
  %v897 = vunpack.c.l.b16 %v190
  %v898 = vunpack.c.h.b16 %v190
  %v899 = vunpack.c.l.b16 %v191
  %v900 = vunpack.c.h.b16 %v191
  %v901 = vunpack.c.l.b16 %v192
  %v902 = vunpack.c.h.b16 %v192
  %v903 = vunpack.c.l.b16 %v193
  %v904 = vunpack.c.h.b16 %v193
  %v905 = vunpack.c.l.b16 %v194
  %v906 = vunpack.c.h.b16 %v194
  %v907 = vunpack.c.l.b16 %v195
  %v908 = vunpack.c.h.b16 %v195
  %v909 = vunpack.c.l.b16 %v196
  %v910 = vunpack.c.h.b16 %v196
  %v911 = vunpack.c.l.b16 %v197
  %v912 = vunpack.c.h.b16 %v197
  %v913 = vunpack.c.l.b16 %v198
  %v914 = vunpack.c.h.b16 %v198
  %v915 = vunpack.c.l.b16 %v199
  %v916 = vunpack.c.h.b16 %v199
  %v917 = vunpack.c.l.b16 %v200
  %v918 = vunpack.c.h.b16 %v200
  %v919 = vunpack.c.l.b16 %v201
  %v920 = vunpack.c.h.b16 %v201
  %v921 = vunpack.c.l.b16 %v202
  %v922 = vunpack.c.h.b16 %v202
  %v923 = vunpack.c.l.b16 %v203
  %v924 = vunpack.c.h.b16 %v203
  %v925 = vunpack.c.l.b16 %v204
  %v926 = vunpack.c.h.b16 %v204
  %v927 = vunpack.c.l.b16 %v205
  %v928 = vunpack.c.h.b16 %v205
  %v929 = vunpack.c.l.b16 %v206
  %v930 = vunpack.c.h.b16 %v206
  %v931 = vunpack.c.l.b16 %v207
  %v932 = vunpack.c.h.b16 %v207
  %v933 = vunpack.c.l.b16 %v208
  %v934 = vunpack.c.h.b16 %v208
  %v935 = vunpack.c.l.b16 %v209
  %v936 = vunpack.c.h.b16 %v209
  %v937 = vunpack.c.l.b16 %v210
  %v938 = vunpack.c.h.b16 %v210
  %v939 = vunpack.c.l.b16 %v211
  %v940 = vunpack.c.h.b16 %v211
  %v941 = vunpack.c.l.b16 %v212
  %v942 = vunpack.c.h.b16 %v212
  %v943 = vunpack.c.l.b16 %v213
  %v944 = vunpack.c.h.b16 %v213
  %v945 = vunpack.c.l.b16 %v214
  %v946 = vunpack.c.h.b16 %v214
  %v947 = vunpack.c.l.b16 %v215
  %v948 = vunpack.c.h.b16 %v215
  %v949 = vunpack.c.l.b16 %v216
  %v950 = vunpack.c.h.b16 %v216
  %v951 = vunpack.c.l.b16 %v217
  %v952 = vunpack.c.h.b16 %v217
  %v953 = vunpack.c.l.b16 %v218
  %v954 = vunpack.c.h.b16 %v218
  %v955 = vunpack.c.l.b16 %v219
  %v956 = vunpack.c.h.b16 %v219
  %v957 = vunpack.c.l.b16 %v220
  %v958 = vunpack.c.h.b16 %v220
  %v959 = vunpack.c.l.b16 %v221
  %v960 = vunpack.c.h.b16 %v221
  %v961 = vunpack.c.l.b16 %v222
  %v962 = vunpack.c.h.b16 %v222
  %v963 = vunpack.c.l.b16 %v223
  %v964 = vunpack.c.h.b16 %v223
  %v965 = vunpack.c.l.b16 %v224
  %v966 = vunpack.c.h.b16 %v224
  %v967 = vunpack.c.l.b16 %v225
  %v968 = vunpack.c.h.b16 %v225
  %v969 = vunpack.c.l.b16 %v226
  %v970 = vunpack.c.h.b16 %v226
  %v971 = vunpack.c.l.b16 %v227
  %v972 = vunpack.c.h.b16 %v227
  %v973 = vunpack.c.l.b16 %v228
  %v974 = vunpack.c.h.b16 %v228
  %v975 = vunpack.c.l.b16 %v229
  %v976 = vunpack.c.h.b16 %v229
  %v977 = vunpack.c.l.b16 %v230
  %v978 = vunpack.c.h.b16 %v230
  %v979 = vunpack.c.l.b16 %v231
  %v980 = vunpack.c.h.b16 %v231
  %v981 = vunpack.c.l.b16 %v232
  %v982 = vunpack.c.h.b16 %v232
  %v983 = vunpack.c.l.b16 %v233
  %v984 = vunpack.c.h.b16 %v233
  %v985 = vunpack.c.l.b16 %v234
  %v986 = vunpack.c.h.b16 %v234
  %v987 = vunpack.c.l.b16 %v235
  %v988 = vunpack.c.h.b16 %v235
  %v989 = vunpack.c.l.b16 %v236
  %v990 = vunpack.c.h.b16 %v236
  %v991 = vunpack.c.l.b16 %v237
  %v992 = vunpack.c.h.b16 %v237
  %v993 = vunpack.c.l.b16 %v238
  %v994 = vunpack.c.h.b16 %v238
  %v995 = vunpack.c.l.b16 %v239
  %v996 = vunpack.c.h.b16 %v239
  %v997 = vunpack.c.l.b16 %v240
  %v998 = vunpack.c.h.b16 %v240
  %v999 = vunpack.c.l.b16 %v241
  %v1000 = vunpack.c.h.b16 %v241
  %v1001 = vunpack.c.l.b16 %v242
  %v1002 = vunpack.c.h.b16 %v242
  %v1003 = vunpack.c.l.b16 %v243
  %v1004 = vunpack.c.h.b16 %v243
  %v1005 = vunpack.c.l.b16 %v244
  %v1006 = vunpack.c.h.b16 %v244
  %v1007 = vunpack.c.l.b16 %v245
  %v1008 = vunpack.c.h.b16 %v245
  %v1009 = vunpack.c.l.b16 %v246
  %v1010 = vunpack.c.h.b16 %v246
  %v1011 = vunpack.c.l.b16 %v247
  %v1012 = vunpack.c.h.b16 %v247
  %v1013 = vunpack.c.l.b16 %v248
  %v1014 = vunpack.c.h.b16 %v248
  %v1015 = vunpack.c.l.b16 %v249
  %v1016 = vunpack.c.h.b16 %v249
  %v1017 = vunpack.c.l.b16 %v250
  %v1018 = vunpack.c.h.b16 %v250
  %v1019 = vunpack.c.l.b16 %v251
  %v1020 = vunpack.c.h.b16 %v251
  %v1021 = vunpack.c.l.b16 %v252
  %v1022 = vunpack.c.h.b16 %v252
  %v1023 = vunpack.c.l.b16 %v253
  %v1024 = vunpack.c.h.b16 %v253
  %v1025 = vunpack.c.l.b16 %v254
  %v1026 = vunpack.c.h.b16 %v254
  %v1027 = vunpack.c.l.b16 %v255
  %v1028 = vunpack.c.h.b16 %v255
  %v1029 = vunpack.c.l.b16 %v256
  %v1030 = vunpack.c.h.b16 %v256
  %v1031 = vunpack.c.l.b16 %v257
  %v1032 = vunpack.c.h.b16 %v257
  %v1033 = vunpack.c.l.b16 %v258
  %v1034 = vunpack.c.h.b16 %v258
  %v1035 = vunpack.c.l.b16 %v259
  %v1036 = vunpack.c.h.b16 %v259
  %v1037 = vunpack.c.l.b16 %v260
  %v1038 = vunpack.c.h.b16 %v260
  %v1039 = vunpack.c.l.b16 %v261
  %v1040 = vunpack.c.h.b16 %v261
  %v1041 = vunpack.c.l.b16 %v262
  %v1042 = vunpack.c.h.b16 %v262
  %v1043 = vunpack.c.l.b16 %v263
  %v1044 = vunpack.c.h.b16 %v263
  %v1045 = vunpack.c.l.b16 %v264
  %v1046 = vunpack.c.h.b16 %v264
  %v1047 = vunpack.c.l.b16 %v265
  %v1048 = vunpack.c.h.b16 %v265
  %v1049 = vunpack.c.l.b16 %v266
  %v1050 = vunpack.c.h.b16 %v266
  %v1051 = vunpack.c.l.b16 %v267
  %v1052 = vunpack.c.h.b16 %v267
  %v1053 = vunpack.c.l.b16 %v268
  %v1054 = vunpack.c.h.b16 %v268
  %v1055 = vunpack.c.l.b16 %v269
  %v1056 = vunpack.c.h.b16 %v269
  %v1057 = vunpack.c.l.b16 %v270
  %v1058 = vunpack.c.h.b16 %v270
  %v1059 = vunpack.c.l.b16 %v271
  %v1060 = vunpack.c.h.b16 %v271
  %v1061 = vunpack.c.l.b16 %v272
  %v1062 = vunpack.c.h.b16 %v272
  %v1063 = vunpack.c.l.b16 %v273
  %v1064 = vunpack.c.h.b16 %v273
  %v1065 = vunpack.c.l.b16 %v274
  %v1066 = vunpack.c.h.b16 %v274
  %v1067 = vunpack.c.l.b16 %v275
  %v1068 = vunpack.c.h.b16 %v275
  %v1069 = vunpack.c.l.b16 %v276
  %v1070 = vunpack.c.h.b16 %v276
  %v1071 = vunpack.c.l.b16 %v277
  %v1072 = vunpack.c.h.b16 %v277
  %v1073 = vunpack.c.l.b16 %v278
  %v1074 = vunpack.c.h.b16 %v278
  %v1075 = vunpack.c.l.b16 %v279
  %v1076 = vunpack.c.h.b16 %v279
  %v1077 = vunpack.c.l.b16 %v280
  %v1078 = vunpack.c.h.b16 %v280
  %v1079 = vunpack.c.l.b16 %v281
  %v1080 = vunpack.c.h.b16 %v281
  %v1081 = vpack.c.b16 %v605, %v601
  %v1082 = vpack.c.b16 %v606, %v602
  %v1083 = vpack.c.b16 %v607, %v603
  %v1084 = vpack.c.b16 %v608, %v604
  %v1085 = vpack.c.b16 %v613, %v609
  %v1086 = vpack.c.b16 %v614, %v610
  %v1087 = vpack.c.b16 %v615, %v611
  %v1088 = vpack.c.b16 %v616, %v612
  %v1089 = vpack.c.b16 %v621, %v617
  %v1090 = vpack.c.b16 %v622, %v618
  %v1091 = vpack.c.b16 %v623, %v619
  %v1092 = vpack.c.b16 %v624, %v620
  %v1093 = vpack.c.b16 %v629, %v625
  %v1094 = vpack.c.b16 %v630, %v626
  %v1095 = vpack.c.b16 %v631, %v627
  %v1096 = vpack.c.b16 %v632, %v628
  %v1097 = vpack.c.b16 %v637, %v633
  %v1098 = vpack.c.b16 %v638, %v634
  %v1099 = vpack.c.b16 %v639, %v635
  %v1100 = vpack.c.b16 %v640, %v636
  %v1101 = vpack.c.b16 %v645, %v641
  %v1102 = vpack.c.b16 %v646, %v642
  %v1103 = vpack.c.b16 %v647, %v643
  %v1104 = vpack.c.b16 %v648, %v644
  %v1105 = vpack.c.b16 %v653, %v649
  %v1106 = vpack.c.b16 %v654, %v650
  %v1107 = vpack.c.b16 %v655, %v651
  %v1108 = vpack.c.b16 %v656, %v652
  %v1109 = vpack.c.b16 %v661, %v657
  %v1110 = vpack.c.b16 %v662, %v658
  %v1111 = vpack.c.b16 %v663, %v659
  %v1112 = vpack.c.b16 %v664, %v660
  %v1113 = vpack.c.b16 %v669, %v665
  %v1114 = vpack.c.b16 %v670, %v666
  %v1115 = vpack.c.b16 %v671, %v667
  %v1116 = vpack.c.b16 %v672, %v668
  %v1117 = vpack.c.b16 %v677, %v673
  %v1118 = vpack.c.b16 %v678, %v674
  %v1119 = vpack.c.b16 %v679, %v675
  %v1120 = vpack.c.b16 %v680, %v676
  %v1121 = vpack.c.b16 %v685, %v681
  %v1122 = vpack.c.b16 %v686, %v682
  %v1123 = vpack.c.b16 %v687, %v683
  %v1124 = vpack.c.b16 %v688, %v684
  %v1125 = vpack.c.b16 %v693, %v689
  %v1126 = vpack.c.b16 %v694, %v690
  %v1127 = vpack.c.b16 %v695, %v691
  %v1128 = vpack.c.b16 %v696, %v692
  %v1129 = vpack.c.b16 %v701, %v697
  %v1130 = vpack.c.b16 %v702, %v698
  %v1131 = vpack.c.b16 %v703, %v699
  %v1132 = vpack.c.b16 %v704, %v700
  %v1133 = vpack.c.b16 %v709, %v705
  %v1134 = vpack.c.b16 %v710, %v706
  %v1135 = vpack.c.b16 %v711, %v707
  %v1136 = vpack.c.b16 %v712, %v708
  %v1137 = vpack.c.b16 %v717, %v713
  %v1138 = vpack.c.b16 %v718, %v714
  %v1139 = vpack.c.b16 %v719, %v715
  %v1140 = vpack.c.b16 %v720, %v716
  %v1141 = vpack.c.b16 %v725, %v721
  %v1142 = vpack.c.b16 %v726, %v722
  %v1143 = vpack.c.b16 %v727, %v723
  %v1144 = vpack.c.b16 %v728, %v724
  %v1145 = vpack.c.b16 %v733, %v729
  %v1146 = vpack.c.b16 %v734, %v730
  %v1147 = vpack.c.b16 %v735, %v731
  %v1148 = vpack.c.b16 %v736, %v732
  %v1149 = vpack.c.b16 %v741, %v737
  %v1150 = vpack.c.b16 %v742, %v738
  %v1151 = vpack.c.b16 %v743, %v739
  %v1152 = vpack.c.b16 %v744, %v740
  %v1153 = vpack.c.b16 %v749, %v745
  %v1154 = vpack.c.b16 %v750, %v746
  %v1155 = vpack.c.b16 %v751, %v747
  %v1156 = vpack.c.b16 %v752, %v748
  %v1157 = vpack.c.b16 %v757, %v753
  %v1158 = vpack.c.b16 %v758, %v754
  %v1159 = vpack.c.b16 %v759, %v755
  %v1160 = vpack.c.b16 %v760, %v756
  %v1161 = vpack.c.b16 %v765, %v761
  %v1162 = vpack.c.b16 %v766, %v762
  %v1163 = vpack.c.b16 %v767, %v763
  %v1164 = vpack.c.b16 %v768, %v764
  %v1165 = vpack.c.b16 %v773, %v769
  %v1166 = vpack.c.b16 %v774, %v770
  %v1167 = vpack.c.b16 %v775, %v771
  %v1168 = vpack.c.b16 %v776, %v772
  %v1169 = vpack.c.b16 %v781, %v777
  %v1170 = vpack.c.b16 %v782, %v778
  %v1171 = vpack.c.b16 %v783, %v779
  %v1172 = vpack.c.b16 %v784, %v780
  %v1173 = vpack.c.b16 %v789, %v785
  %v1174 = vpack.c.b16 %v790, %v786
  %v1175 = vpack.c.b16 %v791, %v787
  %v1176 = vpack.c.b16 %v792, %v788
  %v1177 = vpack.c.b16 %v797, %v793
  %v1178 = vpack.c.b16 %v798, %v794
  %v1179 = vpack.c.b16 %v799, %v795
  %v1180 = vpack.c.b16 %v800, %v796
  %v1181 = vpack.c.b16 %v805, %v801
  %v1182 = vpack.c.b16 %v806, %v802
  %v1183 = vpack.c.b16 %v807, %v803
  %v1184 = vpack.c.b16 %v808, %v804
  %v1185 = vpack.c.b16 %v813, %v809
  %v1186 = vpack.c.b16 %v814, %v810
  %v1187 = vpack.c.b16 %v815, %v811
  %v1188 = vpack.c.b16 %v816, %v812
  %v1189 = vpack.c.b16 %v821, %v817
  %v1190 = vpack.c.b16 %v822, %v818
  %v1191 = vpack.c.b16 %v823, %v819
  %v1192 = vpack.c.b16 %v824, %v820
  %v1193 = vpack.c.b16 %v829, %v825
  %v1194 = vpack.c.b16 %v830, %v826
  %v1195 = vpack.c.b16 %v831, %v827
  %v1196 = vpack.c.b16 %v832, %v828
  %v1197 = vpack.c.b16 %v837, %v833
  %v1198 = vpack.c.b16 %v838, %v834
  %v1199 = vpack.c.b16 %v839, %v835
  %v1200 = vpack.c.b16 %v840, %v836
  %v1201 = vpack.c.b16 %v845, %v841
  %v1202 = vpack.c.b16 %v846, %v842
  %v1203 = vpack.c.b16 %v847, %v843
  %v1204 = vpack.c.b16 %v848, %v844
  %v1205 = vpack.c.b16 %v853, %v849
  %v1206 = vpack.c.b16 %v854, %v850
  %v1207 = vpack.c.b16 %v855, %v851
  %v1208 = vpack.c.b16 %v856, %v852
  %v1209 = vpack.c.b16 %v861, %v857
  %v1210 = vpack.c.b16 %v862, %v858
  %v1211 = vpack.c.b16 %v863, %v859
  %v1212 = vpack.c.b16 %v864, %v860
  %v1213 = vpack.c.b16 %v869, %v865
  %v1214 = vpack.c.b16 %v870, %v866
  %v1215 = vpack.c.b16 %v871, %v867
  %v1216 = vpack.c.b16 %v872, %v868
  %v1217 = vpack.c.b16 %v877, %v873
  %v1218 = vpack.c.b16 %v878, %v874
  %v1219 = vpack.c.b16 %v879, %v875
  %v1220 = vpack.c.b16 %v880, %v876
  %v1221 = vpack.c.b16 %v885, %v881
  %v1222 = vpack.c.b16 %v886, %v882
  %v1223 = vpack.c.b16 %v887, %v883
  %v1224 = vpack.c.b16 %v888, %v884
  %v1225 = vpack.c.b16 %v893, %v889
  %v1226 = vpack.c.b16 %v894, %v890
  %v1227 = vpack.c.b16 %v895, %v891
  %v1228 = vpack.c.b16 %v896, %v892
  %v1229 = vpack.c.b16 %v901, %v897
  %v1230 = vpack.c.b16 %v902, %v898
  %v1231 = vpack.c.b16 %v903, %v899
  %v1232 = vpack.c.b16 %v904, %v900
  %v1233 = vpack.c.b16 %v909, %v905
  %v1234 = vpack.c.b16 %v910, %v906
  %v1235 = vpack.c.b16 %v911, %v907
  %v1236 = vpack.c.b16 %v912, %v908
  %v1237 = vpack.c.b16 %v917, %v913
  %v1238 = vpack.c.b16 %v918, %v914
  %v1239 = vpack.c.b16 %v919, %v915
  %v1240 = vpack.c.b16 %v920, %v916
  %v1241 = vpack.c.b16 %v925, %v921
  %v1242 = vpack.c.b16 %v926, %v922
  %v1243 = vpack.c.b16 %v927, %v923
  %v1244 = vpack.c.b16 %v928, %v924
  %v1245 = vpack.c.b16 %v933, %v929
  %v1246 = vpack.c.b16 %v934, %v930
  %v1247 = vpack.c.b16 %v935, %v931
  %v1248 = vpack.c.b16 %v936, %v932
  %v1249 = vpack.c.b16 %v941, %v937
  %v1250 = vpack.c.b16 %v942, %v938
  %v1251 = vpack.c.b16 %v943, %v939
  %v1252 = vpack.c.b16 %v944, %v940
  %v1253 = vpack.c.b16 %v949, %v945
  %v1254 = vpack.c.b16 %v950, %v946
  %v1255 = vpack.c.b16 %v951, %v947
  %v1256 = vpack.c.b16 %v952, %v948
  %v1257 = vpack.c.b16 %v957, %v953
  %v1258 = vpack.c.b16 %v958, %v954
  %v1259 = vpack.c.b16 %v959, %v955
  %v1260 = vpack.c.b16 %v960, %v956
  %v1261 = vpack.c.b16 %v965, %v961
  %v1262 = vpack.c.b16 %v966, %v962
  %v1263 = vpack.c.b16 %v967, %v963
  %v1264 = vpack.c.b16 %v968, %v964
  %v1265 = vpack.c.b16 %v973, %v969
  %v1266 = vpack.c.b16 %v974, %v970
  %v1267 = vpack.c.b16 %v975, %v971
  %v1268 = vpack.c.b16 %v976, %v972
  %v1269 = vpack.c.b16 %v981, %v977
  %v1270 = vpack.c.b16 %v982, %v978
  %v1271 = vpack.c.b16 %v983, %v979
  %v1272 = vpack.c.b16 %v984, %v980
  %v1273 = vpack.c.b16 %v989, %v985
  %v1274 = vpack.c.b16 %v990, %v986
  %v1275 = vpack.c.b16 %v991, %v987
  %v1276 = vpack.c.b16 %v992, %v988
  %v1277 = vpack.c.b16 %v997, %v993
  %v1278 = vpack.c.b16 %v998, %v994
  %v1279 = vpack.c.b16 %v999, %v995
  %v1280 = vpack.c.b16 %v1000, %v996
  %v1281 = vpack.c.b16 %v1005, %v1001
  %v1282 = vpack.c.b16 %v1006, %v1002
  %v1283 = vpack.c.b16 %v1007, %v1003
  %v1284 = vpack.c.b16 %v1008, %v1004
  %v1285 = vpack.c.b16 %v1013, %v1009
  %v1286 = vpack.c.b16 %v1014, %v1010
  %v1287 = vpack.c.b16 %v1015, %v1011
  %v1288 = vpack.c.b16 %v1016, %v1012
  %v1289 = vpack.c.b16 %v1021, %v1017
  %v1290 = vpack.c.b16 %v1022, %v1018
  %v1291 = vpack.c.b16 %v1023, %v1019
  %v1292 = vpack.c.b16 %v1024, %v1020
  %v1293 = vpack.c.b16 %v1029, %v1025
  %v1294 = vpack.c.b16 %v1030, %v1026
  %v1295 = vpack.c.b16 %v1031, %v1027
  %v1296 = vpack.c.b16 %v1032, %v1028
  %v1297 = vpack.c.b16 %v1037, %v1033
  %v1298 = vpack.c.b16 %v1038, %v1034
  %v1299 = vpack.c.b16 %v1039, %v1035
  %v1300 = vpack.c.b16 %v1040, %v1036
  %v1301 = vpack.c.b16 %v1045, %v1041
  %v1302 = vpack.c.b16 %v1046, %v1042
  %v1303 = vpack.c.b16 %v1047, %v1043
  %v1304 = vpack.c.b16 %v1048, %v1044
  %v1305 = vpack.c.b16 %v1053, %v1049
  %v1306 = vpack.c.b16 %v1054, %v1050
  %v1307 = vpack.c.b16 %v1055, %v1051
  %v1308 = vpack.c.b16 %v1056, %v1052
  %v1309 = vpack.c.b16 %v1061, %v1057
  %v1310 = vpack.c.b16 %v1062, %v1058
  %v1311 = vpack.c.b16 %v1063, %v1059
  %v1312 = vpack.c.b16 %v1064, %v1060
  %v1313 = vpack.c.b16 %v1069, %v1065
  %v1314 = vpack.c.b16 %v1070, %v1066
  %v1315 = vpack.c.b16 %v1071, %v1067
  %v1316 = vpack.c.b16 %v1072, %v1068
  %v1317 = vpack.c.b16 %v1077, %v1073
  %v1318 = vpack.c.b16 %v1078, %v1074
  %v1319 = vpack.c.b16 %v1079, %v1075
  %v1320 = vpack.c.b16 %v1080, %v1076
  %vm1561 = vcmask 523264
  %v1563 = vsel %vm1561, %v353, 0
  %1565 = vmatprep.subr.bf16.mxu0 %v1082
  %1566 = vmatpush1.bf16.msra.mxu0 %v1081
  %1567 = vmatprep.subr.bf16.mxu0 %v1086
  %1568 = vmatpush1.bf16.msra.mxu0 %v1085
  %1569 = vmatprep.subr.bf16.mxu0 %v1090
  %1570 = vmatpush1.bf16.msra.mxu0 %v1089
  %1571 = vmatprep.subr.bf16.mxu0 %v1094
  %1572 = vmatpush1.bf16.msra.mxu0 %v1093
  %1573 = vmatprep.subr.bf16.mxu0 %v1098
  %1574 = vmatpush1.bf16.msra.mxu0 %v1097
  %1575 = vmatprep.subr.bf16.mxu0 %v1102
  %1576 = vmatpush1.bf16.msra.mxu0 %v1101
  %1577 = vmatprep.subr.bf16.mxu0 %v1106
  %1578 = vmatpush1.bf16.msra.mxu0 %v1105
  %1579 = vmatprep.subr.bf16.mxu0 %v1110
  %1580 = vmatpush1.bf16.msra.mxu0 %v1109
  %1581 = vmatprep.subr.bf16.mxu0 %v1114
  %1582 = vmatpush1.bf16.msra.mxu0 %v1113
  %1583 = vmatprep.subr.bf16.mxu0 %v1118
  %1584 = vmatpush1.bf16.msra.mxu0 %v1117
  %1585 = vmatprep.subr.bf16.mxu0 %v1122
  %1586 = vmatpush1.bf16.msra.mxu0 %v1121
  %1587 = vmatprep.subr.bf16.mxu0 %v1126
  %1588 = vmatpush1.bf16.msra.mxu0 %v1125
  %1589 = vmatprep.subr.bf16.mxu0 %v1130
  %1590 = vmatpush1.bf16.msra.mxu0 %v1129
  %1591 = vmatprep.subr.bf16.mxu0 %v1134
  %1592 = vmatpush1.bf16.msra.mxu0 %v1133
  %1593 = vmatprep.subr.bf16.mxu0 %v1138
  %1594 = vmatpush1.bf16.msra.mxu0 %v1137
  %1595 = vmatprep.subr.bf16.mxu0 %v1142
  %1596 = vmatpush1.bf16.msra.mxu0 %v1141
  %1597 = vmatprep.mubr.bf16.mxu0 %v342
  %1598 = vmatmul.mubr.bf16.gmra.mrb[0].mxu0 %v328
  %v1599 = vpop.f32.mrb[0].mxu0
  %v1600 = vadd.f32 %v287, %v1599
  %v1601 = vpop.f32.mrb[0].mxu0
  %v1602 = vadd.f32 %v291, %v1601
  %v1603 = vpop.f32.mrb[0].mxu0
  %v1604 = vpop.f32.mrb[0].mxu0
  %1605 = vdwg.mxu0
  %1606 = vmatprep.subr.bf16.mxu0 %v1146
  %1607 = vmatpush1.bf16.msra.mxu0 %v1145
  %1608 = vmatprep.subr.bf16.mxu0 %v1150
  %1609 = vmatpush1.bf16.msra.mxu0 %v1149
  %1610 = vmatprep.subr.bf16.mxu0 %v1154
  %1611 = vmatpush1.bf16.msra.mxu0 %v1153
  %1612 = vmatprep.subr.bf16.mxu0 %v1158
  %1613 = vmatpush1.bf16.msra.mxu0 %v1157
  %1614 = vmatprep.subr.bf16.mxu0 %v1162
  %1615 = vmatpush1.bf16.msra.mxu0 %v1161
  %1616 = vmatprep.subr.bf16.mxu0 %v1166
  %1617 = vmatpush1.bf16.msra.mxu0 %v1165
  %1618 = vmatprep.subr.bf16.mxu0 %v1170
  %1619 = vmatpush1.bf16.msra.mxu0 %v1169
  %1620 = vmatprep.subr.bf16.mxu0 %v1174
  %1621 = vmatpush1.bf16.msra.mxu0 %v1173
  %1622 = vmatprep.subr.bf16.mxu0 %v1178
  %1623 = vmatpush1.bf16.msra.mxu0 %v1177
  %1624 = vmatprep.subr.bf16.mxu0 %v1182
  %1625 = vmatpush1.bf16.msra.mxu0 %v1181
  %1626 = vmatprep.subr.bf16.mxu0 %v1186
  %1627 = vmatpush1.bf16.msra.mxu0 %v1185
  %1628 = vmatprep.subr.bf16.mxu0 %v1190
  %1629 = vmatpush1.bf16.msra.mxu0 %v1189
  %1630 = vmatprep.subr.bf16.mxu0 %v1194
  %1631 = vmatpush1.bf16.msra.mxu0 %v1193
  %1632 = vmatprep.subr.bf16.mxu0 %v1198
  %1633 = vmatpush1.bf16.msra.mxu0 %v1197
  %1634 = vmatprep.subr.bf16.mxu0 %v1202
  %1635 = vmatpush1.bf16.msra.mxu0 %v1201
  %1636 = vmatprep.subr.bf16.mxu0 %v1206
  %1637 = vmatpush1.bf16.msra.mxu0 %v1205
  %1638 = vmatprep.mubr.bf16.mxu0 %v352
  %1639 = vmatmul.mubr.bf16.gmra.mrb[0].mxu0 %v350
  %v1640 = vpop.f32.mrb[0].mxu0
  %v1641 = vadd.f32 %v1600, %v1640
  %v1642 = vpop.f32.mrb[0].mxu0
  %v1643 = vadd.f32 %v1602, %v1642
  %v1644 = vpop.f32.mrb[0].mxu0
  %v1645 = vpop.f32.mrb[0].mxu0
  %1646 = vdwg.mxu0
  %1647 = vmatprep.subr.bf16.mxu0 %v1210
  %1648 = vmatpush1.bf16.msra.mxu0 %v1209
  %1649 = vmatprep.subr.bf16.mxu0 %v1214
  %1650 = vmatpush1.bf16.msra.mxu0 %v1213
  %1651 = vmatprep.subr.bf16.mxu0 %v1218
  %1652 = vmatpush1.bf16.msra.mxu0 %v1217
  %1653 = vmatprep.subr.bf16.mxu0 %v1222
  %1654 = vmatpush1.bf16.msra.mxu0 %v1221
  %1655 = vmatprep.subr.bf16.mxu0 %v1226
  %1656 = vmatpush1.bf16.msra.mxu0 %v1225
  %1657 = vmatprep.subr.bf16.mxu0 %v1230
  %1658 = vmatpush1.bf16.msra.mxu0 %v1229
  %1659 = vmatprep.subr.bf16.mxu0 %v1234
  %1660 = vmatpush1.bf16.msra.mxu0 %v1233
  %1661 = vmatprep.subr.bf16.mxu0 %v1238
  %1662 = vmatpush1.bf16.msra.mxu0 %v1237
  %1663 = vmatprep.subr.bf16.mxu0 %v1242
  %1664 = vmatpush1.bf16.msra.mxu0 %v1241
  %1665 = vmatprep.subr.bf16.mxu0 %v1246
  %1666 = vmatpush1.bf16.msra.mxu0 %v1245
  %1667 = vmatprep.subr.bf16.mxu0 %v1250
  %1668 = vmatpush1.bf16.msra.mxu0 %v1249
  %1669 = vmatprep.subr.bf16.mxu0 %v1254
  %1670 = vmatpush1.bf16.msra.mxu0 %v1253
  %1671 = vmatprep.subr.bf16.mxu0 %v1258
  %1672 = vmatpush1.bf16.msra.mxu0 %v1257
  %1673 = vmatprep.subr.bf16.mxu0 %v1262
  %1674 = vmatpush1.bf16.msra.mxu0 %v1261
  %1675 = vmatprep.subr.bf16.mxu0 %v1266
  %1676 = vmatpush1.bf16.msra.mxu0 %v1265
  %1677 = vmatprep.subr.bf16.mxu0 %v1270
  %1678 = vmatpush1.bf16.msra.mxu0 %v1269
  %1679 = vmatprep.mubr.bf16.mxu0 %v349
  %1680 = vmatmul.mubr.bf16.gmra.mrb[0].mxu0 %v335
  %v1681 = vpop.f32.mrb[0].mxu0
  %v1682 = vadd.f32 %v1641, %v1681
  %v1683 = vpop.f32.mrb[0].mxu0
  %v1684 = vadd.f32 %v1643, %v1683
  %v1685 = vpop.f32.mrb[0].mxu0
  %v1686 = vpop.f32.mrb[0].mxu0
  %1687 = vdwg.mxu0
  %1688 = vmatprep.subr.bf16.mxu0 %v1274
  %1689 = vmatpush1.bf16.msra.mxu0 %v1273
  %1690 = vmatprep.subr.bf16.mxu0 %v1278
  %1691 = vmatpush1.bf16.msra.mxu0 %v1277
  %1692 = vmatprep.subr.bf16.mxu0 %v1282
  %1693 = vmatpush1.bf16.msra.mxu0 %v1281
  %1694 = vmatprep.subr.bf16.mxu0 %v1286
  %1695 = vmatpush1.bf16.msra.mxu0 %v1285
  %1696 = vmatprep.subr.bf16.mxu0 %v1290
  %1697 = vmatpush1.bf16.msra.mxu0 %v1289
  %1698 = vmatprep.subr.bf16.mxu0 %v1294
  %1699 = vmatpush1.bf16.msra.mxu0 %v1293
  %1700 = vmatprep.subr.bf16.mxu0 %v1298
  %1701 = vmatpush1.bf16.msra.mxu0 %v1297
  %1702 = vmatprep.subr.bf16.mxu0 %v1302
  %1703 = vmatpush1.bf16.msra.mxu0 %v1301
  %1704 = vmatprep.subr.bf16.mxu0 %v1306
  %1705 = vmatpush1.bf16.msra.mxu0 %v1305
  %1706 = vmatprep.subr.bf16.mxu0 %v1310
  %1707 = vmatpush1.bf16.msra.mxu0 %v1309
  %1708 = vmatprep.subr.bf16.mxu0 %v1314
  %1709 = vmatpush1.bf16.msra.mxu0 %v1313
  %1710 = vmatprep.subr.bf16.mxu0 %v1318
  %1711 = vmatpush1.bf16.msra.mxu0 %v1317
  %1712 = vmatprep.subr.bf16.mxu0 0
  %1713 = vmatpush1.bf16.msra.mxu0 0
  %1714 = vmatprep.subr.bf16.mxu0 0
  %1715 = vmatpush1.bf16.msra.mxu0 0
  %1716 = vmatprep.subr.bf16.mxu0 0
  %1717 = vmatpush1.bf16.msra.mxu0 0
  %1718 = vmatprep.subr.bf16.mxu0 0
  %1719 = vmatpush1.bf16.msra.mxu0 0
  %1720 = vmatprep.mubr.bf16.mxu0 %v1563
  %1721 = vmatmul.mubr.bf16.gmra.mrb[0].mxu0 %v351
  %v1722 = vpop.f32.mrb[0].mxu0
  %v1723 = vadd.f32 %v1682, %v1722
  %v1724 = vpop.f32.mrb[0].mxu0
  %v1725 = vadd.f32 %v1684, %v1724
  %v1726 = vpop.f32.mrb[0].mxu0
  %v1727 = vpop.f32.mrb[0].mxu0
  %1728 = vdwg.mxu0
  %1729 = vmatprep.subr.bf16.mxu0 %v1084
  %1730 = vmatpush1.bf16.msra.mxu0 %v1083
  %1731 = vmatprep.subr.bf16.mxu0 %v1088
  %1732 = vmatpush1.bf16.msra.mxu0 %v1087
  %1733 = vmatprep.subr.bf16.mxu0 %v1092
  %1734 = vmatpush1.bf16.msra.mxu0 %v1091
  %1735 = vmatprep.subr.bf16.mxu0 %v1096
  %1736 = vmatpush1.bf16.msra.mxu0 %v1095
  %1737 = vmatprep.subr.bf16.mxu0 %v1100
  %1738 = vmatpush1.bf16.msra.mxu0 %v1099
  %1739 = vmatprep.subr.bf16.mxu0 %v1104
  %1740 = vmatpush1.bf16.msra.mxu0 %v1103
  %1741 = vmatprep.subr.bf16.mxu0 %v1108
  %1742 = vmatpush1.bf16.msra.mxu0 %v1107
  %1743 = vmatprep.subr.bf16.mxu0 %v1112
  %1744 = vmatpush1.bf16.msra.mxu0 %v1111
  %1745 = vmatprep.subr.bf16.mxu0 %v1116
  %1746 = vmatpush1.bf16.msra.mxu0 %v1115
  %1747 = vmatprep.subr.bf16.mxu0 %v1120
  %1748 = vmatpush1.bf16.msra.mxu0 %v1119
  %1749 = vmatprep.subr.bf16.mxu0 %v1124
  %1750 = vmatpush1.bf16.msra.mxu0 %v1123
  %1751 = vmatprep.subr.bf16.mxu0 %v1128
  %1752 = vmatpush1.bf16.msra.mxu0 %v1127
  %1753 = vmatprep.subr.bf16.mxu0 %v1132
  %1754 = vmatpush1.bf16.msra.mxu0 %v1131
  %1755 = vmatprep.subr.bf16.mxu0 %v1136
  %1756 = vmatpush1.bf16.msra.mxu0 %v1135
  %1757 = vmatprep.subr.bf16.mxu0 %v1140
  %1758 = vmatpush1.bf16.msra.mxu0 %v1139
  %1759 = vmatprep.subr.bf16.mxu0 %v1144
  %1760 = vmatpush1.bf16.msra.mxu0 %v1143
  %1761 = vmatprep.mubr.bf16.mxu0 %v342
  %1762 = vmatmul.mubr.bf16.gmra.mrb[0].mxu0 %v328
  %v1763 = vpop.f32.mrb[0].mxu0
  %v1764 = vadd.f32 %v295, %v1763
  %v1765 = vpop.f32.mrb[0].mxu0
  %v1766 = vadd.f32 %v299, %v1765
  %v1767 = vpop.f32.mrb[0].mxu0
  %v1768 = vpop.f32.mrb[0].mxu0
  %1769 = vdwg.mxu0
  %1770 = vmatprep.subr.bf16.mxu0 %v1148
  %1771 = vmatpush1.bf16.msra.mxu0 %v1147
  %1772 = vmatprep.subr.bf16.mxu0 %v1152
  %1773 = vmatpush1.bf16.msra.mxu0 %v1151
  %1774 = vmatprep.subr.bf16.mxu0 %v1156
  %1775 = vmatpush1.bf16.msra.mxu0 %v1155
  %1776 = vmatprep.subr.bf16.mxu0 %v1160
  %1777 = vmatpush1.bf16.msra.mxu0 %v1159
  %1778 = vmatprep.subr.bf16.mxu0 %v1164
  %1779 = vmatpush1.bf16.msra.mxu0 %v1163
  %1780 = vmatprep.subr.bf16.mxu0 %v1168
  %1781 = vmatpush1.bf16.msra.mxu0 %v1167
  %1782 = vmatprep.subr.bf16.mxu0 %v1172
  %1783 = vmatpush1.bf16.msra.mxu0 %v1171
  %1784 = vmatprep.subr.bf16.mxu0 %v1176
  %1785 = vmatpush1.bf16.msra.mxu0 %v1175
  %1786 = vmatprep.subr.bf16.mxu0 %v1180
  %1787 = vmatpush1.bf16.msra.mxu0 %v1179
  %1788 = vmatprep.subr.bf16.mxu0 %v1184
  %1789 = vmatpush1.bf16.msra.mxu0 %v1183
  %1790 = vmatprep.subr.bf16.mxu0 %v1188
  %1791 = vmatpush1.bf16.msra.mxu0 %v1187
  %1792 = vmatprep.subr.bf16.mxu0 %v1192
  %1793 = vmatpush1.bf16.msra.mxu0 %v1191
  %1794 = vmatprep.subr.bf16.mxu0 %v1196
  %1795 = vmatpush1.bf16.msra.mxu0 %v1195
  %1796 = vmatprep.subr.bf16.mxu0 %v1200
  %1797 = vmatpush1.bf16.msra.mxu0 %v1199
  %1798 = vmatprep.subr.bf16.mxu0 %v1204
  %1799 = vmatpush1.bf16.msra.mxu0 %v1203
  %1800 = vmatprep.subr.bf16.mxu0 %v1208
  %1801 = vmatpush1.bf16.msra.mxu0 %v1207
  %1802 = vmatprep.mubr.bf16.mxu0 %v352
  %1803 = vmatmul.mubr.bf16.gmra.mrb[0].mxu0 %v350
  %v1804 = vpop.f32.mrb[0].mxu0
  %v1805 = vadd.f32 %v1764, %v1804
  %v1806 = vpop.f32.mrb[0].mxu0
  %v1807 = vadd.f32 %v1766, %v1806
  %v1808 = vpop.f32.mrb[0].mxu0
  %v1809 = vpop.f32.mrb[0].mxu0
  %1810 = vdwg.mxu0
  %1811 = vmatprep.subr.bf16.mxu0 %v1212
  %1812 = vmatpush1.bf16.msra.mxu0 %v1211
  %1813 = vmatprep.subr.bf16.mxu0 %v1216
  %1814 = vmatpush1.bf16.msra.mxu0 %v1215
  %1815 = vmatprep.subr.bf16.mxu0 %v1220
  %1816 = vmatpush1.bf16.msra.mxu0 %v1219
  %1817 = vmatprep.subr.bf16.mxu0 %v1224
  %1818 = vmatpush1.bf16.msra.mxu0 %v1223
  %1819 = vmatprep.subr.bf16.mxu0 %v1228
  %1820 = vmatpush1.bf16.msra.mxu0 %v1227
  %1821 = vmatprep.subr.bf16.mxu0 %v1232
  %1822 = vmatpush1.bf16.msra.mxu0 %v1231
  %1823 = vmatprep.subr.bf16.mxu0 %v1236
  %1824 = vmatpush1.bf16.msra.mxu0 %v1235
  %1825 = vmatprep.subr.bf16.mxu0 %v1240
  %1826 = vmatpush1.bf16.msra.mxu0 %v1239
  %1827 = vmatprep.subr.bf16.mxu0 %v1244
  %1828 = vmatpush1.bf16.msra.mxu0 %v1243
  %1829 = vmatprep.subr.bf16.mxu0 %v1248
  %1830 = vmatpush1.bf16.msra.mxu0 %v1247
  %1831 = vmatprep.subr.bf16.mxu0 %v1252
  %1832 = vmatpush1.bf16.msra.mxu0 %v1251
  %1833 = vmatprep.subr.bf16.mxu0 %v1256
  %1834 = vmatpush1.bf16.msra.mxu0 %v1255
  %1835 = vmatprep.subr.bf16.mxu0 %v1260
  %1836 = vmatpush1.bf16.msra.mxu0 %v1259
  %1837 = vmatprep.subr.bf16.mxu0 %v1264
  %1838 = vmatpush1.bf16.msra.mxu0 %v1263
  %1839 = vmatprep.subr.bf16.mxu0 %v1268
  %1840 = vmatpush1.bf16.msra.mxu0 %v1267
  %1841 = vmatprep.subr.bf16.mxu0 %v1272
  %1842 = vmatpush1.bf16.msra.mxu0 %v1271
  %1843 = vmatprep.mubr.bf16.mxu0 %v349
  %1844 = vmatmul.mubr.bf16.gmra.mrb[0].mxu0 %v335
  %v1845 = vpop.f32.mrb[0].mxu0
  %v1846 = vadd.f32 %v1805, %v1845
  %v1847 = vpop.f32.mrb[0].mxu0
  %v1848 = vadd.f32 %v1807, %v1847
  %v1849 = vpop.f32.mrb[0].mxu0
  %v1850 = vpop.f32.mrb[0].mxu0
  %1851 = vdwg.mxu0
  %1852 = vmatprep.subr.bf16.mxu0 %v1276
  %1853 = vmatpush1.bf16.msra.mxu0 %v1275
  %1854 = vmatprep.subr.bf16.mxu0 %v1280
  %1855 = vmatpush1.bf16.msra.mxu0 %v1279
  %1856 = vmatprep.subr.bf16.mxu0 %v1284
  %1857 = vmatpush1.bf16.msra.mxu0 %v1283
  %1858 = vmatprep.subr.bf16.mxu0 %v1288
  %1859 = vmatpush1.bf16.msra.mxu0 %v1287
  %1860 = vmatprep.subr.bf16.mxu0 %v1292
  %1861 = vmatpush1.bf16.msra.mxu0 %v1291
  %1862 = vmatprep.subr.bf16.mxu0 %v1296
  %1863 = vmatpush1.bf16.msra.mxu0 %v1295
  %1864 = vmatprep.subr.bf16.mxu0 %v1300
  %1865 = vmatpush1.bf16.msra.mxu0 %v1299
  %1866 = vmatprep.subr.bf16.mxu0 %v1304
  %1867 = vmatpush1.bf16.msra.mxu0 %v1303
  %1868 = vmatprep.subr.bf16.mxu0 %v1308
  %1869 = vmatpush1.bf16.msra.mxu0 %v1307
  %1870 = vmatprep.subr.bf16.mxu0 %v1312
  %1871 = vmatpush1.bf16.msra.mxu0 %v1311
  %1872 = vmatprep.subr.bf16.mxu0 %v1316
  %1873 = vmatpush1.bf16.msra.mxu0 %v1315
  %1874 = vmatprep.subr.bf16.mxu0 %v1320
  %1875 = vmatpush1.bf16.msra.mxu0 %v1319
  %1876 = vmatprep.subr.bf16.mxu0 0
  %1877 = vmatpush1.bf16.msra.mxu0 0
  %1878 = vmatprep.subr.bf16.mxu0 0
  %1879 = vmatpush1.bf16.msra.mxu0 0
  %1880 = vmatprep.subr.bf16.mxu0 0
  %1881 = vmatpush1.bf16.msra.mxu0 0
  %1882 = vmatprep.subr.bf16.mxu0 0
  %1883 = vmatpush1.bf16.msra.mxu0 0
  %1884 = vmatprep.mubr.bf16.mxu0 %v1563
  %1885 = vmatmul.mubr.bf16.gmra.mrb[0].mxu0 %v351
  %v1886 = vpop.f32.mrb[0].mxu0
  %v1887 = vadd.f32 %v1846, %v1886
  %v1888 = vpop.f32.mrb[0].mxu0
  %v1889 = vadd.f32 %v1848, %v1888
  %v1890 = vpop.f32.mrb[0].mxu0
  %v1891 = vpop.f32.mrb[0].mxu0
  %1892 = vdwg.mxu0
  %v1893 = vmax.f32 %v1723, 0.0
  %v1894 = vmax.f32 %v1725, 0.0
  %v1895 = vmax.f32 %v1887, 0.0
  %v1896 = vmax.f32 %v1889, 0.0
  %v1897 = vpack.c.bf16 %v1893, %v1893
  %v1898 = vpack.c.bf16 %v1894, %v1894
  %v1899 = vpack.c.bf16 %v1895, %v1895
  %v1900 = vpack.c.bf16 %v1896, %v1896
  %v1901 = vld [vmem:[%s4] sm:$0xff]
  %v1902 = vld [vmem:[%s4 + $0x8] sm:$0xff]
  %v1903 = vld [vmem:[%s4 + $0x10] sm:$0xff]
  %v1904 = vld [vmem:[%s4 + $0x18] sm:$0xff]
  %v1905 = vld [vmem:[%s4 + $0x20] sm:$0xff]
  %v1906 = vld [vmem:[%s4 + $0x28] sm:$0xff]
  %v1907 = vld [vmem:[%s4 + $0x30] sm:$0xff]
  %v1908 = vld [vmem:[%s4 + $0x38] sm:$0xff]
  %v1909 = vld [vmem:[%s4 + $0x40] sm:$0xff]
  %v1910 = vld [vmem:[%s4 + $0x48] sm:$0xff]
  %v1911 = vld [vmem:[%s4 + $0x50] sm:$0xff]
  %v1912 = vld [vmem:[%s4 + $0x58] sm:$0xff]
  %v1913 = vld [vmem:[%s4 + $0x60] sm:$0xff]
  %v1914 = vld [vmem:[%s4 + $0x68] sm:$0xff]
  %v1915 = vld [vmem:[%s4 + $0x70] sm:$0xff]
  %v1916 = vld [vmem:[%s4 + $0x78] sm:$0xff]
  %v1917 = vld [vmem:[%s4 + $0x80] sm:$0xff]
  %v1918 = vld [vmem:[%s4 + $0x88] sm:$0xff]
  %v1919 = vld [vmem:[%s4 + $0x90] sm:$0xff]
  %v1920 = vld [vmem:[%s4 + $0x98] sm:$0xff]
  %v1921 = vld [vmem:[%s4 + $0xa0] sm:$0xff]
  %v1922 = vld [vmem:[%s4 + $0xa8] sm:$0xff]
  %v1923 = vld [vmem:[%s4 + $0xb0] sm:$0xff]
  %v1924 = vld [vmem:[%s4 + $0xb8] sm:$0xff]
  %v1925 = vld [vmem:[%s4 + $0xc0] sm:$0xff]
  %v1926 = vld [vmem:[%s4 + $0xc8] sm:$0xff]
  %v1927 = vld [vmem:[%s4 + $0xd0] sm:$0xff]
  %v1928 = vld [vmem:[%s4 + $0xd8] sm:$0xff]
  %v1929 = vld [vmem:[%s4 + $0xe0] sm:$0xff]
  %v1930 = vld [vmem:[%s4 + $0xe8] sm:$0xff]
  %v1931 = vld [vmem:[%s4 + $0xf0] sm:$0xff]
  %v1932 = vld [vmem:[%s4 + $0xf8] sm:$0xff]
  %v1933 = vld [vmem:[%s4 + $0x100] sm:$0xff]
  %v1934 = vld [vmem:[%s4 + $0x108] sm:$0xff]
  %v1935 = vld [vmem:[%s4 + $0x110] sm:$0xff]
  %v1936 = vld [vmem:[%s4 + $0x118] sm:$0xff]
  %v1937 = vld [vmem:[%s4 + $0x120] sm:$0xff]
  %v1938 = vld [vmem:[%s4 + $0x128] sm:$0xff]
  %v1939 = vld [vmem:[%s4 + $0x130] sm:$0xff]
  %v1940 = vld [vmem:[%s4 + $0x138] sm:$0xff]
  %v1941 = vld [vmem:[%s4 + $0x140] sm:$0xff]
  %v1942 = vld [vmem:[%s4 + $0x148] sm:$0xff]
  %v1943 = vld [vmem:[%s4 + $0x150] sm:$0xff]
  %v1944 = vld [vmem:[%s4 + $0x158] sm:$0xff]
  %v1945 = vld [vmem:[%s4 + $0x160] sm:$0xff]
  %v1946 = vld [vmem:[%s4 + $0x168] sm:$0xff]
  %v1947 = vld [vmem:[%s4 + $0x170] sm:$0xff]
  %v1948 = vld [vmem:[%s4 + $0x178] sm:$0xff]
  %v1949 = vld [vmem:[%s4 + $0x180] sm:$0xff]
  %v1950 = vld [vmem:[%s4 + $0x188] sm:$0xff]
  %v1951 = vld [vmem:[%s4 + $0x190] sm:$0xff]
  %v1952 = vld [vmem:[%s4 + $0x198] sm:$0xff]
  %v1953 = vld [vmem:[%s4 + $0x1a0] sm:$0xff]
  %v1954 = vld [vmem:[%s4 + $0x1a8] sm:$0xff]
  %v1955 = vld [vmem:[%s4 + $0x1b0] sm:$0xff]
  %v1956 = vld [vmem:[%s4 + $0x1b8] sm:$0xff]
  %v1957 = vld [vmem:[%s4 + $0x1c0] sm:$0xff]
  %v1958 = vld [vmem:[%s4 + $0x1c8] sm:$0xff]
  %v1959 = vld [vmem:[%s4 + $0x1d0] sm:$0xff]
  %v1960 = vld [vmem:[%s4 + $0x1d8] sm:$0xff]
  %v1961 = vld [vmem:[%s4 + $0x1e0] sm:$0xff]
  %v1962 = vld [vmem:[%s4 + $0x1e8] sm:$0xff]
  %v1963 = vld [vmem:[%s4 + $0x1f0] sm:$0xff]
  %v1964 = vld [vmem:[%s4 + $0x1f8] sm:$0xff]
  %v1965 = vld [vmem:[%s5] sm:$0x3]
  %v1967 = vlaneseq
  %v1968 = vshrl.u32 %v1967, 7
  %v1969 = vsub.s32 0, %v1968
  %v1970 = vrot.slane %v1965, %v1969
  %v1971 = vlaneseq
  %v1972 = vshrl.u32 %v1971, 7
  %v1973 = vsub.s32 1, %v1972
  %v1974 = vrot.slane %v1965, %v1973
  %v2041 = vunpack.c.l.b16 %v1901
  %v2042 = vunpack.c.h.b16 %v1901
  %v2043 = vunpack.c.l.b16 %v1902
  %v2044 = vunpack.c.h.b16 %v1902
  %v2045 = vunpack.c.l.b16 %v1903
  %v2046 = vunpack.c.h.b16 %v1903
  %v2047 = vunpack.c.l.b16 %v1904
  %v2048 = vunpack.c.h.b16 %v1904
  %v2049 = vunpack.c.l.b16 %v1905
  %v2050 = vunpack.c.h.b16 %v1905
  %v2051 = vunpack.c.l.b16 %v1906
  %v2052 = vunpack.c.h.b16 %v1906
  %v2053 = vunpack.c.l.b16 %v1907
  %v2054 = vunpack.c.h.b16 %v1907
  %v2055 = vunpack.c.l.b16 %v1908
  %v2056 = vunpack.c.h.b16 %v1908
  %v2057 = vunpack.c.l.b16 %v1909
  %v2058 = vunpack.c.h.b16 %v1909
  %v2059 = vunpack.c.l.b16 %v1910
  %v2060 = vunpack.c.h.b16 %v1910
  %v2061 = vunpack.c.l.b16 %v1911
  %v2062 = vunpack.c.h.b16 %v1911
  %v2063 = vunpack.c.l.b16 %v1912
  %v2064 = vunpack.c.h.b16 %v1912
  %v2065 = vunpack.c.l.b16 %v1913
  %v2066 = vunpack.c.h.b16 %v1913
  %v2067 = vunpack.c.l.b16 %v1914
  %v2068 = vunpack.c.h.b16 %v1914
  %v2069 = vunpack.c.l.b16 %v1915
  %v2070 = vunpack.c.h.b16 %v1915
  %v2071 = vunpack.c.l.b16 %v1916
  %v2072 = vunpack.c.h.b16 %v1916
  %v2073 = vunpack.c.l.b16 %v1917
  %v2074 = vunpack.c.h.b16 %v1917
  %v2075 = vunpack.c.l.b16 %v1918
  %v2076 = vunpack.c.h.b16 %v1918
  %v2077 = vunpack.c.l.b16 %v1919
  %v2078 = vunpack.c.h.b16 %v1919
  %v2079 = vunpack.c.l.b16 %v1920
  %v2080 = vunpack.c.h.b16 %v1920
  %v2081 = vunpack.c.l.b16 %v1921
  %v2082 = vunpack.c.h.b16 %v1921
  %v2083 = vunpack.c.l.b16 %v1922
  %v2084 = vunpack.c.h.b16 %v1922
  %v2085 = vunpack.c.l.b16 %v1923
  %v2086 = vunpack.c.h.b16 %v1923
  %v2087 = vunpack.c.l.b16 %v1924
  %v2088 = vunpack.c.h.b16 %v1924
  %v2089 = vunpack.c.l.b16 %v1925
  %v2090 = vunpack.c.h.b16 %v1925
  %v2091 = vunpack.c.l.b16 %v1926
  %v2092 = vunpack.c.h.b16 %v1926
  %v2093 = vunpack.c.l.b16 %v1927
  %v2094 = vunpack.c.h.b16 %v1927
  %v2095 = vunpack.c.l.b16 %v1928
  %v2096 = vunpack.c.h.b16 %v1928
  %v2097 = vunpack.c.l.b16 %v1929
  %v2098 = vunpack.c.h.b16 %v1929
  %v2099 = vunpack.c.l.b16 %v1930
  %v2100 = vunpack.c.h.b16 %v1930
  %v2101 = vunpack.c.l.b16 %v1931
  %v2102 = vunpack.c.h.b16 %v1931
  %v2103 = vunpack.c.l.b16 %v1932
  %v2104 = vunpack.c.h.b16 %v1932
  %v2105 = vunpack.c.l.b16 %v1933
  %v2106 = vunpack.c.h.b16 %v1933
  %v2107 = vunpack.c.l.b16 %v1934
  %v2108 = vunpack.c.h.b16 %v1934
  %v2109 = vunpack.c.l.b16 %v1935
  %v2110 = vunpack.c.h.b16 %v1935
  %v2111 = vunpack.c.l.b16 %v1936
  %v2112 = vunpack.c.h.b16 %v1936
  %v2113 = vunpack.c.l.b16 %v1937
  %v2114 = vunpack.c.h.b16 %v1937
  %v2115 = vunpack.c.l.b16 %v1938
  %v2116 = vunpack.c.h.b16 %v1938
  %v2117 = vunpack.c.l.b16 %v1939
  %v2118 = vunpack.c.h.b16 %v1939
  %v2119 = vunpack.c.l.b16 %v1940
  %v2120 = vunpack.c.h.b16 %v1940
  %v2121 = vunpack.c.l.b16 %v1941
  %v2122 = vunpack.c.h.b16 %v1941
  %v2123 = vunpack.c.l.b16 %v1942
  %v2124 = vunpack.c.h.b16 %v1942
  %v2125 = vunpack.c.l.b16 %v1943
  %v2126 = vunpack.c.h.b16 %v1943
  %v2127 = vunpack.c.l.b16 %v1944
  %v2128 = vunpack.c.h.b16 %v1944
  %v2129 = vunpack.c.l.b16 %v1945
  %v2130 = vunpack.c.h.b16 %v1945
  %v2131 = vunpack.c.l.b16 %v1946
  %v2132 = vunpack.c.h.b16 %v1946
  %v2133 = vunpack.c.l.b16 %v1947
  %v2134 = vunpack.c.h.b16 %v1947
  %v2135 = vunpack.c.l.b16 %v1948
  %v2136 = vunpack.c.h.b16 %v1948
  %v2137 = vunpack.c.l.b16 %v1949
  %v2138 = vunpack.c.h.b16 %v1949
  %v2139 = vunpack.c.l.b16 %v1950
  %v2140 = vunpack.c.h.b16 %v1950
  %v2141 = vunpack.c.l.b16 %v1951
  %v2142 = vunpack.c.h.b16 %v1951
  %v2143 = vunpack.c.l.b16 %v1952
  %v2144 = vunpack.c.h.b16 %v1952
  %v2145 = vunpack.c.l.b16 %v1953
  %v2146 = vunpack.c.h.b16 %v1953
  %v2147 = vunpack.c.l.b16 %v1954
  %v2148 = vunpack.c.h.b16 %v1954
  %v2149 = vunpack.c.l.b16 %v1955
  %v2150 = vunpack.c.h.b16 %v1955
  %v2151 = vunpack.c.l.b16 %v1956
  %v2152 = vunpack.c.h.b16 %v1956
  %v2153 = vunpack.c.l.b16 %v1957
  %v2154 = vunpack.c.h.b16 %v1957
  %v2155 = vunpack.c.l.b16 %v1958
  %v2156 = vunpack.c.h.b16 %v1958
  %v2157 = vunpack.c.l.b16 %v1959
  %v2158 = vunpack.c.h.b16 %v1959
  %v2159 = vunpack.c.l.b16 %v1960
  %v2160 = vunpack.c.h.b16 %v1960
  %v2161 = vunpack.c.l.b16 %v1961
  %v2162 = vunpack.c.h.b16 %v1961
  %v2163 = vunpack.c.l.b16 %v1962
  %v2164 = vunpack.c.h.b16 %v1962
  %v2165 = vunpack.c.l.b16 %v1963
  %v2166 = vunpack.c.h.b16 %v1963
  %v2167 = vunpack.c.l.b16 %v1964
  %v2168 = vunpack.c.h.b16 %v1964
  %v2169 = vpack.c.b16 %v2043, %v2041
  %v2170 = vpack.c.b16 %v2044, %v2042
  %v2171 = vpack.c.b16 %v2047, %v2045
  %v2172 = vpack.c.b16 %v2048, %v2046
  %v2173 = vpack.c.b16 %v2051, %v2049
  %v2174 = vpack.c.b16 %v2052, %v2050
  %v2175 = vpack.c.b16 %v2055, %v2053
  %v2176 = vpack.c.b16 %v2056, %v2054
  %v2177 = vpack.c.b16 %v2059, %v2057
  %v2178 = vpack.c.b16 %v2060, %v2058
  %v2179 = vpack.c.b16 %v2063, %v2061
  %v2180 = vpack.c.b16 %v2064, %v2062
  %v2181 = vpack.c.b16 %v2067, %v2065
  %v2182 = vpack.c.b16 %v2068, %v2066
  %v2183 = vpack.c.b16 %v2071, %v2069
  %v2184 = vpack.c.b16 %v2072, %v2070
  %v2185 = vpack.c.b16 %v2075, %v2073
  %v2186 = vpack.c.b16 %v2076, %v2074
  %v2187 = vpack.c.b16 %v2079, %v2077
  %v2188 = vpack.c.b16 %v2080, %v2078
  %v2189 = vpack.c.b16 %v2083, %v2081
  %v2190 = vpack.c.b16 %v2084, %v2082
  %v2191 = vpack.c.b16 %v2087, %v2085
  %v2192 = vpack.c.b16 %v2088, %v2086
  %v2193 = vpack.c.b16 %v2091, %v2089
  %v2194 = vpack.c.b16 %v2092, %v2090
  %v2195 = vpack.c.b16 %v2095, %v2093
  %v2196 = vpack.c.b16 %v2096, %v2094
  %v2197 = vpack.c.b16 %v2099, %v2097
  %v2198 = vpack.c.b16 %v2100, %v2098
  %v2199 = vpack.c.b16 %v2103, %v2101
  %v2200 = vpack.c.b16 %v2104, %v2102
  %v2201 = vpack.c.b16 %v2107, %v2105
  %v2202 = vpack.c.b16 %v2108, %v2106
  %v2203 = vpack.c.b16 %v2111, %v2109
  %v2204 = vpack.c.b16 %v2112, %v2110
  %v2205 = vpack.c.b16 %v2115, %v2113
  %v2206 = vpack.c.b16 %v2116, %v2114
  %v2207 = vpack.c.b16 %v2119, %v2117
  %v2208 = vpack.c.b16 %v2120, %v2118
  %v2209 = vpack.c.b16 %v2123, %v2121
  %v2210 = vpack.c.b16 %v2124, %v2122
  %v2211 = vpack.c.b16 %v2127, %v2125
  %v2212 = vpack.c.b16 %v2128, %v2126
  %v2213 = vpack.c.b16 %v2131, %v2129
  %v2214 = vpack.c.b16 %v2132, %v2130
  %v2215 = vpack.c.b16 %v2135, %v2133
  %v2216 = vpack.c.b16 %v2136, %v2134
  %v2217 = vpack.c.b16 %v2139, %v2137
  %v2218 = vpack.c.b16 %v2140, %v2138
  %v2219 = vpack.c.b16 %v2143, %v2141
  %v2220 = vpack.c.b16 %v2144, %v2142
  %v2221 = vpack.c.b16 %v2147, %v2145
  %v2222 = vpack.c.b16 %v2148, %v2146
  %v2223 = vpack.c.b16 %v2151, %v2149
  %v2224 = vpack.c.b16 %v2152, %v2150
  %v2225 = vpack.c.b16 %v2155, %v2153
  %v2226 = vpack.c.b16 %v2156, %v2154
  %v2227 = vpack.c.b16 %v2159, %v2157
  %v2228 = vpack.c.b16 %v2160, %v2158
  %v2229 = vpack.c.b16 %v2163, %v2161
  %v2230 = vpack.c.b16 %v2164, %v2162
  %v2231 = vpack.c.b16 %v2167, %v2165
  %v2232 = vpack.c.b16 %v2168, %v2166
  %2297 = vmatprep.subr.bf16.mxu0 %v2170
  %2298 = vmatpush1.bf16.msra.mxu0 %v2169
  %2299 = vmatprep.subr.bf16.mxu0 %v2172
  %2300 = vmatpush1.bf16.msra.mxu0 %v2171
  %2301 = vmatprep.subr.bf16.mxu0 %v2174
  %2302 = vmatpush1.bf16.msra.mxu0 %v2173
  %2303 = vmatprep.subr.bf16.mxu0 %v2176
  %2304 = vmatpush1.bf16.msra.mxu0 %v2175
  %2305 = vmatprep.subr.bf16.mxu0 %v2178
  %2306 = vmatpush1.bf16.msra.mxu0 %v2177
  %2307 = vmatprep.subr.bf16.mxu0 %v2180
  %2308 = vmatpush1.bf16.msra.mxu0 %v2179
  %2309 = vmatprep.subr.bf16.mxu0 %v2182
  %2310 = vmatpush1.bf16.msra.mxu0 %v2181
  %2311 = vmatprep.subr.bf16.mxu0 %v2184
  %2312 = vmatpush1.bf16.msra.mxu0 %v2183
  %2313 = vmatprep.subr.bf16.mxu0 %v2186
  %2314 = vmatpush1.bf16.msra.mxu0 %v2185
  %2315 = vmatprep.subr.bf16.mxu0 %v2188
  %2316 = vmatpush1.bf16.msra.mxu0 %v2187
  %2317 = vmatprep.subr.bf16.mxu0 %v2190
  %2318 = vmatpush1.bf16.msra.mxu0 %v2189
  %2319 = vmatprep.subr.bf16.mxu0 %v2192
  %2320 = vmatpush1.bf16.msra.mxu0 %v2191
  %2321 = vmatprep.subr.bf16.mxu0 %v2194
  %2322 = vmatpush1.bf16.msra.mxu0 %v2193
  %2323 = vmatprep.subr.bf16.mxu0 %v2196
  %2324 = vmatpush1.bf16.msra.mxu0 %v2195
  %2325 = vmatprep.subr.bf16.mxu0 %v2198
  %2326 = vmatpush1.bf16.msra.mxu0 %v2197
  %2327 = vmatprep.subr.bf16.mxu0 %v2200
  %2328 = vmatpush1.bf16.msra.mxu0 %v2199
  %2329 = vmatprep.mubr.bf16.mxu0 %v1898
  %2330 = vmatmul.mubr.bf16.gmra.mrb[0].mxu0 %v1897
  %v2331 = vpop.f32.mrb[0].mxu0
  %v2332 = vadd.f32 %v1970, %v2331
  %v2333 = vpop.f32.mrb[0].mxu0
  %v2334 = vadd.f32 %v1974, %v2333
  %v2335 = vpop.f32.mrb[0].mxu0
  %v2336 = vpop.f32.mrb[0].mxu0
  %2337 = vdwg.mxu0
  %2338 = vmatprep.subr.bf16.mxu0 %v2202
  %2339 = vmatpush1.bf16.msra.mxu0 %v2201
  %2340 = vmatprep.subr.bf16.mxu0 %v2204
  %2341 = vmatpush1.bf16.msra.mxu0 %v2203
  %2342 = vmatprep.subr.bf16.mxu0 %v2206
  %2343 = vmatpush1.bf16.msra.mxu0 %v2205
  %2344 = vmatprep.subr.bf16.mxu0 %v2208
  %2345 = vmatpush1.bf16.msra.mxu0 %v2207
  %2346 = vmatprep.subr.bf16.mxu0 %v2210
  %2347 = vmatpush1.bf16.msra.mxu0 %v2209
  %2348 = vmatprep.subr.bf16.mxu0 %v2212
  %2349 = vmatpush1.bf16.msra.mxu0 %v2211
  %2350 = vmatprep.subr.bf16.mxu0 %v2214
  %2351 = vmatpush1.bf16.msra.mxu0 %v2213
  %2352 = vmatprep.subr.bf16.mxu0 %v2216
  %2353 = vmatpush1.bf16.msra.mxu0 %v2215
  %2354 = vmatprep.subr.bf16.mxu0 %v2218
  %2355 = vmatpush1.bf16.msra.mxu0 %v2217
  %2356 = vmatprep.subr.bf16.mxu0 %v2220
  %2357 = vmatpush1.bf16.msra.mxu0 %v2219
  %2358 = vmatprep.subr.bf16.mxu0 %v2222
  %2359 = vmatpush1.bf16.msra.mxu0 %v2221
  %2360 = vmatprep.subr.bf16.mxu0 %v2224
  %2361 = vmatpush1.bf16.msra.mxu0 %v2223
  %2362 = vmatprep.subr.bf16.mxu0 %v2226
  %2363 = vmatpush1.bf16.msra.mxu0 %v2225
  %2364 = vmatprep.subr.bf16.mxu0 %v2228
  %2365 = vmatpush1.bf16.msra.mxu0 %v2227
  %2366 = vmatprep.subr.bf16.mxu0 %v2230
  %2367 = vmatpush1.bf16.msra.mxu0 %v2229
  %2368 = vmatprep.subr.bf16.mxu0 %v2232
  %2369 = vmatpush1.bf16.msra.mxu0 %v2231
  %2370 = vmatprep.mubr.bf16.mxu0 %v1900
  %2371 = vmatmul.mubr.bf16.gmra.mrb[0].mxu0 %v1899
  %v2372 = vpop.f32.mrb[0].mxu0
  %v2373 = vadd.f32 %v2332, %v2372
  %v2374 = vpop.f32.mrb[0].mxu0
  %v2375 = vadd.f32 %v2334, %v2374
  %v2376 = vpop.f32.mrb[0].mxu0
  %v2377 = vpop.f32.mrb[0].mxu0
  %2378 = vdwg.mxu0
  %v2379 = vmax.f32 %v2373, 0.0
  %v2380 = vmax.f32 %v2375, 0.0
  %v2381 = vpack.c.bf16 %v2379, %v2379
  %v2382 = vpack.c.bf16 %v2380, %v2380
  %v2383 = vld [vmem:[%s6] sm:$0xff]
  %v2384 = vld [vmem:[%s6 + $0x8] sm:$0xf]
  %v2385 = vld [vmem:[%s6 + $0xc] sm:$0xff]
  %v2386 = vld [vmem:[%s6 + $0x14] sm:$0xf]
  %v2387 = vld [vmem:[%s6 + $0x18] sm:$0xff]
  %v2388 = vld [vmem:[%s6 + $0x20] sm:$0xf]
  %v2389 = vld [vmem:[%s6 + $0x24] sm:$0xff]
  %v2390 = vld [vmem:[%s6 + $0x2c] sm:$0xf]
  %v2391 = vld [vmem:[%s6 + $0x30] sm:$0xff]
  %v2392 = vld [vmem:[%s6 + $0x38] sm:$0xf]
  %v2393 = vld [vmem:[%s6 + $0x3c] sm:$0xff]
  %v2394 = vld [vmem:[%s6 + $0x44] sm:$0xf]
  %v2395 = vld [vmem:[%s6 + $0x48] sm:$0xff]
  %v2396 = vld [vmem:[%s6 + $0x50] sm:$0xf]
  %v2397 = vld [vmem:[%s6 + $0x54] sm:$0xff]
  %v2398 = vld [vmem:[%s6 + $0x5c] sm:$0xf]
  %v2399 = vld [vmem:[%s6 + $0x60] sm:$0xff]
  %v2400 = vld [vmem:[%s6 + $0x68] sm:$0xf]
  %v2401 = vld [vmem:[%s6 + $0x6c] sm:$0xff]
  %v2402 = vld [vmem:[%s6 + $0x74] sm:$0xf]
  %v2403 = vld [vmem:[%s6 + $0x78] sm:$0xff]
  %v2404 = vld [vmem:[%s6 + $0x80] sm:$0xf]
  %v2405 = vld [vmem:[%s6 + $0x84] sm:$0xff]
  %v2406 = vld [vmem:[%s6 + $0x8c] sm:$0xf]
  %v2407 = vld [vmem:[%s6 + $0x90] sm:$0xff]
  %v2408 = vld [vmem:[%s6 + $0x98] sm:$0xf]
  %v2409 = vld [vmem:[%s6 + $0x9c] sm:$0xff]
  %v2410 = vld [vmem:[%s6 + $0xa4] sm:$0xf]
  %v2411 = vld [vmem:[%s6 + $0xa8] sm:$0xff]
  %v2412 = vld [vmem:[%s6 + $0xb0] sm:$0xf]
  %v2413 = vld [vmem:[%s6 + $0xb4] sm:$0xff]
  %v2414 = vld [vmem:[%s6 + $0xbc] sm:$0xf]
  %v2415 = vld [vmem:[%s6 + $0xc0] sm:$0xff]
  %v2416 = vld [vmem:[%s6 + $0xc8] sm:$0xf]
  %v2417 = vld [vmem:[%s6 + $0xcc] sm:$0xff]
  %v2418 = vld [vmem:[%s6 + $0xd4] sm:$0xf]
  %v2419 = vld [vmem:[%s6 + $0xd8] sm:$0xff]
  %v2420 = vld [vmem:[%s6 + $0xe0] sm:$0xf]
  %v2421 = vld [vmem:[%s6 + $0xe4] sm:$0xff]
  %v2422 = vld [vmem:[%s6 + $0xec] sm:$0xf]
  %v2423 = vld [vmem:[%s6 + $0xf0] sm:$0xff]
  %v2424 = vld [vmem:[%s6 + $0xf8] sm:$0xf]
  %v2425 = vld [vmem:[%s6 + $0xfc] sm:$0xff]
  %v2426 = vld [vmem:[%s6 + $0x104] sm:$0xf]
  %v2427 = vld [vmem:[%s6 + $0x108] sm:$0xff]
  %v2428 = vld [vmem:[%s6 + $0x110] sm:$0xf]
  %v2429 = vld [vmem:[%s6 + $0x114] sm:$0xff]
  %v2430 = vld [vmem:[%s6 + $0x11c] sm:$0xf]
  %v2431 = vld [vmem:[%s6 + $0x120] sm:$0xff]
  %v2432 = vld [vmem:[%s6 + $0x128] sm:$0xf]
  %v2433 = vld [vmem:[%s6 + $0x12c] sm:$0xff]
  %v2434 = vld [vmem:[%s6 + $0x134] sm:$0xf]
  %v2435 = vld [vmem:[%s6 + $0x138] sm:$0xff]
  %v2436 = vld [vmem:[%s6 + $0x140] sm:$0xf]
  %v2437 = vld [vmem:[%s6 + $0x144] sm:$0xff]
  %v2438 = vld [vmem:[%s6 + $0x14c] sm:$0xf]
  %v2439 = vld [vmem:[%s6 + $0x150] sm:$0xff]
  %v2440 = vld [vmem:[%s6 + $0x158] sm:$0xf]
  %v2441 = vld [vmem:[%s6 + $0x15c] sm:$0xff]
  %v2442 = vld [vmem:[%s6 + $0x164] sm:$0xf]
  %v2443 = vld [vmem:[%s6 + $0x168] sm:$0xff]
  %v2444 = vld [vmem:[%s6 + $0x170] sm:$0xf]
  %v2445 = vld [vmem:[%s6 + $0x174] sm:$0xff]
  %v2446 = vld [vmem:[%s6 + $0x17c] sm:$0xf]
  %v2447 = vld [vmem:[%s8] sm:$0x7]
  %v2449 = vlaneseq
  %v2450 = vshrl.u32 %v2449, 7
  %v2451 = vsub.s32 0, %v2450
  %v2452 = vrot.slane %v2447, %v2451
  %v2453 = vlaneseq
  %v2454 = vshrl.u32 %v2453, 7
  %v2455 = vsub.s32 1, %v2454
  %v2456 = vrot.slane %v2447, %v2455
  %v2457 = vlaneseq
  %v2458 = vshrl.u32 %v2457, 7
  %v2459 = vsub.s32 2, %v2458
  %v2460 = vrot.slane %v2447, %v2459
  %v2528 = vunpack.c.l.b16 %v2383
  %v2529 = vunpack.c.h.b16 %v2383
  %v2530 = vunpack.c.l.b16 %v2384
  %v2531 = vunpack.c.l.b16 %v2385
  %v2532 = vunpack.c.h.b16 %v2385
  %v2533 = vunpack.c.l.b16 %v2386
  %v2534 = vunpack.c.l.b16 %v2387
  %v2535 = vunpack.c.h.b16 %v2387
  %v2536 = vunpack.c.l.b16 %v2388
  %v2537 = vunpack.c.l.b16 %v2389
  %v2538 = vunpack.c.h.b16 %v2389
  %v2539 = vunpack.c.l.b16 %v2390
  %v2540 = vunpack.c.l.b16 %v2391
  %v2541 = vunpack.c.h.b16 %v2391
  %v2542 = vunpack.c.l.b16 %v2392
  %v2543 = vunpack.c.l.b16 %v2393
  %v2544 = vunpack.c.h.b16 %v2393
  %v2545 = vunpack.c.l.b16 %v2394
  %v2546 = vunpack.c.l.b16 %v2395
  %v2547 = vunpack.c.h.b16 %v2395
  %v2548 = vunpack.c.l.b16 %v2396
  %v2549 = vunpack.c.l.b16 %v2397
  %v2550 = vunpack.c.h.b16 %v2397
  %v2551 = vunpack.c.l.b16 %v2398
  %v2552 = vunpack.c.l.b16 %v2399
  %v2553 = vunpack.c.h.b16 %v2399
  %v2554 = vunpack.c.l.b16 %v2400
  %v2555 = vunpack.c.l.b16 %v2401
  %v2556 = vunpack.c.h.b16 %v2401
  %v2557 = vunpack.c.l.b16 %v2402
  %v2558 = vunpack.c.l.b16 %v2403
  %v2559 = vunpack.c.h.b16 %v2403
  %v2560 = vunpack.c.l.b16 %v2404
  %v2561 = vunpack.c.l.b16 %v2405
  %v2562 = vunpack.c.h.b16 %v2405
  %v2563 = vunpack.c.l.b16 %v2406
  %v2564 = vunpack.c.l.b16 %v2407
  %v2565 = vunpack.c.h.b16 %v2407
  %v2566 = vunpack.c.l.b16 %v2408
  %v2567 = vunpack.c.l.b16 %v2409
  %v2568 = vunpack.c.h.b16 %v2409
  %v2569 = vunpack.c.l.b16 %v2410
  %v2570 = vunpack.c.l.b16 %v2411
  %v2571 = vunpack.c.h.b16 %v2411
  %v2572 = vunpack.c.l.b16 %v2412
  %v2573 = vunpack.c.l.b16 %v2413
  %v2574 = vunpack.c.h.b16 %v2413
  %v2575 = vunpack.c.l.b16 %v2414
  %v2576 = vunpack.c.l.b16 %v2415
  %v2577 = vunpack.c.h.b16 %v2415
  %v2578 = vunpack.c.l.b16 %v2416
  %v2579 = vunpack.c.l.b16 %v2417
  %v2580 = vunpack.c.h.b16 %v2417
  %v2581 = vunpack.c.l.b16 %v2418
  %v2582 = vunpack.c.l.b16 %v2419
  %v2583 = vunpack.c.h.b16 %v2419
  %v2584 = vunpack.c.l.b16 %v2420
  %v2585 = vunpack.c.l.b16 %v2421
  %v2586 = vunpack.c.h.b16 %v2421
  %v2587 = vunpack.c.l.b16 %v2422
  %v2588 = vunpack.c.l.b16 %v2423
  %v2589 = vunpack.c.h.b16 %v2423
  %v2590 = vunpack.c.l.b16 %v2424
  %v2591 = vunpack.c.l.b16 %v2425
  %v2592 = vunpack.c.h.b16 %v2425
  %v2593 = vunpack.c.l.b16 %v2426
  %v2594 = vunpack.c.l.b16 %v2427
  %v2595 = vunpack.c.h.b16 %v2427
  %v2596 = vunpack.c.l.b16 %v2428
  %v2597 = vunpack.c.l.b16 %v2429
  %v2598 = vunpack.c.h.b16 %v2429
  %v2599 = vunpack.c.l.b16 %v2430
  %v2600 = vunpack.c.l.b16 %v2431
  %v2601 = vunpack.c.h.b16 %v2431
  %v2602 = vunpack.c.l.b16 %v2432
  %v2603 = vunpack.c.l.b16 %v2433
  %v2604 = vunpack.c.h.b16 %v2433
  %v2605 = vunpack.c.l.b16 %v2434
  %v2606 = vunpack.c.l.b16 %v2435
  %v2607 = vunpack.c.h.b16 %v2435
  %v2608 = vunpack.c.l.b16 %v2436
  %v2609 = vunpack.c.l.b16 %v2437
  %v2610 = vunpack.c.h.b16 %v2437
  %v2611 = vunpack.c.l.b16 %v2438
  %v2612 = vunpack.c.l.b16 %v2439
  %v2613 = vunpack.c.h.b16 %v2439
  %v2614 = vunpack.c.l.b16 %v2440
  %v2615 = vunpack.c.l.b16 %v2441
  %v2616 = vunpack.c.h.b16 %v2441
  %v2617 = vunpack.c.l.b16 %v2442
  %v2618 = vunpack.c.l.b16 %v2443
  %v2619 = vunpack.c.h.b16 %v2443
  %v2620 = vunpack.c.l.b16 %v2444
  %v2621 = vunpack.c.l.b16 %v2445
  %v2622 = vunpack.c.h.b16 %v2445
  %v2623 = vunpack.c.l.b16 %v2446
  %v2624 = vpack.c.b16 %v2531, %v2528
  %v2625 = vpack.c.b16 %v2532, %v2529
  %v2626 = vpack.c.b16 %v2533, %v2530
  %v2627 = vpack.c.b16 %v2537, %v2534
  %v2628 = vpack.c.b16 %v2538, %v2535
  %v2629 = vpack.c.b16 %v2539, %v2536
  %v2630 = vpack.c.b16 %v2543, %v2540
  %v2631 = vpack.c.b16 %v2544, %v2541
  %v2632 = vpack.c.b16 %v2545, %v2542
  %v2633 = vpack.c.b16 %v2549, %v2546
  %v2634 = vpack.c.b16 %v2550, %v2547
  %v2635 = vpack.c.b16 %v2551, %v2548
  %v2636 = vpack.c.b16 %v2555, %v2552
  %v2637 = vpack.c.b16 %v2556, %v2553
  %v2638 = vpack.c.b16 %v2557, %v2554
  %v2639 = vpack.c.b16 %v2561, %v2558
  %v2640 = vpack.c.b16 %v2562, %v2559
  %v2641 = vpack.c.b16 %v2563, %v2560
  %v2642 = vpack.c.b16 %v2567, %v2564
  %v2643 = vpack.c.b16 %v2568, %v2565
  %v2644 = vpack.c.b16 %v2569, %v2566
  %v2645 = vpack.c.b16 %v2573, %v2570
  %v2646 = vpack.c.b16 %v2574, %v2571
  %v2647 = vpack.c.b16 %v2575, %v2572
  %v2648 = vpack.c.b16 %v2579, %v2576
  %v2649 = vpack.c.b16 %v2580, %v2577
  %v2650 = vpack.c.b16 %v2581, %v2578
  %v2651 = vpack.c.b16 %v2585, %v2582
  %v2652 = vpack.c.b16 %v2586, %v2583
  %v2653 = vpack.c.b16 %v2587, %v2584
  %v2654 = vpack.c.b16 %v2591, %v2588
  %v2655 = vpack.c.b16 %v2592, %v2589
  %v2656 = vpack.c.b16 %v2593, %v2590
  %v2657 = vpack.c.b16 %v2597, %v2594
  %v2658 = vpack.c.b16 %v2598, %v2595
  %v2659 = vpack.c.b16 %v2599, %v2596
  %v2660 = vpack.c.b16 %v2603, %v2600
  %v2661 = vpack.c.b16 %v2604, %v2601
  %v2662 = vpack.c.b16 %v2605, %v2602
  %v2663 = vpack.c.b16 %v2609, %v2606
  %v2664 = vpack.c.b16 %v2610, %v2607
  %v2665 = vpack.c.b16 %v2611, %v2608
  %v2666 = vpack.c.b16 %v2615, %v2612
  %v2667 = vpack.c.b16 %v2616, %v2613
  %v2668 = vpack.c.b16 %v2617, %v2614
  %v2669 = vpack.c.b16 %v2621, %v2618
  %v2670 = vpack.c.b16 %v2622, %v2619
  %v2671 = vpack.c.b16 %v2623, %v2620
  %2720 = vmatprep.subr.bf16.mxu0 %v2625
  %2721 = vmatpush1.bf16.msra.mxu0 %v2624
  %2722 = vmatprep.subr.bf16.mxu0 %v2628
  %2723 = vmatpush1.bf16.msra.mxu0 %v2627
  %2724 = vmatprep.subr.bf16.mxu0 %v2631
  %2725 = vmatpush1.bf16.msra.mxu0 %v2630
  %2726 = vmatprep.subr.bf16.mxu0 %v2634
  %2727 = vmatpush1.bf16.msra.mxu0 %v2633
  %2728 = vmatprep.subr.bf16.mxu0 %v2637
  %2729 = vmatpush1.bf16.msra.mxu0 %v2636
  %2730 = vmatprep.subr.bf16.mxu0 %v2640
  %2731 = vmatpush1.bf16.msra.mxu0 %v2639
  %2732 = vmatprep.subr.bf16.mxu0 %v2643
  %2733 = vmatpush1.bf16.msra.mxu0 %v2642
  %2734 = vmatprep.subr.bf16.mxu0 %v2646
  %2735 = vmatpush1.bf16.msra.mxu0 %v2645
  %2736 = vmatprep.subr.bf16.mxu0 %v2649
  %2737 = vmatpush1.bf16.msra.mxu0 %v2648
  %2738 = vmatprep.subr.bf16.mxu0 %v2652
  %2739 = vmatpush1.bf16.msra.mxu0 %v2651
  %2740 = vmatprep.subr.bf16.mxu0 %v2655
  %2741 = vmatpush1.bf16.msra.mxu0 %v2654
  %2742 = vmatprep.subr.bf16.mxu0 %v2658
  %2743 = vmatpush1.bf16.msra.mxu0 %v2657
  %2744 = vmatprep.subr.bf16.mxu0 %v2661
  %2745 = vmatpush1.bf16.msra.mxu0 %v2660
  %2746 = vmatprep.subr.bf16.mxu0 %v2664
  %2747 = vmatpush1.bf16.msra.mxu0 %v2663
  %2748 = vmatprep.subr.bf16.mxu0 %v2667
  %2749 = vmatpush1.bf16.msra.mxu0 %v2666
  %2750 = vmatprep.subr.bf16.mxu0 %v2670
  %2751 = vmatpush1.bf16.msra.mxu0 %v2669
  %2752 = vmatprep.mubr.bf16.mxu0 %v2382
  %2753 = vmatmul.mubr.bf16.gmra.mrb[0].mxu0 %v2381
  %v2754 = vpop.f32.mrb[0].mxu0
  %v2755 = vadd.f32 %v2452, %v2754
  %v2756 = vpop.f32.mrb[0].mxu0
  %v2757 = vadd.f32 %v2456, %v2756
  %v2758 = vpop.f32.mrb[0].mxu0
  %v2759 = vpop.f32.mrb[0].mxu0
  %2760 = vdwg.mxu0
  %2761 = vmatprep.subr.bf16.mxu0 0
  %2762 = vmatpush1.bf16.msra.mxu0 %v2626
  %2763 = vmatprep.subr.bf16.mxu0 0
  %2764 = vmatpush1.bf16.msra.mxu0 %v2629
  %2765 = vmatprep.subr.bf16.mxu0 0
  %2766 = vmatpush1.bf16.msra.mxu0 %v2632
  %2767 = vmatprep.subr.bf16.mxu0 0
  %2768 = vmatpush1.bf16.msra.mxu0 %v2635
  %2769 = vmatprep.subr.bf16.mxu0 0
  %2770 = vmatpush1.bf16.msra.mxu0 %v2638
  %2771 = vmatprep.subr.bf16.mxu0 0
  %2772 = vmatpush1.bf16.msra.mxu0 %v2641
  %2773 = vmatprep.subr.bf16.mxu0 0
  %2774 = vmatpush1.bf16.msra.mxu0 %v2644
  %2775 = vmatprep.subr.bf16.mxu0 0
  %2776 = vmatpush1.bf16.msra.mxu0 %v2647
  %2777 = vmatprep.subr.bf16.mxu0 0
  %2778 = vmatpush1.bf16.msra.mxu0 %v2650
  %2779 = vmatprep.subr.bf16.mxu0 0
  %2780 = vmatpush1.bf16.msra.mxu0 %v2653
  %2781 = vmatprep.subr.bf16.mxu0 0
  %2782 = vmatpush1.bf16.msra.mxu0 %v2656
  %2783 = vmatprep.subr.bf16.mxu0 0
  %2784 = vmatpush1.bf16.msra.mxu0 %v2659
  %2785 = vmatprep.subr.bf16.mxu0 0
  %2786 = vmatpush1.bf16.msra.mxu0 %v2662
  %2787 = vmatprep.subr.bf16.mxu0 0
  %2788 = vmatpush1.bf16.msra.mxu0 %v2665
  %2789 = vmatprep.subr.bf16.mxu0 0
  %2790 = vmatpush1.bf16.msra.mxu0 %v2668
  %2791 = vmatprep.subr.bf16.mxu0 0
  %2792 = vmatpush1.bf16.msra.mxu0 %v2671
  %2793 = vmatprep.mubr.bf16.mxu0 %v2382
  %2794 = vmatmul.mubr.bf16.gmra.mrb[0].mxu0 %v2381
  %v2795 = vpop.f32.mrb[0].mxu0
  %v2796 = vadd.f32 %v2460, %v2795
  %v2797 = vpop.f32.mrb[0].mxu0
  %v2798 = vpop.f32.mrb[0].mxu0
  %v2799 = vpop.f32.mrb[0].mxu0
  %2800 = vdwg.mxu0
  %v2801 = vld [vmem:[%s1] sm:$0x3]
  %v2802 = vld [vmem:[%s7] ss:$4 sm:$0x7]
  %2804 = vset.pattern.permute.xlu0 0
  %2805 = vperm.xlu0 %2804, %v2801
  %v2806 = vpop.permute.xlu0 %2805
  %v2809 = vlaneseq
  %v2810 = vshrl.u32 %v2809, 7
  %v2811 = vsub.s32 0, %v2810
  %v2812 = vrot.slane %v2802, %v2811
  %v2813 = vlaneseq
  %v2814 = vshrl.u32 %v2813, 7
  %v2815 = vsub.s32 1, %v2814
  %v2816 = vrot.slane %v2802, %v2815
  %v2817 = vlaneseq
  %v2818 = vshrl.u32 %v2817, 7
  %v2819 = vsub.s32 2, %v2818
  %v2820 = vrot.slane %v2802, %v2819
  %v2824 = vmul.f32 %v2806, %v2812
  %v2825 = vmul.f32 %v2806, %v2816
  %v2826 = vmul.f32 %v2806, %v2820
  %v2827 = vadd.f32 %v2755, %v2824
  %v2828 = vadd.f32 %v2757, %v2825
  %v2829 = vadd.f32 %v2796, %v2826
  %s2830 = scalar_lea.vmem %s7, 1
  %v2831 = vld [vmem:[%s2830] ss:$4 sm:$0x7]
  %2832 = vset.pattern.permute.xlu0 1
  %2833 = vperm.xlu0 %2832, %v2801
  %v2834 = vpop.permute.xlu0 %2833
  %v2837 = vlaneseq
  %v2838 = vshrl.u32 %v2837, 7
  %v2839 = vsub.s32 0, %v2838
  %v2840 = vrot.slane %v2831, %v2839
  %v2841 = vlaneseq
  %v2842 = vshrl.u32 %v2841, 7
  %v2843 = vsub.s32 1, %v2842
  %v2844 = vrot.slane %v2831, %v2843
  %v2845 = vlaneseq
  %v2846 = vshrl.u32 %v2845, 7
  %v2847 = vsub.s32 2, %v2846
  %v2848 = vrot.slane %v2831, %v2847
  %v2852 = vmul.f32 %v2834, %v2840
  %v2853 = vmul.f32 %v2834, %v2844
  %v2854 = vmul.f32 %v2834, %v2848
  %v2855 = vadd.f32 %v2827, %v2852
  %v2856 = vadd.f32 %v2828, %v2853
  %v2857 = vadd.f32 %v2829, %v2854
  %s2858 = scalar_lea.vmem %s7, 2
  %v2859 = vld [vmem:[%s2858] ss:$4 sm:$0x7]
  %2860 = vset.pattern.permute.xlu0 2
  %2861 = vperm.xlu0 %2860, %v2801
  %v2862 = vpop.permute.xlu0 %2861
  %v2865 = vlaneseq
  %v2866 = vshrl.u32 %v2865, 7
  %v2867 = vsub.s32 0, %v2866
  %v2868 = vrot.slane %v2859, %v2867
  %v2869 = vlaneseq
  %v2870 = vshrl.u32 %v2869, 7
  %v2871 = vsub.s32 1, %v2870
  %v2872 = vrot.slane %v2859, %v2871
  %v2873 = vlaneseq
  %v2874 = vshrl.u32 %v2873, 7
  %v2875 = vsub.s32 2, %v2874
  %v2876 = vrot.slane %v2859, %v2875
  %v2880 = vmul.f32 %v2862, %v2868
  %v2881 = vmul.f32 %v2862, %v2872
  %v2882 = vmul.f32 %v2862, %v2876
  %v2883 = vadd.f32 %v2855, %v2880
  %v2884 = vadd.f32 %v2856, %v2881
  %v2885 = vadd.f32 %v2857, %v2882
  %v2886 = vmax.f32 %v2883, 0.0
  %v2887 = vmax.f32 %v2884, 0.0
  %v2888 = vmax.f32 %v2885, 0.0
  %v2889 = vpack.c.bf16 %v2886, %v2886
  %v2890 = vpack.c.bf16 %v2887, %v2887
  %v2891 = vpack.c.bf16 %v2888, %v2888
  %v2892 = vld [vmem:[%s9] sm:$0xf]
  %v2893 = vld [vmem:[%s9 + $0x4] sm:$0xf]
  %v2894 = vld [vmem:[%s9 + $0x8] sm:$0xf]
  %v2895 = vld [vmem:[%s9 + $0xc] sm:$0xf]
  %v2896 = vld [vmem:[%s9 + $0x10] sm:$0xf]
  %v2897 = vld [vmem:[%s9 + $0x14] sm:$0xf]
  %v2898 = vld [vmem:[%s9 + $0x18] sm:$0xf]
  %v2899 = vld [vmem:[%s9 + $0x1c] sm:$0xf]
  %v2900 = vld [vmem:[%s9 + $0x20] sm:$0xf]
  %v2901 = vld [vmem:[%s9 + $0x24] sm:$0xf]
  %v2902 = vld [vmem:[%s9 + $0x28] sm:$0xf]
  %v2903 = vld [vmem:[%s9 + $0x2c] sm:$0xf]
  %v2904 = vld [vmem:[%s9 + $0x30] sm:$0xf]
  %v2905 = vld [vmem:[%s9 + $0x34] sm:$0xf]
  %v2906 = vld [vmem:[%s9 + $0x38] sm:$0xf]
  %v2907 = vld [vmem:[%s9 + $0x3c] sm:$0xf]
  %v2908 = vld [vmem:[%s9 + $0x40] sm:$0xf]
  %v2909 = vld [vmem:[%s9 + $0x44] sm:$0xf]
  %v2910 = vld [vmem:[%s9 + $0x48] sm:$0xf]
  %v2911 = vld [vmem:[%s9 + $0x4c] sm:$0xf]
  %v2912 = vld [vmem:[%s9 + $0x50] sm:$0xf]
  %v2913 = vld [vmem:[%s9 + $0x54] sm:$0xf]
  %v2914 = vld [vmem:[%s9 + $0x58] sm:$0xf]
  %v2915 = vld [vmem:[%s9 + $0x5c] sm:$0xf]
  %v2916 = vld [vmem:[%s9 + $0x60] sm:$0xf]
  %v2917 = vld [vmem:[%s9 + $0x64] sm:$0xf]
  %v2918 = vld [vmem:[%s9 + $0x68] sm:$0xf]
  %v2919 = vld [vmem:[%s9 + $0x6c] sm:$0xf]
  %v2920 = vld [vmem:[%s9 + $0x70] sm:$0xf]
  %v2921 = vld [vmem:[%s9 + $0x74] sm:$0xf]
  %v2922 = vld [vmem:[%s9 + $0x78] sm:$0xf]
  %v2923 = vld [vmem:[%s9 + $0x7c] sm:$0xf]
  %v2924 = vld [vmem:[%s9 + $0x80] sm:$0x3]
  %v2925 = vld [vmem:[#allocation2] sm:$0x1]
  %v2927 = vlaneseq
  %v2928 = vshrl.u32 %v2927, 7
  %v2929 = vsub.s32 0, %v2928
  %v2930 = vrot.slane %v2925, %v2929
  %v2965 = vunpack.c.l.b16 %v2892
  %v2966 = vunpack.c.l.b16 %v2893
  %v2967 = vunpack.c.l.b16 %v2894
  %v2968 = vunpack.c.l.b16 %v2895
  %v2969 = vunpack.c.l.b16 %v2896
  %v2970 = vunpack.c.l.b16 %v2897
  %v2971 = vunpack.c.l.b16 %v2898
  %v2972 = vunpack.c.l.b16 %v2899
  %v2973 = vunpack.c.l.b16 %v2900
  %v2974 = vunpack.c.l.b16 %v2901
  %v2975 = vunpack.c.l.b16 %v2902
  %v2976 = vunpack.c.l.b16 %v2903
  %v2977 = vunpack.c.l.b16 %v2904
  %v2978 = vunpack.c.l.b16 %v2905
  %v2979 = vunpack.c.l.b16 %v2906
  %v2980 = vunpack.c.l.b16 %v2907
  %v2981 = vunpack.c.l.b16 %v2908
  %v2982 = vunpack.c.l.b16 %v2909
  %v2983 = vunpack.c.l.b16 %v2910
  %v2984 = vunpack.c.l.b16 %v2911
  %v2985 = vunpack.c.l.b16 %v2912
  %v2986 = vunpack.c.l.b16 %v2913
  %v2987 = vunpack.c.l.b16 %v2914
  %v2988 = vunpack.c.l.b16 %v2915
  %v2989 = vunpack.c.l.b16 %v2916
  %v2990 = vunpack.c.l.b16 %v2917
  %v2991 = vunpack.c.l.b16 %v2918
  %v2992 = vunpack.c.l.b16 %v2919
  %v2993 = vunpack.c.l.b16 %v2920
  %v2994 = vunpack.c.l.b16 %v2921
  %v2995 = vunpack.c.l.b16 %v2922
  %v2996 = vunpack.c.l.b16 %v2923
  %v2997 = vunpack.c.l.b16 %v2924
  %v2998 = vpack.c.b16 %v2966, %v2965
  %v2999 = vpack.c.b16 %v2968, %v2967
  %v3000 = vpack.c.b16 %v2970, %v2969
  %v3001 = vpack.c.b16 %v2972, %v2971
  %v3002 = vpack.c.b16 %v2974, %v2973
  %v3003 = vpack.c.b16 %v2976, %v2975
  %v3004 = vpack.c.b16 %v2978, %v2977
  %v3005 = vpack.c.b16 %v2980, %v2979
  %v3006 = vpack.c.b16 %v2982, %v2981
  %v3007 = vpack.c.b16 %v2984, %v2983
  %v3008 = vpack.c.b16 %v2986, %v2985
  %v3009 = vpack.c.b16 %v2988, %v2987
  %v3010 = vpack.c.b16 %v2990, %v2989
  %v3011 = vpack.c.b16 %v2992, %v2991
  %v3012 = vpack.c.b16 %v2994, %v2993
  %v3013 = vpack.c.b16 %v2996, %v2995
  %v3014 = vpack.c.b16 %v2997, %v2997
  %vm3031 = vcmask 23552
  %v3033 = vsel %vm3031, %v2891, 0
  %vm3035 = vcmask 1040384
  %vm3036 = vcmask 1041408
  %v3037 = vsel %vm3035, 4294967295, 65535
  %v3038 = vsel %vm3036, %v3037, 0
  %v3040 = vand.u32 %v3014, %v3038
  %3042 = vmatprep.subr.bf16.mxu0 0
  %3043 = vmatpush1.bf16.msra.mxu0 %v2998
  %3044 = vmatprep.subr.bf16.mxu0 0
  %3045 = vmatpush1.bf16.msra.mxu0 %v2999
  %3046 = vmatprep.subr.bf16.mxu0 0
  %3047 = vmatpush1.bf16.msra.mxu0 %v3000
  %3048 = vmatprep.subr.bf16.mxu0 0
  %3049 = vmatpush1.bf16.msra.mxu0 %v3001
  %3050 = vmatprep.subr.bf16.mxu0 0
  %3051 = vmatpush1.bf16.msra.mxu0 %v3002
  %3052 = vmatprep.subr.bf16.mxu0 0
  %3053 = vmatpush1.bf16.msra.mxu0 %v3003
  %3054 = vmatprep.subr.bf16.mxu0 0
  %3055 = vmatpush1.bf16.msra.mxu0 %v3004
  %3056 = vmatprep.subr.bf16.mxu0 0
  %3057 = vmatpush1.bf16.msra.mxu0 %v3005
  %3058 = vmatprep.subr.bf16.mxu0 0
  %3059 = vmatpush1.bf16.msra.mxu0 %v3006
  %3060 = vmatprep.subr.bf16.mxu0 0
  %3061 = vmatpush1.bf16.msra.mxu0 %v3007
  %3062 = vmatprep.subr.bf16.mxu0 0
  %3063 = vmatpush1.bf16.msra.mxu0 %v3008
  %3064 = vmatprep.subr.bf16.mxu0 0
  %3065 = vmatpush1.bf16.msra.mxu0 %v3009
  %3066 = vmatprep.subr.bf16.mxu0 0
  %3067 = vmatpush1.bf16.msra.mxu0 %v3010
  %3068 = vmatprep.subr.bf16.mxu0 0
  %3069 = vmatpush1.bf16.msra.mxu0 %v3011
  %3070 = vmatprep.subr.bf16.mxu0 0
  %3071 = vmatpush1.bf16.msra.mxu0 %v3012
  %3072 = vmatprep.subr.bf16.mxu0 0
  %3073 = vmatpush1.bf16.msra.mxu0 %v3013
  %3074 = vmatprep.mubr.bf16.mxu0 %v2890
  %3075 = vmatmul.mubr.bf16.gmra.mrb[0].mxu0 %v2889
  %v3076 = vpop.f32.mrb[0].mxu0
  %v3077 = vadd.f32 %v2930, %v3076
  %v3078 = vpop.f32.mrb[0].mxu0
  %v3079 = vpop.f32.mrb[0].mxu0
  %v3080 = vpop.f32.mrb[0].mxu0
  %3081 = vdwg.mxu0
  %3082 = vmatprep.subr.bf16.mxu0 0
  %3083 = vmatpush1.bf16.msra.mxu0 %v3040
  %3084 = vmatprep.subr.bf16.mxu0 0
  %3085 = vmatpush1.bf16.msra.mxu0 0
  %3086 = vmatprep.subr.bf16.mxu0 0
  %3087 = vmatpush1.bf16.msra.mxu0 0
  %3088 = vmatprep.subr.bf16.mxu0 0
  %3089 = vmatpush1.bf16.msra.mxu0 0
  %3090 = vmatprep.subr.bf16.mxu0 0
  %3091 = vmatpush1.bf16.msra.mxu0 0
  %3092 = vmatprep.subr.bf16.mxu0 0
  %3093 = vmatpush1.bf16.msra.mxu0 0
  %3094 = vmatprep.subr.bf16.mxu0 0
  %3095 = vmatpush1.bf16.msra.mxu0 0
  %3096 = vmatprep.subr.bf16.mxu0 0
  %3097 = vmatpush1.bf16.msra.mxu0 0
  %3098 = vmatprep.subr.bf16.mxu0 0
  %3099 = vmatpush1.bf16.msra.mxu0 0
  %3100 = vmatprep.subr.bf16.mxu0 0
  %3101 = vmatpush1.bf16.msra.mxu0 0
  %3102 = vmatprep.subr.bf16.mxu0 0
  %3103 = vmatpush1.bf16.msra.mxu0 0
  %3104 = vmatprep.subr.bf16.mxu0 0
  %3105 = vmatpush1.bf16.msra.mxu0 0
  %3106 = vmatprep.subr.bf16.mxu0 0
  %3107 = vmatpush1.bf16.msra.mxu0 0
  %3108 = vmatprep.subr.bf16.mxu0 0
  %3109 = vmatpush1.bf16.msra.mxu0 0
  %3110 = vmatprep.subr.bf16.mxu0 0
  %3111 = vmatpush1.bf16.msra.mxu0 0
  %3112 = vmatprep.subr.bf16.mxu0 0
  %3113 = vmatpush1.bf16.msra.mxu0 0
  %3114 = vmatprep.mubr.bf16.mxu0 0
  %3115 = vmatmul.mubr.bf16.gmra.mrb[0].mxu0 %v3033
  %v3116 = vpop.f32.mrb[0].mxu0
  %v3117 = vadd.f32 %v3077, %v3116
  %v3118 = vpop.f32.mrb[0].mxu0
  %v3119 = vpop.f32.mrb[0].mxu0
  %v3120 = vpop.f32.mrb[0].mxu0
  %3121 = vdwg.mxu0
  %vm3122 = vcmask 1024
  %3123 = vst.msk [vmem:[%s11] sm:$0x3] %vm3122, %v3117
  // Predicated region
  $region46: #{net_forward.7} parent=0 // pred_check
    _
  $region47: #{net_forward.7} parent=0 // pred_check_branch
    %3125 = sbr.rel (0) target = $region49
  $region48: #{net_forward.7} parent=0 // pred_region
    _
  $region49: #{net_forward.7} parent=0 // pred_fallthru
    _
  // Predicated region
  $region50: #{net_forward.7} parent=0 // pred_check
    _
  $region51: #{net_forward.7} parent=0 // pred_check_branch
    %3127 = sbr.rel (0) target = $region53
  $region52: #{net_forward.7} parent=0 // pred_region
    _
  $region53: #{net_forward.7} parent=0 // pred_fallthru
    _

</llo_original>
